<compile_context>
chip_gen: v7x
topology: tpu7x:2x2x1
jax: 0.10.0
libtpu: 0.0.40
codegen_flags: <defaults>
</compile_context>

<pallas_src>
import functools
import math

import jax
import jax.numpy as jnp
from jax.experimental import pallas as pl
from jax.experimental.pallas import tpu as pltpu


# ----------------------------- 3x3x3 conv (banded, lane-dense) -----------------------------

def _conv3d_kernel(x_ref, w_ref, b_ref, *rest, D, H, W, Cin, Cout, act, has_res):
    """3x3x3 conv, stride 1, 'same' padding (input pre-padded).

    x_ref : (D+2, H+2, (W+2)*Cin)  -- W folded with Cin on the lane axis
    w_ref : (9, (W+2)*Cin, W*Cout) -- block-banded weights (kw folded into the band)
    b_ref : (1, W*Cout)
    rest  : [res_ref (D*H, W*Cout)], o_ref (D*H, W*Cout)
    """
    if has_res:
        r_ref, o_ref = rest
    else:
        (o_ref,) = rest

    K = (W + 2) * Cin
    acc = jnp.zeros((D * H, W * Cout), jnp.float32)
    for kd in range(3):
        for kh in range(3):
            patch = x_ref[kd:kd + D, kh:kh + H, :].reshape(D * H, K).astype(jnp.float32)
            acc = acc + jnp.dot(patch, w_ref[kd * 3 + kh].astype(jnp.float32),
                                preferred_element_type=jnp.float32)
    acc = acc + b_ref[...]                       # bias broadcast, hoisted out of the tap loop
    if act:
        acc = acc * jax.nn.sigmoid(acc)          # SiLU
    if has_res:
        acc = acc + r_ref[...].astype(jnp.float32)   # fused residual add
    o_ref[...] = acc.astype(o_ref.dtype)


def _band_weights(w, W):
    """(3,3,3,Cin,Cout) -> (9, (W+2)*Cin, W*Cout) block-banded weights.

    Folds the kw taps and the output W axis into a single large-K / lane-dense matmul:
      wb[kd,kh][(p,ci),(w,co)] = w[kd,kh,p-w,ci,co] if 0 <= p-w <= 2 else 0.
    """
    Cin, Cout = w.shape[3], w.shape[4]
    wi = jnp.arange(W + 2)[:, None, None]
    wo = jnp.arange(W)[None, :, None]
    kw = jnp.arange(3)[None, None, :]
    sel = (wi == wo + kw).astype(w.dtype)                 # (W+2, W, 3)
    wb = jnp.einsum('pqk,dhkio->dhpiqo', sel, w)          # (3, 3, W+2, Cin, W, Cout)
    return wb.reshape(9, (W + 2) * Cin, W * Cout)


def conv3d(x, w, b, act=True, residual=None):
    """x: (N,D,H,W,Cin); w: (3,3,3,Cin,Cout); b: (Cout,); residual: (N,D,H,W,Cout) or None."""
    N, D, H, W, Cin = x.shape
    Cout = w.shape[-1]
    xp = jnp.pad(x, ((0, 0), (1, 1), (1, 1), (1, 1), (0, 0)))
    xp = xp.reshape(N * (D + 2), H + 2, (W + 2) * Cin)    # fold W,Cin -> lanes (free reshape)
    wb = _band_weights(w, W)
    bb = jnp.tile(b, (W,)).reshape(1, W * Cout)           # bias laid out to match (w,co) lanes

    in_arrays = [xp, wb, bb]
    in_specs = [
        pl.BlockSpec((D + 2, H + 2, (W + 2) * Cin), lambda n: (n, 0, 0)),
        pl.BlockSpec((9, (W + 2) * Cin, W * Cout), lambda n: (0, 0, 0)),
        pl.BlockSpec((1, W * Cout), lambda n: (0, 0)),
    ]
    if residual is not None:
        in_arrays.append(residual.reshape(N * D * H, W * Cout))
        in_specs.append(pl.BlockSpec((D * H, W * Cout), lambda n: (n, 0)))

    kernel = functools.partial(_conv3d_kernel, D=D, H=H, W=W, Cin=Cin, Cout=Cout,
                               act=act, has_res=residual is not None)
    # TODO(synk): for production chest-CT volumes, tile D into halo'd slabs (manual DMA)
    # so a full padded volume never has to be VMEM-resident (mandatory on v7x 64 MiB).
    out = pl.pallas_call(
        kernel,
        out_shape=jax.ShapeDtypeStruct((N * D * H, W * Cout), x.dtype),
        grid=(N,),
        in_specs=in_specs,
        out_specs=pl.BlockSpec((D * H, W * Cout), lambda n: (n, 0)),
        compiler_params=pltpu.CompilerParams(dimension_semantics=("parallel",)),
    )(*in_arrays)
    return out.reshape(N, D, H, W, Cout)


def _conv3d_reference(x, w, b):
    """Plain-JAX reference for the 3x3x3 'same' conv (sanity check only)."""
    N, D, H, W, Cin = x.shape
    xp = jnp.pad(x, ((0, 0), (1, 1), (1, 1), (1, 1), (0, 0)))
    acc = jnp.zeros(x.shape[:-1] + (w.shape[-1],), jnp.float32)
    for kd in range(3):
        for kh in range(3):
            for kw in range(3):
                acc = acc + jnp.einsum('ndhwi,io->ndhwo',
                                       xp[:, kd:kd + D, kh:kh + H, kw:kw + W, :],
                                       w[kd, kh, kw],
                                       precision=jax.lax.Precision.HIGHEST)
    return acc + b


# ----------------------------- pointwise (1x1x1 conv / linear) -----------------------------

def _pointwise_kernel(x_ref, w_ref, b_ref, g_ref, be_ref, o_ref, *, ln, act):
    y = jnp.dot(x_ref[...].astype(jnp.float32), w_ref[...].astype(jnp.float32),
                preferred_element_type=jnp.float32) + b_ref[...]
    if ln:
        mu = jnp.mean(y, axis=-1, keepdims=True)
        var = jnp.mean(jnp.square(y - mu), axis=-1, keepdims=True)
        y = (y - mu) * jax.lax.rsqrt(var + 1e-5)
        y = y * g_ref[...] + be_ref[...]
    if act:
        y = y * jax.nn.sigmoid(y)                # SiLU
    o_ref[...] = y.astype(o_ref.dtype)


def _row_tile(P, max_tile=2048):
    # full array if small (block == full dims), else a big multiple-of-8 tile.
    return P if P <= max_tile else max_tile


def pointwise(x, w, b, gamma=None, beta=None, act=False):
    """x: (..., Cin) -> (..., Cout), optional fused LayerNorm + SiLU."""
    shape = x.shape
    cin, cout = w.shape
    P = math.prod(shape[:-1])
    x2 = x.reshape(P, cin)
    ln = gamma is not None
    if gamma is None:
        gamma = jnp.ones((cout,), jnp.float32)
        beta = jnp.zeros((cout,), jnp.float32)
    TP = _row_tile(P)
    kernel = functools.partial(_pointwise_kernel, ln=ln, act=act)
    out = pl.pallas_call(
        kernel,
        out_shape=jax.ShapeDtypeStruct((P, cout), x.dtype),
        grid=(pl.cdiv(P, TP),),
        in_specs=[
            pl.BlockSpec((TP, cin), lambda i: (i, 0)),
            pl.BlockSpec((cin, cout), lambda i: (0, 0)),
            pl.BlockSpec((1, cout), lambda i: (0, 0)),
            pl.BlockSpec((1, cout), lambda i: (0, 0)),
            pl.BlockSpec((1, cout), lambda i: (0, 0)),
        ],
        out_specs=pl.BlockSpec((TP, cout), lambda i: (i, 0)),
        compiler_params=pltpu.CompilerParams(dimension_semantics=("parallel",)),
    )(x2, w, b.reshape(1, cout), gamma.reshape(1, cout), beta.reshape(1, cout))
    return out.reshape(shape[:-1] + (cout,))


# ------------------- fused latent encoder + Gaussian latent space -------------------

def _latent_kernel(x_ref, w_ref, b_ref, eps_ref, z_ref, mu_ref, sig_ref, kl_ref,
                   *, cl, tp, total_rows):
    i = pl.program_id(0)

    @pl.when(i == 0)
    def _():
        kl_ref[0, 0] = 0.0

    stats = jnp.dot(x_ref[...].astype(jnp.float32), w_ref[...].astype(jnp.float32),
                    preferred_element_type=jnp.float32) + b_ref[...]
    mu = stats[:, :cl]
    logvar = jnp.clip(stats[:, cl:], -30.0, 20.0)
    sigma = jnp.exp(0.5 * logvar)
    z = mu + sigma * eps_ref[...].astype(jnp.float32)

    mu_ref[...] = mu.astype(mu_ref.dtype)
    sig_ref[...] = sigma.astype(sig_ref.dtype)
    z_ref[...] = z.astype(z_ref.dtype)

    # Mask out-of-range rows of the last (possibly partial) tile before the KL reduction.
    rows = jax.lax.broadcasted_iota(jnp.int32, (tp, cl), 0) + i * tp
    kl_el = jnp.where(rows < total_rows, mu * mu + sigma * sigma - logvar - 1.0, 0.0)
    kl_ref[0, 0] += 0.5 * jnp.sum(kl_el)


def latent_encode_sample(x, w, b, eps, cl):
    """Fused LatentEncoder (1x1x1 conv -> stats), (mu, sigma) split, reparameterization, KL."""
    shape = x.shape
    c1 = shape[-1]
    P = math.prod(shape[:-1])
    TP = _row_tile(P)
    kernel = functools.partial(_latent_kernel, cl=cl, tp=TP, total_rows=P)
    z, mu, sig, kl = pl.pallas_call(
        kernel,
        out_shape=(jax.ShapeDtypeStruct((P, cl), x.dtype),
                   jax.ShapeDtypeStruct((P, cl), x.dtype),
                   jax.ShapeDtypeStruct((P, cl), x.dtype),
                   jax.ShapeDtypeStruct((1, 1), jnp.float32)),
        grid=(pl.cdiv(P, TP),),
        in_specs=[
            pl.BlockSpec((TP, c1), lambda i: (i, 0)),
            pl.BlockSpec((c1, 2 * cl), lambda i: (0, 0)),
            pl.BlockSpec((1, 2 * cl), lambda i: (0, 0)),
            pl.BlockSpec((TP, cl), lambda i: (i, 0)),
        ],
        out_specs=(pl.BlockSpec((TP, cl), lambda i: (i, 0)),
                   pl.BlockSpec((TP, cl), lambda i: (i, 0)),
                   pl.BlockSpec((TP, cl), lambda i: (i, 0)),
                   pl.BlockSpec((1, 1), lambda i: (0, 0),
                                memory_space=pltpu.MemorySpace.SMEM)),
        compiler_params=pltpu.CompilerParams(dimension_semantics=("arbitrary",)),
    )(x.reshape(P, c1), w, b.reshape(1, 2 * cl), eps.reshape(P, cl))
    out_shape = shape[:-1] + (cl,)
    return z.reshape(out_shape), mu.reshape(out_shape), sig.reshape(out_shape), kl[0, 0]


# --------------------------- model building blocks ---------------------------

def multires_block(x, block_params):
    # TODO(synk): MultiResCNNBlock3D source (filter_ratios [3,2,1]) unavailable; approximated
    # as a residual double 3x3x3 conv (SiLU on the first), residual add fused into conv #2.
    (w1, b1), (w2, b2) = block_params
    h = conv3d(x, w1, b1, act=True)
    return conv3d(h, w2, b2, act=False, residual=x)


def stage_block(x, blocks):
    for blk in blocks:
        x = multires_block(x, blk)
    return x


def patch_merge(x, p):
    # TODO(synk): SwinV23DPatchMerging internals unavailable; space-to-depth (2,2,2) stays as
    # an XLA rearrange, the reduction + LayerNorm runs as one fused Pallas pointwise kernel.
    w, b, g, be = p
    N, D, H, W, C = x.shape
    x = x.reshape(N, D // 2, 2, H // 2, 2, W // 2, 2, C)
    x = jnp.transpose(x, (0, 1, 3, 5, 2, 4, 6, 7))
    x = x.reshape(N, D // 2, H // 2, W // 2, 8 * C)
    return pointwise(x, w, b, gamma=g, beta=be, act=False)


def patch_split(x, p):
    # TODO(synk): SwinV23DPatchSplitting internals unavailable; fused linear + LayerNorm
    # Pallas kernel followed by an XLA depth-to-space (2,2,2) rearrange.
    w, b, g, be = p
    N, D, H, W, C = x.shape
    cout = w.shape[-1] // 8
    y = pointwise(x, w, b, gamma=g, beta=be, act=False)
    y = y.reshape(N, D, H, W, 2, 2, 2, cout)
    y = jnp.transpose(y, (0, 1, 4, 2, 5, 3, 6, 7))
    return y.reshape(N, 2 * D, 2 * H, 2 * W, cout)


# ------------------------------ parameter init ------------------------------

def _conv_init(key, cin, cout):
    w = jax.random.normal(key, (3, 3, 3, cin, cout), jnp.float32) / math.sqrt(27 * cin)
    return w, jnp.zeros((cout,), jnp.float32)


def _lin_init(key, cin, cout):
    w = jax.random.normal(key, (cin, cout), jnp.float32) / math.sqrt(cin)
    return w, jnp.zeros((cout,), jnp.float32)


def init_vae_params(key, cfg):
    c0, c1 = cfg['num_channels']
    cl = cfg['latent_channels']
    ks = jax.random.split(key, 14)
    p = {}
    # TODO(synk): CNNBlock3D normalization layer not reproduced (source unavailable); conv + SiLU only.
    p['enc_map'] = _conv_init(ks[0], cfg['in_channels'], c0)
    p['enc_s0'] = [(_conv_init(ks[1], c0, c0), _conv_init(ks[2], c0, c0))]
    p['enc_merge'] = _lin_init(ks[3], 8 * c0, c1) + (jnp.ones((c1,), jnp.float32),
                                                     jnp.zeros((c1,), jnp.float32))
    p['enc_s1'] = [(_conv_init(ks[4], c1, c1), _conv_init(ks[5], c1, c1))]
    p['lat_enc'] = _lin_init(ks[6], c1, 2 * cl)      # -> (mu, logvar)
    p['lat_dec'] = _lin_init(ks[7], cl, c1)
    p['dec_s0'] = [(_conv_init(ks[8], c1, c1), _conv_init(ks[9], c1, c1))]
    p['dec_split'] = _lin_init(ks[10], c1, 8 * c0) + (jnp.ones((8 * c0,), jnp.float32),
                                                      jnp.zeros((8 * c0,), jnp.float32))
    p['dec_s1'] = [(_conv_init(ks[11], c0, c0), _conv_init(ks[12], c0, c0))]
    p['dec_map'] = _conv_init(ks[13], c0, cfg['in_channels'])
    return p


# -------------------------------- VAE forward --------------------------------

def vae_forward(params, cfg, x_ncdhw, eps):
    cl = cfg['latent_channels']
    N = x_ncdhw.shape[0]
    x = jnp.transpose(x_ncdhw, (0, 2, 3, 4, 1))               # NCDHW -> NDHWC

    # encoder_mapping (CNNBlock3D): conv + SiLU
    x = conv3d(x, *params['enc_map'], act=True)
    # Encoder
    x = stage_block(x, params['enc_s0'])                      # stage 0
    x = patch_merge(x, params['enc_merge'])                   # stage 1 downsample
    x = stage_block(x, params['enc_s1'])
    # LatentEncoder + GaussianLatentSpace fused: stats matmul, clip/exp, reparam, KL sum.
    w_le, b_le = params['lat_enc']
    z, z_mu, z_sigma, kl_sum = latent_encode_sample(x, w_le, b_le, eps, cl)
    # TODO(synk): exact KL normalization of GaussianLatentSpace unknown; using sum over
    # latent dims, mean over batch (KL computed exactly from logvar, no epsilon bias).
    kl_loss = kl_sum / N
    # Decoder
    y = pointwise(z, *params['lat_dec'], act=True)            # LatentDecoder
    y = stage_block(y, params['dec_s0'])                      # deepest stage
    y = patch_split(y, params['dec_split'])                   # upsample
    y = stage_block(y, params['dec_s1'])
    # decoder_mapping
    y = conv3d(y, *params['dec_map'], act=False)

    # TODO(synk): stochastic-depth dropout only active when survival_prob > 0 (inference no-op).
    return {
        'reconstructed': jnp.transpose(y, (0, 4, 1, 2, 3)),
        'z_mu': jnp.transpose(z_mu, (0, 4, 1, 2, 3)),
        'z_sigma': jnp.transpose(z_sigma, (0, 4, 1, 2, 3)),
        'kl_loss': kl_loss,
    }


# ------------------------------------ main ------------------------------------

if __name__ == "__main__":
    cfg = dict(in_channels=1, num_channels=(8, 16), depths=(1, 1),
               latent_channels=4, survival_prob=0.0)

    key = jax.random.PRNGKey(0)
    kp, kx, ke = jax.random.split(key, 3)
    params = init_vae_params(kp, cfg)

    N, D, H, W = 2, 16, 16, 16
    x = jax.random.normal(kx, (N, cfg['in_channels'], D, H, W), jnp.float32)
    eps = jax.random.normal(ke, (N, D // 2, H // 2, W // 2, cfg['latent_channels']),
                            jnp.float32)

    # sanity check: banded lane-dense Pallas conv matches the plain-JAX reference.
    xc = jnp.transpose(x, (0, 2, 3, 4, 1))
    w0, b0 = params['enc_map']
    assert jnp.allclose(conv3d(xc, w0, b0, act=False), _conv3d_reference(xc, w0, b0),
                        atol=1e-3, rtol=1e-3)
    x8 = jax.random.normal(kx, (N, D, H, W, cfg['num_channels'][0]), jnp.float32)
    w1, b1 = params['enc_s0'][0][0]
    assert jnp.allclose(conv3d(x8, w1, b1, act=False), _conv3d_reference(x8, w1, b1),
                        atol=1e-3, rtol=1e-3)

    fwd = jax.jit(lambda x_, e_: vae_forward(params, cfg, x_, e_))
    out = fwd(x, eps)
    jax.block_until_ready(out)

    assert out['reconstructed'].shape == (N, cfg['in_channels'], D, H, W)
    assert out['z_mu'].shape == (N, cfg['latent_channels'], D // 2, H // 2, W // 2)
    assert out['z_sigma'].shape == (N, cfg['latent_channels'], D // 2, H // 2, W // 2)
    assert out['kl_loss'].shape == ()

    print("KERNEL_OK")
</pallas_src>

<mosaic_0001>
module attributes {stable_mosaic.version = 11 : i64} {
  func.func @_conv3d_kernel(%arg0: i32, %arg1: memref<18x18x18xf32, #tpu.memory_space<vmem>>, %arg2: memref<9x18x128xf32, #tpu.memory_space<vmem>>, %arg3: memref<1x128xf32, #tpu.memory_space<vmem>>, %arg4: memref<256x128xf32, #tpu.memory_space<vmem>>) attributes {dimension_semantics = [#tpu.dimension_semantics<parallel>], iteration_bounds = array<i64: 2>, scalar_prefetch = 0 : i64, scratch_operands = 0 : i64, tpu.core_type = #tpu.core_type<tc>, window_params = [{transform_indices = @transform_0, window_bounds = array<i64: 18, 18, 18>}, {pipeline_mode = #tpu.pipeline_mode<synchronous>, transform_indices = @transform_1, window_bounds = array<i64: 9, 18, 128>}, {pipeline_mode = #tpu.pipeline_mode<synchronous>, transform_indices = @transform_2, window_bounds = array<i64: 1, 128>}, {transform_indices = @transform_3, window_bounds = array<i64: 256, 128>}]} {
    %cst = arith.constant 0.000000e+00 : f32
    %0 = vector.broadcast %cst : f32 to vector<256x128xf32>
    %c0 = arith.constant 0 : index
    %c0_0 = arith.constant 0 : index
    %c0_1 = arith.constant 0 : index
    %1 = vector.load %arg1[%c0, %c0_0, %c0_1] : memref<18x18x18xf32, #tpu.memory_space<vmem>>, vector<16x16x18xf32>
    %2 = vector.shape_cast %1 : vector<16x16x18xf32> to vector<256x18xf32>
    %c0_2 = arith.constant 0 : index
    %c0_3 = arith.constant 0 : index
    %c0_4 = arith.constant 0 : index
    %3 = vector.load %arg2[%c0_2, %c0_3, %c0_4] : memref<9x18x128xf32, #tpu.memory_space<vmem>>, vector<1x18x128xf32>
    %4 = vector.shape_cast %3 : vector<1x18x128xf32> to vector<18x128xf32>
    %cst_5 = arith.constant dense<0.000000e+00> : vector<256x128xf32>
    %5 = tpu.matmul %2, %4, %cst_5 {dimension_numbers = #tpu.dot_dimension_numbers<[1], [0], [0], [1], [0, 0, 1, 1], [], []>} : vector<256x18xf32>, vector<18x128xf32>, vector<256x128xf32> -> vector<256x128xf32>
    %6 = arith.addf %0, %5 : vector<256x128xf32>
    %c0_6 = arith.constant 0 : index
    %c1 = arith.constant 1 : index
    %c0_7 = arith.constant 0 : index
    %7 = vector.load %arg1[%c0_6, %c1, %c0_7] : memref<18x18x18xf32, #tpu.memory_space<vmem>>, vector<16x16x18xf32>
    %8 = vector.shape_cast %7 : vector<16x16x18xf32> to vector<256x18xf32>
    %c1_8 = arith.constant 1 : index
    %c0_9 = arith.constant 0 : index
    %c0_10 = arith.constant 0 : index
    %9 = vector.load %arg2[%c1_8, %c0_9, %c0_10] : memref<9x18x128xf32, #tpu.memory_space<vmem>>, vector<1x18x128xf32>
    %10 = vector.shape_cast %9 : vector<1x18x128xf32> to vector<18x128xf32>
    %cst_11 = arith.constant dense<0.000000e+00> : vector<256x128xf32>
    %11 = tpu.matmul %8, %10, %cst_11 {dimension_numbers = #tpu.dot_dimension_numbers<[1], [0], [0], [1], [0, 0, 1, 1], [], []>} : vector<256x18xf32>, vector<18x128xf32>, vector<256x128xf32> -> vector<256x128xf32>
    %12 = arith.addf %6, %11 : vector<256x128xf32>
    %c0_12 = arith.constant 0 : index
    %c2 = arith.constant 2 : index
    %c0_13 = arith.constant 0 : index
    %13 = vector.load %arg1[%c0_12, %c2, %c0_13] : memref<18x18x18xf32, #tpu.memory_space<vmem>>, vector<16x16x18xf32>
    %14 = vector.shape_cast %13 : vector<16x16x18xf32> to vector<256x18xf32>
    %c2_14 = arith.constant 2 : index
    %c0_15 = arith.constant 0 : index
    %c0_16 = arith.constant 0 : index
    %15 = vector.load %arg2[%c2_14, %c0_15, %c0_16] : memref<9x18x128xf32, #tpu.memory_space<vmem>>, vector<1x18x128xf32>
    %16 = vector.shape_cast %15 : vector<1x18x128xf32> to vector<18x128xf32>
    %cst_17 = arith.constant dense<0.000000e+00> : vector<256x128xf32>
    %17 = tpu.matmul %14, %16, %cst_17 {dimension_numbers = #tpu.dot_dimension_numbers<[1], [0], [0], [1], [0, 0, 1, 1], [], []>} : vector<256x18xf32>, vector<18x128xf32>, vector<256x128xf32> -> vector<256x128xf32>
    %18 = arith.addf %12, %17 : vector<256x128xf32>
    %c1_18 = arith.constant 1 : index
    %c0_19 = arith.constant 0 : index
    %c0_20 = arith.constant 0 : index
    %19 = vector.load %arg1[%c1_18, %c0_19, %c0_20] : memref<18x18x18xf32, #tpu.memory_space<vmem>>, vector<16x16x18xf32>
    %20 = vector.shape_cast %19 : vector<16x16x18xf32> to vector<256x18xf32>
    %c3 = arith.constant 3 : index
    %c0_21 = arith.constant 0 : index
    %c0_22 = arith.constant 0 : index
    %21 = vector.load %arg2[%c3, %c0_21, %c0_22] : memref<9x18x128xf32, #tpu.memory_space<vmem>>, vector<1x18x128xf32>
    %22 = vector.shape_cast %21 : vector<1x18x128xf32> to vector<18x128xf32>
    %cst_23 = arith.constant dense<0.000000e+00> : vector<256x128xf32>
    %23 = tpu.matmul %20, %22, %cst_23 {dimension_numbers = #tpu.dot_dimension_numbers<[1], [0], [0], [1], [0, 0, 1, 1], [], []>} : vector<256x18xf32>, vector<18x128xf32>, vector<256x128xf32> -> vector<256x128xf32>
    %24 = arith.addf %18, %23 : vector<256x128xf32>
    %c1_24 = arith.constant 1 : index
    %c1_25 = arith.constant 1 : index
    %c0_26 = arith.constant 0 : index
    %25 = vector.load %arg1[%c1_24, %c1_25, %c0_26] : memref<18x18x18xf32, #tpu.memory_space<vmem>>, vector<16x16x18xf32>
    %26 = vector.shape_cast %25 : vector<16x16x18xf32> to vector<256x18xf32>
    %c4 = arith.constant 4 : index
    %c0_27 = arith.constant 0 : index
    %c0_28 = arith.constant 0 : index
    %27 = vector.load %arg2[%c4, %c0_27, %c0_28] : memref<9x18x128xf32, #tpu.memory_space<vmem>>, vector<1x18x128xf32>
    %28 = vector.shape_cast %27 : vector<1x18x128xf32> to vector<18x128xf32>
    %cst_29 = arith.constant dense<0.000000e+00> : vector<256x128xf32>
    %29 = tpu.matmul %26, %28, %cst_29 {dimension_numbers = #tpu.dot_dimension_numbers<[1], [0], [0], [1], [0, 0, 1, 1], [], []>} : vector<256x18xf32>, vector<18x128xf32>, vector<256x128xf32> -> vector<256x128xf32>
    %30 = arith.addf %24, %29 : vector<256x128xf32>
    %c1_30 = arith.constant 1 : index
    %c2_31 = arith.constant 2 : index
    %c0_32 = arith.constant 0 : index
    %31 = vector.load %arg1[%c1_30, %c2_31, %c0_32] : memref<18x18x18xf32, #tpu.memory_space<vmem>>, vector<16x16x18xf32>
    %32 = vector.shape_cast %31 : vector<16x16x18xf32> to vector<256x18xf32>
    %c5 = arith.constant 5 : index
    %c0_33 = arith.constant 0 : index
    %c0_34 = arith.constant 0 : index
    %33 = vector.load %arg2[%c5, %c0_33, %c0_34] : memref<9x18x128xf32, #tpu.memory_space<vmem>>, vector<1x18x128xf32>
    %34 = vector.shape_cast %33 : vector<1x18x128xf32> to vector<18x128xf32>
    %cst_35 = arith.constant dense<0.000000e+00> : vector<256x128xf32>
    %35 = tpu.matmul %32, %34, %cst_35 {dimension_numbers = #tpu.dot_dimension_numbers<[1], [0], [0], [1], [0, 0, 1, 1], [], []>} : vector<256x18xf32>, vector<18x128xf32>, vector<256x128xf32> -> vector<256x128xf32>
    %36 = arith.addf %30, %35 : vector<256x128xf32>
    %c2_36 = arith.constant 2 : index
    %c0_37 = arith.constant 0 : index
    %c0_38 = arith.constant 0 : index
    %37 = vector.load %arg1[%c2_36, %c0_37, %c0_38] : memref<18x18x18xf32, #tpu.memory_space<vmem>>, vector<16x16x18xf32>
    %38 = vector.shape_cast %37 : vector<16x16x18xf32> to vector<256x18xf32>
    %c6 = arith.constant 6 : index
    %c0_39 = arith.constant 0 : index
    %c0_40 = arith.constant 0 : index
    %39 = vector.load %arg2[%c6, %c0_39, %c0_40] : memref<9x18x128xf32, #tpu.memory_space<vmem>>, vector<1x18x128xf32>
    %40 = vector.shape_cast %39 : vector<1x18x128xf32> to vector<18x128xf32>
    %cst_41 = arith.constant dense<0.000000e+00> : vector<256x128xf32>
    %41 = tpu.matmul %38, %40, %cst_41 {dimension_numbers = #tpu.dot_dimension_numbers<[1], [0], [0], [1], [0, 0, 1, 1], [], []>} : vector<256x18xf32>, vector<18x128xf32>, vector<256x128xf32> -> vector<256x128xf32>
    %42 = arith.addf %36, %41 : vector<256x128xf32>
    %c2_42 = arith.constant 2 : index
    %c1_43 = arith.constant 1 : index
    %c0_44 = arith.constant 0 : index
    %43 = vector.load %arg1[%c2_42, %c1_43, %c0_44] : memref<18x18x18xf32, #tpu.memory_space<vmem>>, vector<16x16x18xf32>
    %44 = vector.shape_cast %43 : vector<16x16x18xf32> to vector<256x18xf32>
    %c7 = arith.constant 7 : index
    %c0_45 = arith.constant 0 : index
    %c0_46 = arith.constant 0 : index
    %45 = vector.load %arg2[%c7, %c0_45, %c0_46] : memref<9x18x128xf32, #tpu.memory_space<vmem>>, vector<1x18x128xf32>
    %46 = vector.shape_cast %45 : vector<1x18x128xf32> to vector<18x128xf32>
    %cst_47 = arith.constant dense<0.000000e+00> : vector<256x128xf32>
    %47 = tpu.matmul %44, %46, %cst_47 {dimension_numbers = #tpu.dot_dimension_numbers<[1], [0], [0], [1], [0, 0, 1, 1], [], []>} : vector<256x18xf32>, vector<18x128xf32>, vector<256x128xf32> -> vector<256x128xf32>
    %48 = arith.addf %42, %47 : vector<256x128xf32>
    %c2_48 = arith.constant 2 : index
    %c2_49 = arith.constant 2 : index
    %c0_50 = arith.constant 0 : index
    %49 = vector.load %arg1[%c2_48, %c2_49, %c0_50] : memref<18x18x18xf32, #tpu.memory_space<vmem>>, vector<16x16x18xf32>
    %50 = vector.shape_cast %49 : vector<16x16x18xf32> to vector<256x18xf32>
    %c8 = arith.constant 8 : index
    %c0_51 = arith.constant 0 : index
    %c0_52 = arith.constant 0 : index
    %51 = vector.load %arg2[%c8, %c0_51, %c0_52] : memref<9x18x128xf32, #tpu.memory_space<vmem>>, vector<1x18x128xf32>
    %52 = vector.shape_cast %51 : vector<1x18x128xf32> to vector<18x128xf32>
    %cst_53 = arith.constant dense<0.000000e+00> : vector<256x128xf32>
    %53 = tpu.matmul %50, %52, %cst_53 {dimension_numbers = #tpu.dot_dimension_numbers<[1], [0], [0], [1], [0, 0, 1, 1], [], []>} : vector<256x18xf32>, vector<18x128xf32>, vector<256x128xf32> -> vector<256x128xf32>
    %54 = arith.addf %48, %53 : vector<256x128xf32>
    %c0_54 = arith.constant 0 : index
    %c0_55 = arith.constant 0 : index
    %55 = vector.load %arg3[%c0_54, %c0_55] : memref<1x128xf32, #tpu.memory_space<vmem>>, vector<1x128xf32>
    %56 = vector.broadcast %55 : vector<1x128xf32> to vector<256x128xf32>
    %57 = arith.addf %54, %56 : vector<256x128xf32>
    %c0_56 = arith.constant 0 : index
    %c0_57 = arith.constant 0 : index
    %58 = vector.load %arg4[%c0_56, %c0_57] : memref<256x128xf32, #tpu.memory_space<vmem>>, vector<256x128xf32>
    tpu.vector_store %arg4[%c0_56, %c0_57], %57 {strides = array<i32>} : memref<256x128xf32, #tpu.memory_space<vmem>>, vector<256x128xf32>,
    return
  }
  func.func @transform_0(%arg0: i32) -> (i32, i32, i32) {
    %c0_i32 = arith.constant 0 : i32
    %c0_i32_0 = arith.constant 0 : i32
    %c0_i32_1 = arith.constant 0 : i32
    return %arg0, %c0_i32, %c0_i32_0 : i32, i32, i32
  }
  func.func @transform_1(%arg0: i32) -> (i32, i32, i32) {
    %c0_i32 = arith.constant 0 : i32
    %c0_i32_0 = arith.constant 0 : i32
    %c0_i32_1 = arith.constant 0 : i32
    %c0_i32_2 = arith.constant 0 : i32
    return %c0_i32, %c0_i32_0, %c0_i32_1 : i32, i32, i32
  }
  func.func @transform_2(%arg0: i32) -> (i32, i32) {
    %c0_i32 = arith.constant 0 : i32
    %c0_i32_0 = arith.constant 0 : i32
    %c0_i32_1 = arith.constant 0 : i32
    return %c0_i32, %c0_i32_0 : i32, i32
  }
  func.func @transform_3(%arg0: i32) -> (i32, i32) {
    %c0_i32 = arith.constant 0 : i32
    %c0_i32_0 = arith.constant 0 : i32
    return %arg0, %c0_i32 : i32, i32
  }
}

</mosaic_0001>

<llo_original>
// kernel: tpu_custom_call.1
$region0: #{tpu_custom_call.1}
  #allocation0 [shape = 'u32[]', space=smem, size = 0x4, offset = 0x4, fixed_abs, tag = 'smem constant byte address 0x4 - core index']
  #allocation1 [shape = 'u32[144,128]{1,0:T(1,128)}', space=vmem, size = 0x12000, scoped, tag = 'internal scratch']
  %s0 = inlined_call_operand.vmem [shape: f32[36,18,18], index: 0, kind: input, shape index: {}]
  %s1 = inlined_call_operand.vmem [shape: f32[9,18,128], index: 1, kind: input, shape index: {}]
  %s2 = inlined_call_operand.vmem [shape: f32[1,128], index: 2, kind: input, shape index: {}]
  %s3 = inlined_call_operand.hbm [shape: f32[512,128], index: 3, kind: output, shape index: {}]
  %s4 = sld [smem:[#allocation0]]
  $region45: #{tpu_custom_call.1} parent=0
    _
  %s6 = ssub.s32 1, %s4
  %s7 = scalar_select 0, %s6, %s4
  $region1: #{tpu_custom_call.1} parent=0
    #allocation2 [shape = 'u8[262144]{0}', space=vmem, size = 0x40000, scoped, tag = 'output window, operand 0']
    #allocation3 [shape = 's32[2]{0}', space=sflag, size = 0x8, scoped, tag = 'scoped memory for tpu_custom_call.1']
    %8 = vsyncpa [#allocation3], 0
    %s9 = scalar_lea.sflag [#allocation3], 1
    %10 = vsyncpa %s9, 0
    loop: start=0, step=1, limit=4
    $region2: #{tpu_custom_call.1} parent=1 // loop_pre_header
      _
    $region3: #{tpu_custom_call.1} parent=1 // loop_header
      %s12 = sphi 0, %s16
      %p13 = scmp.ge.s32.totalorder %s12, 4
      %s22 = sphi 0, %s24
      %s25 = sphi 0, %s22
      %s26 = sphi 0, %s25
      %s42 = sphi 0, %s26
      %s46 = sphi 0, %s46
      %s48 = sphi 0, %s46
      %s49 = sphi 0, %s48
      %s63 = sphi 0, %s49
      %s67 = sphi 0, %s67
      %s69 = sphi 0, %s67
      %s70 = sphi 0, %s69
      %s84 = sphi 0, %s70
      %s90 = sphi 0, %s92
      %s93 = sphi 0, %s90
      %s94 = sphi 0, %s93
      %s110 = sphi 0, %s94
    $region4: #{tpu_custom_call.1} parent=1 // loop_header_branch
      %15 = sbr.rel (%p13) target = $region8
    $region5: #{tpu_custom_call.1} parent=1 // loop_body
      %s17 = ssub.s32 %s12, 1
      %s18 = ssub.s32 %s12, 2
      %s19 = sadd.s32 %s12, 1
      %s20 = ssub.s32 %s12, %s19
      %p21 = scmp.eq.s32.totalorder %s20, 0
      %s23 = sadd.s32 %s22, 1
      %s24 = scalar_select %p21, %s22, %s23
      %p27 = pneg %p21
      %p28 = scmp.eq.s32.totalorder %s12, 1
      %p29 = por %p27, %p28
      %p30 = scmp.ne.s32.totalorder %s22, %s25
      %p31 = scmp.eq.s32.totalorder %s12, 0
      %p32 = por %p30, %p31
      %p33 = scmp.ne.s32.totalorder %s22, %s25
      %p34 = scmp.eq.s32.totalorder %s17, 1
      %p35 = por %p33, %p34
      %p36 = scmp.ne.s32.totalorder %s25, %s26
      %p37 = scmp.eq.s32.totalorder %s17, 0
      %p38 = por %p36, %p37
      %p39 = scmp.ne.s32.totalorder %s25, %s26
      %p40 = scmp.eq.s32.totalorder %s18, 1
      %p41 = por %p39, %p40
      %p43 = scmp.ne.s32.totalorder %s26, %s42
      %p44 = scmp.eq.s32.totalorder %s18, 0
      %p45 = por %p43, %p44
      %s47 = sadd.s32 %s46, 1
      %p50 = scmp.eq.s32.totalorder %s12, 1
      %p51 = scmp.ne.s32.totalorder %s46, %s48
      %p52 = scmp.eq.s32.totalorder %s12, 0
      %p53 = por %p51, %p52
      %p54 = scmp.ne.s32.totalorder %s46, %s48
      %p55 = scmp.eq.s32.totalorder %s17, 1
      %p56 = por %p54, %p55
      %p57 = scmp.ne.s32.totalorder %s48, %s49
      %p58 = scmp.eq.s32.totalorder %s17, 0
      %p59 = por %p57, %p58
      %p60 = scmp.ne.s32.totalorder %s48, %s49
      %p61 = scmp.eq.s32.totalorder %s18, 1
      %p62 = por %p60, %p61
      %p64 = scmp.ne.s32.totalorder %s49, %s63
      %p65 = scmp.eq.s32.totalorder %s18, 0
      %p66 = por %p64, %p65
      %s68 = sadd.s32 %s67, 1
      %p71 = scmp.eq.s32.totalorder %s12, 1
      %p72 = scmp.ne.s32.totalorder %s67, %s69
      %p73 = scmp.eq.s32.totalorder %s12, 0
      %p74 = por %p72, %p73
      %p75 = scmp.ne.s32.totalorder %s67, %s69
      %p76 = scmp.eq.s32.totalorder %s17, 1
      %p77 = por %p75, %p76
      %p78 = scmp.ne.s32.totalorder %s69, %s70
      %p79 = scmp.eq.s32.totalorder %s17, 0
      %p80 = por %p78, %p79
      %p81 = scmp.ne.s32.totalorder %s69, %s70
      %p82 = scmp.eq.s32.totalorder %s18, 1
      %p83 = por %p81, %p82
      %p85 = scmp.ne.s32.totalorder %s70, %s84
      %p86 = scmp.eq.s32.totalorder %s18, 0
      %p87 = por %p85, %p86
      %s88 = ssub.s32 %s12, %s19
      %p89 = scmp.eq.s32.totalorder %s88, 0
      %s91 = sadd.s32 %s90, 1
      %s92 = scalar_select %p89, %s90, %s91
      %p95 = pneg %p89
      %p96 = scmp.eq.s32.totalorder %s12, 1
      %p97 = por %p95, %p96
      %p98 = scmp.ne.s32.totalorder %s90, %s93
      %p99 = scmp.eq.s32.totalorder %s12, 0
      %p100 = por %p98, %p99
      %p101 = scmp.ne.s32.totalorder %s90, %s93
      %p102 = scmp.eq.s32.totalorder %s17, 1
      %p103 = por %p101, %p102
      %p104 = scmp.ne.s32.totalorder %s93, %s94
      %p105 = scmp.eq.s32.totalorder %s17, 0
      %p106 = por %p104, %p105
      %p107 = scmp.ne.s32.totalorder %s93, %s94
      %p108 = scmp.eq.s32.totalorder %s18, 1
      %p109 = por %p107, %p108
      %p111 = scmp.ne.s32.totalorder %s94, %s110
      %p112 = scmp.eq.s32.totalorder %s18, 0
      %p113 = por %p111, %p112
      %p114 = scmp.le.s32.totalorder 1, %s12
      %p115 = scmp.lt.s32.totalorder %s12, 3
      %p116 = pnand %p114, %p115
      %p117 = pneg %p116
      // Predicated region
      $region9: #{tpu_custom_call.1} parent=5 // pred_check
        _
      $region10: #{tpu_custom_call.1} parent=5 // pred_check_branch
        %119 = sbr.rel (%p116) target = $region12
      $region11: #{tpu_custom_call.1} parent=5 // pred_region
        %s120 = ssub.s32 %s12, 1
        // Predicated region
        $region13: #{tpu_custom_call.1} parent=11 // pred_check
          %p121 = pneg %p59
        $region14: #{tpu_custom_call.1} parent=11 // pred_check_branch
          %123 = sbr.rel (%p121) target = $region16
        $region15: #{tpu_custom_call.1} parent=11 // pred_region
          _
        $region16: #{tpu_custom_call.1} parent=11 // pred_fallthru
          _
        // Predicated region
        $region17: #{tpu_custom_call.1} parent=11 // pred_check
          %p124 = pneg %p80
        $region18: #{tpu_custom_call.1} parent=11 // pred_check_branch
          %126 = sbr.rel (%p124) target = $region20
        $region19: #{tpu_custom_call.1} parent=11 // pred_region
          _
        $region20: #{tpu_custom_call.1} parent=11 // pred_fallthru
          _
      $region12: #{tpu_custom_call.1} parent=5 // pred_fallthru
        _
      %p127 = scmp.lt.s32.totalorder %s12, 2
      // Predicated region
      $region21: #{tpu_custom_call.1} parent=5 // pred_check
        %p128 = pneg %p127
      $region22: #{tpu_custom_call.1} parent=5 // pred_check_branch
        %130 = sbr.rel (%p128) target = $region24
      $region23: #{tpu_custom_call.1} parent=5 // pred_region
        // Predicated region
        $region25: #{tpu_custom_call.1} parent=23 // pred_check
          %p131 = pneg %p32
        $region26: #{tpu_custom_call.1} parent=23 // pred_check_branch
          %133 = sbr.rel (%p131) target = $region28
        $region27: #{tpu_custom_call.1} parent=23 // pred_region
          %s134 = smul.u32 18, %s12
          %p135 = scmp.lt.s32.totalorder %s134, 35
          %s136 = scalar_select %p135, %s134, 35
          %s137 = smul.addr %s136, 3
          %s138 = smul.addr %s137, 8
          %s139 = scalar_lea.vmem %s0, %s138
          %s140 = smul.u32 18, %s12
        $region28: #{tpu_custom_call.1} parent=23 // pred_fallthru
          _
      $region24: #{tpu_custom_call.1} parent=5 // pred_fallthru
        _
      %p141 = scmp.le.s32.totalorder 1, %s12
      %p142 = scmp.lt.s32.totalorder %s12, 3
      %p143 = pnand %p141, %p142
      %p144 = pneg %p143
      // Predicated region
      $region29: #{tpu_custom_call.1} parent=5 // pred_check
        _
      $region30: #{tpu_custom_call.1} parent=5 // pred_check_branch
        %146 = sbr.rel (%p143) target = $region32
      $region31: #{tpu_custom_call.1} parent=5 // pred_region
        %s147 = ssub.s32 %s12, 1
        %s148 = smul.u32 18, %s17
        %p149 = scmp.lt.s32.totalorder %s148, 35
        %s150 = scalar_select %p149, %s148, 35
        %s151 = smul.addr %s150, 3
        %s152 = smul.addr %s151, 8
        %s153 = scalar_lea.vmem %s0, %s152
        %p154 = pneg %p38
        %p155 = pneg %p35
        %p156 = pneg %p59
        %p157 = pneg %p56
        %p158 = pneg %p80
        %p159 = pneg %p77
        %p160 = pneg %p106
        %p161 = pneg %p103
        %s162 = sand.u32 %s93, 1
        %s163 = scalar_lea.sflag [#allocation3], %s162
        %s164 = sand.u32 %s93, 1
        %s165 = smul.addr %s164, 256
        %s166 = scalar_lea.vmem [#allocation2], %s165
        %s167 = smul.u32 18, %s17
        %p168 = scmp.lt.s32.totalorder %s167, 35
        %s169 = scalar_select %p168, %s167, 35
        %s170 = smul.addr %s169, 3
        %s171 = smul.addr %s170, 8
        %s172 = scalar_lea.vmem %s0, %s171
        %s173 = smul.u32 18, %s17
        %s174 = smul.u32 32, %s17
        %v175 = vld [vmem:[%s172] sm:$0xff]
        %v176 = vld [vmem:[%s172 + $0x8] sm:$0xff]
        %v177 = vld [vmem:[%s172 + $0x18] sm:$0xff]
        %v178 = vld [vmem:[%s172 + $0x20] sm:$0xff]
        %v179 = vld [vmem:[%s172 + $0x30] sm:$0xff]
        %v180 = vld [vmem:[%s172 + $0x38] sm:$0xff]
        %v181 = vld [vmem:[%s172 + $0x48] sm:$0xff]
        %v182 = vld [vmem:[%s172 + $0x50] sm:$0xff]
        %v183 = vld [vmem:[%s172 + $0x60] sm:$0xff]
        %v184 = vld [vmem:[%s172 + $0x68] sm:$0xff]
        %v185 = vld [vmem:[%s172 + $0x78] sm:$0xff]
        %v186 = vld [vmem:[%s172 + $0x80] sm:$0xff]
        %v187 = vld [vmem:[%s172 + $0x90] sm:$0xff]
        %v188 = vld [vmem:[%s172 + $0x98] sm:$0xff]
        %v189 = vld [vmem:[%s172 + $0xa8] sm:$0xff]
        %v190 = vld [vmem:[%s172 + $0xb0] sm:$0xff]
        %v191 = vld [vmem:[%s172 + $0xc0] sm:$0xff]
        %v192 = vld [vmem:[%s172 + $0xc8] sm:$0xff]
        %v193 = vld [vmem:[%s172 + $0xd8] sm:$0xff]
        %v194 = vld [vmem:[%s172 + $0xe0] sm:$0xff]
        %v195 = vld [vmem:[%s172 + $0xf0] sm:$0xff]
        %v196 = vld [vmem:[%s172 + $0xf8] sm:$0xff]
        %v197 = vld [vmem:[%s172 + $0x108] sm:$0xff]
        %v198 = vld [vmem:[%s172 + $0x110] sm:$0xff]
        %v199 = vld [vmem:[%s172 + $0x120] sm:$0xff]
        %v200 = vld [vmem:[%s172 + $0x128] sm:$0xff]
        %v201 = vld [vmem:[%s172 + $0x138] sm:$0xff]
        %v202 = vld [vmem:[%s172 + $0x140] sm:$0xff]
        %v203 = vld [vmem:[%s172 + $0x150] sm:$0xff]
        %v204 = vld [vmem:[%s172 + $0x158] sm:$0xff]
        %v205 = vld [vmem:[%s172 + $0x168] sm:$0xff]
        %v206 = vld [vmem:[%s172 + $0x170] sm:$0xff]
        %v207 = vld [vmem:[%s1] sm:$0xff]
        %v208 = vld [vmem:[%s1 + $0x8] sm:$0xff]
        %v209 = vld [vmem:[%s1 + $0x10] sm:$0x3]
        %v210 = vld [vmem:[%s172 + $0x1] sm:$0xff]
        %v211 = vld [vmem:[%s172 + $0x9] sm:$0xff]
        %v212 = vld [vmem:[%s172 + $0x19] sm:$0xff]
        %v213 = vld [vmem:[%s172 + $0x21] sm:$0xff]
        %v214 = vld [vmem:[%s172 + $0x31] sm:$0xff]
        %v215 = vld [vmem:[%s172 + $0x39] sm:$0xff]
        %v216 = vld [vmem:[%s172 + $0x49] sm:$0xff]
        %v217 = vld [vmem:[%s172 + $0x51] sm:$0xff]
        %v218 = vld [vmem:[%s172 + $0x61] sm:$0xff]
        %v219 = vld [vmem:[%s172 + $0x69] sm:$0xff]
        %v220 = vld [vmem:[%s172 + $0x79] sm:$0xff]
        %v221 = vld [vmem:[%s172 + $0x81] sm:$0xff]
        %v222 = vld [vmem:[%s172 + $0x91] sm:$0xff]
        %v223 = vld [vmem:[%s172 + $0x99] sm:$0xff]
        %v224 = vld [vmem:[%s172 + $0xa9] sm:$0xff]
        %v225 = vld [vmem:[%s172 + $0xb1] sm:$0xff]
        %v226 = vld [vmem:[%s172 + $0xc1] sm:$0xff]
        %v227 = vld [vmem:[%s172 + $0xc9] sm:$0xff]
        %v228 = vld [vmem:[%s172 + $0xd9] sm:$0xff]
        %v229 = vld [vmem:[%s172 + $0xe1] sm:$0xff]
        %v230 = vld [vmem:[%s172 + $0xf1] sm:$0xff]
        %v231 = vld [vmem:[%s172 + $0xf9] sm:$0xff]
        %v232 = vld [vmem:[%s172 + $0x109] sm:$0xff]
        %v233 = vld [vmem:[%s172 + $0x111] sm:$0xff]
        %v234 = vld [vmem:[%s172 + $0x121] sm:$0xff]
        %v235 = vld [vmem:[%s172 + $0x129] sm:$0xff]
        %v236 = vld [vmem:[%s172 + $0x139] sm:$0xff]
        %v237 = vld [vmem:[%s172 + $0x141] sm:$0xff]
        %v238 = vld [vmem:[%s172 + $0x151] sm:$0xff]
        %v239 = vld [vmem:[%s172 + $0x159] sm:$0xff]
        %v240 = vld [vmem:[%s172 + $0x169] sm:$0xff]
        %v241 = vld [vmem:[%s172 + $0x171] sm:$0xff]
        %s242 = scalar_lea.vmem %s1, 24
        %v243 = vld [vmem:[%s242] sm:$0xff]
        %v244 = vld [vmem:[%s242 + $0x8] sm:$0xff]
        %v245 = vld [vmem:[%s242 + $0x10] sm:$0x3]
        %vm246 = vcmask 146432
        %v248 = vsel %vm246, %v210, 0
        %v251 = vsel %vm246, %v211, 0
        %v254 = vsel %vm246, %v212, 0
        %v257 = vsel %vm246, %v213, 0
        %v260 = vsel %vm246, %v214, 0
        %v263 = vsel %vm246, %v215, 0
        %v266 = vsel %vm246, %v216, 0
        %v269 = vsel %vm246, %v217, 0
        %v272 = vsel %vm246, %v218, 0
        %v275 = vsel %vm246, %v219, 0
        %v278 = vsel %vm246, %v220, 0
        %v281 = vsel %vm246, %v221, 0
        %v284 = vsel %vm246, %v222, 0
        %v287 = vsel %vm246, %v223, 0
        %v290 = vsel %vm246, %v224, 0
        %v293 = vsel %vm246, %v225, 0
        %v296 = vsel %vm246, %v226, 0
        %v299 = vsel %vm246, %v227, 0
        %v302 = vsel %vm246, %v228, 0
        %v305 = vsel %vm246, %v229, 0
        %v308 = vsel %vm246, %v230, 0
        %v311 = vsel %vm246, %v231, 0
        %v314 = vsel %vm246, %v232, 0
        %v317 = vsel %vm246, %v233, 0
        %v320 = vsel %vm246, %v234, 0
        %v323 = vsel %vm246, %v235, 0
        %v326 = vsel %vm246, %v236, 0
        %v329 = vsel %vm246, %v237, 0
        %v332 = vsel %vm246, %v238, 0
        %v335 = vsel %vm246, %v239, 0
        %v338 = vsel %vm246, %v240, 0
        %v341 = vsel %vm246, %v241, 0
        %vm343 = vcmask 1041408
        %v345 = vsel %vm343, %v245, 0
        %347 = vmatprep.subr.mxu0 0.0
        %348 = vmatpush1.msra.mxu0 %v243
        %349 = vmatprep.subr.mxu0 0.0
        %350 = vmatpush1.msra.mxu0 %v244
        %351 = vmatprep.subr.mxu0 0.0
        %352 = vmatpush1.msra.mxu0 %v345
        %353 = vmatprep.subr.mxu0 0.0
        %354 = vmatpush1.msra.mxu0 0.0
        %355 = vmatprep.subr.mxu0 0.0
        %356 = vmatpush1.msra.mxu0 0.0
        %357 = vmatprep.subr.mxu0 0.0
        %358 = vmatpush1.msra.mxu0 0.0
        %359 = vmatprep.subr.mxu0 0.0
        %360 = vmatpush1.msra.mxu0 0.0
        %361 = vmatprep.subr.mxu0 0.0
        %362 = vmatpush1.msra.mxu0 0.0
        %363 = vmatprep.subr.mxu0 0.0
        %364 = vmatpush1.msra.mxu0 0.0
        %365 = vmatprep.subr.mxu0 0.0
        %366 = vmatpush1.msra.mxu0 0.0
        %367 = vmatprep.subr.mxu0 0.0
        %368 = vmatpush1.msra.mxu0 0.0
        %369 = vmatprep.subr.mxu0 0.0
        %370 = vmatpush1.msra.mxu0 0.0
        %371 = vmatprep.subr.mxu0 0.0
        %372 = vmatpush1.msra.mxu0 0.0
        %373 = vmatprep.subr.mxu0 0.0
        %374 = vmatpush1.msra.mxu0 0.0
        %375 = vmatprep.subr.mxu0 0.0
        %376 = vmatpush1.msra.mxu0 0.0
        %377 = vmatprep.subr.mxu0 0.0
        %378 = vmatpush1.msra.mxu0 0.0
        %379 = vmatprep.subr.mxu0 0.0
        %380 = vmatpush1.msra.mxu0 0.0
        %381 = vmatprep.subr.mxu0 0.0
        %382 = vmatpush1.msra.mxu0 0.0
        %383 = vmatprep.subr.mxu0 0.0
        %384 = vmatpush1.msra.mxu0 0.0
        %385 = vmatprep.subr.mxu0 0.0
        %386 = vmatpush1.msra.mxu0 0.0
        %387 = vmatprep.subr.mxu0 0.0
        %388 = vmatpush1.msra.mxu0 0.0
        %389 = vmatprep.subr.mxu0 0.0
        %390 = vmatpush1.msra.mxu0 0.0
        %391 = vmatprep.subr.mxu0 0.0
        %392 = vmatpush1.msra.mxu0 0.0
        %393 = vmatprep.subr.mxu0 0.0
        %394 = vmatpush1.msra.mxu0 0.0
        %395 = vmatprep.subr.mxu0 0.0
        %396 = vmatpush1.msra.mxu0 0.0
        %397 = vmatprep.subr.mxu0 0.0
        %398 = vmatpush1.msra.mxu0 0.0
        %399 = vmatprep.subr.mxu0 0.0
        %400 = vmatpush1.msra.mxu0 0.0
        %401 = vmatprep.subr.mxu0 0.0
        %402 = vmatpush1.msra.mxu0 0.0
        %403 = vmatprep.subr.mxu0 0.0
        %404 = vmatpush1.msra.mxu0 0.0
        %405 = vmatprep.subr.mxu0 0.0
        %406 = vmatpush1.msra.mxu0 0.0
        %407 = vmatprep.subr.mxu0 0.0
        %408 = vmatpush1.msra.mxu0 0.0
        %409 = vmatprep.subr.mxu0 0.0
        %410 = vmatpush1.msra.mxu0 0.0
        %411 = vmatprep.mubr.f32.mxu0 0.0
        %412 = vmatmul.mubr.f32.gmra.mrb[0].mxu0 %v248
        %v413 = vpop.f32.mrb[0].mxu0
        %v414 = vadd.f32 0.0, %v413
        %v415 = vpop.f32.mrb[0].mxu0
        %416 = vmatprep.mubr.f32.mxu0 0.0
        %417 = vmatmul.mubr.f32.gmra.mrb[0].mxu0 %v251
        %v418 = vpop.f32.mrb[0].mxu0
        %v419 = vadd.f32 0.0, %v418
        %v420 = vpop.f32.mrb[0].mxu0
        %421 = vmatprep.mubr.f32.mxu0 0.0
        %422 = vmatmul.mubr.f32.gmra.mrb[0].mxu0 %v254
        %v423 = vpop.f32.mrb[0].mxu0
        %v424 = vadd.f32 0.0, %v423
        %v425 = vpop.f32.mrb[0].mxu0
        %426 = vmatprep.mubr.f32.mxu0 0.0
        %427 = vmatmul.mubr.f32.gmra.mrb[0].mxu0 %v257
        %v428 = vpop.f32.mrb[0].mxu0
        %v429 = vadd.f32 0.0, %v428
        %v430 = vpop.f32.mrb[0].mxu0
        %431 = vmatprep.mubr.f32.mxu0 0.0
        %432 = vmatmul.mubr.f32.gmra.mrb[0].mxu0 %v260
        %v433 = vpop.f32.mrb[0].mxu0
        %v434 = vadd.f32 0.0, %v433
        %v435 = vpop.f32.mrb[0].mxu0
        %436 = vmatprep.mubr.f32.mxu0 0.0
        %437 = vmatmul.mubr.f32.gmra.mrb[0].mxu0 %v263
        %v438 = vpop.f32.mrb[0].mxu0
        %v439 = vadd.f32 0.0, %v438
        %v440 = vpop.f32.mrb[0].mxu0
        %441 = vmatprep.mubr.f32.mxu0 0.0
        %442 = vmatmul.mubr.f32.gmra.mrb[0].mxu0 %v266
        %v443 = vpop.f32.mrb[0].mxu0
        %v444 = vadd.f32 0.0, %v443
        %v445 = vpop.f32.mrb[0].mxu0
        %446 = vmatprep.mubr.f32.mxu0 0.0
        %447 = vmatmul.mubr.f32.gmra.mrb[0].mxu0 %v269
        %v448 = vpop.f32.mrb[0].mxu0
        %v449 = vadd.f32 0.0, %v448
        %v450 = vpop.f32.mrb[0].mxu0
        %451 = vmatprep.mubr.f32.mxu0 0.0
        %452 = vmatmul.mubr.f32.gmra.mrb[0].mxu0 %v272
        %v453 = vpop.f32.mrb[0].mxu0
        %v454 = vadd.f32 0.0, %v453
        %v455 = vpop.f32.mrb[0].mxu0
        %456 = vmatprep.mubr.f32.mxu0 0.0
        %457 = vmatmul.mubr.f32.gmra.mrb[0].mxu0 %v275
        %v458 = vpop.f32.mrb[0].mxu0
        %v459 = vadd.f32 0.0, %v458
        %v460 = vpop.f32.mrb[0].mxu0
        %461 = vmatprep.mubr.f32.mxu0 0.0
        %462 = vmatmul.mubr.f32.gmra.mrb[0].mxu0 %v278
        %v463 = vpop.f32.mrb[0].mxu0
        %v464 = vadd.f32 0.0, %v463
        %v465 = vpop.f32.mrb[0].mxu0
        %466 = vmatprep.mubr.f32.mxu0 0.0
        %467 = vmatmul.mubr.f32.gmra.mrb[0].mxu0 %v281
        %v468 = vpop.f32.mrb[0].mxu0
        %v469 = vadd.f32 0.0, %v468
        %v470 = vpop.f32.mrb[0].mxu0
        %471 = vmatprep.mubr.f32.mxu0 0.0
        %472 = vmatmul.mubr.f32.gmra.mrb[0].mxu0 %v284
        %v473 = vpop.f32.mrb[0].mxu0
        %v474 = vadd.f32 0.0, %v473
        %v475 = vpop.f32.mrb[0].mxu0
        %476 = vmatprep.mubr.f32.mxu0 0.0
        %477 = vmatmul.mubr.f32.gmra.mrb[0].mxu0 %v287
        %v478 = vpop.f32.mrb[0].mxu0
        %v479 = vadd.f32 0.0, %v478
        %v480 = vpop.f32.mrb[0].mxu0
        %481 = vmatprep.mubr.f32.mxu0 0.0
        %482 = vmatmul.mubr.f32.gmra.mrb[0].mxu0 %v290
        %v483 = vpop.f32.mrb[0].mxu0
        %v484 = vadd.f32 0.0, %v483
        %v485 = vpop.f32.mrb[0].mxu0
        %486 = vmatprep.mubr.f32.mxu0 0.0
        %487 = vmatmul.mubr.f32.gmra.mrb[0].mxu0 %v293
        %v488 = vpop.f32.mrb[0].mxu0
        %v489 = vadd.f32 0.0, %v488
        %v490 = vpop.f32.mrb[0].mxu0
        %491 = vmatprep.mubr.f32.mxu0 0.0
        %492 = vmatmul.mubr.f32.gmra.mrb[0].mxu0 %v296
        %v493 = vpop.f32.mrb[0].mxu0
        %v494 = vadd.f32 0.0, %v493
        %v495 = vpop.f32.mrb[0].mxu0
        %496 = vmatprep.mubr.f32.mxu0 0.0
        %497 = vmatmul.mubr.f32.gmra.mrb[0].mxu0 %v299
        %v498 = vpop.f32.mrb[0].mxu0
        %v499 = vadd.f32 0.0, %v498
        %v500 = vpop.f32.mrb[0].mxu0
        %501 = vmatprep.mubr.f32.mxu0 0.0
        %502 = vmatmul.mubr.f32.gmra.mrb[0].mxu0 %v302
        %v503 = vpop.f32.mrb[0].mxu0
        %v504 = vadd.f32 0.0, %v503
        %v505 = vpop.f32.mrb[0].mxu0
        %506 = vmatprep.mubr.f32.mxu0 0.0
        %507 = vmatmul.mubr.f32.gmra.mrb[0].mxu0 %v305
        %v508 = vpop.f32.mrb[0].mxu0
        %v509 = vadd.f32 0.0, %v508
        %v510 = vpop.f32.mrb[0].mxu0
        %511 = vmatprep.mubr.f32.mxu0 0.0
        %512 = vmatmul.mubr.f32.gmra.mrb[0].mxu0 %v308
        %v513 = vpop.f32.mrb[0].mxu0
        %v514 = vadd.f32 0.0, %v513
        %v515 = vpop.f32.mrb[0].mxu0
        %516 = vmatprep.mubr.f32.mxu0 0.0
        %517 = vmatmul.mubr.f32.gmra.mrb[0].mxu0 %v311
        %v518 = vpop.f32.mrb[0].mxu0
        %v519 = vadd.f32 0.0, %v518
        %v520 = vpop.f32.mrb[0].mxu0
        %521 = vmatprep.mubr.f32.mxu0 0.0
        %522 = vmatmul.mubr.f32.gmra.mrb[0].mxu0 %v314
        %v523 = vpop.f32.mrb[0].mxu0
        %v524 = vadd.f32 0.0, %v523
        %v525 = vpop.f32.mrb[0].mxu0
        %526 = vmatprep.mubr.f32.mxu0 0.0
        %527 = vmatmul.mubr.f32.gmra.mrb[0].mxu0 %v317
        %v528 = vpop.f32.mrb[0].mxu0
        %v529 = vadd.f32 0.0, %v528
        %v530 = vpop.f32.mrb[0].mxu0
        %531 = vmatprep.mubr.f32.mxu0 0.0
        %532 = vmatmul.mubr.f32.gmra.mrb[0].mxu0 %v320
        %v533 = vpop.f32.mrb[0].mxu0
        %v534 = vadd.f32 0.0, %v533
        %v535 = vpop.f32.mrb[0].mxu0
        %536 = vmatprep.mubr.f32.mxu0 0.0
        %537 = vmatmul.mubr.f32.gmra.mrb[0].mxu0 %v323
        %v538 = vpop.f32.mrb[0].mxu0
        %v539 = vadd.f32 0.0, %v538
        %v540 = vpop.f32.mrb[0].mxu0
        %541 = vmatprep.mubr.f32.mxu0 0.0
        %542 = vmatmul.mubr.f32.gmra.mrb[0].mxu0 %v326
        %v543 = vpop.f32.mrb[0].mxu0
        %v544 = vadd.f32 0.0, %v543
        %v545 = vpop.f32.mrb[0].mxu0
        %546 = vmatprep.mubr.f32.mxu0 0.0
        %547 = vmatmul.mubr.f32.gmra.mrb[0].mxu0 %v329
        %v548 = vpop.f32.mrb[0].mxu0
        %v549 = vadd.f32 0.0, %v548
        %v550 = vpop.f32.mrb[0].mxu0
        %551 = vmatprep.mubr.f32.mxu0 0.0
        %552 = vmatmul.mubr.f32.gmra.mrb[0].mxu0 %v332
        %v553 = vpop.f32.mrb[0].mxu0
        %v554 = vadd.f32 0.0, %v553
        %v555 = vpop.f32.mrb[0].mxu0
        %556 = vmatprep.mubr.f32.mxu0 0.0
        %557 = vmatmul.mubr.f32.gmra.mrb[0].mxu0 %v335
        %v558 = vpop.f32.mrb[0].mxu0
        %v559 = vadd.f32 0.0, %v558
        %v560 = vpop.f32.mrb[0].mxu0
        %561 = vmatprep.mubr.f32.mxu0 0.0
        %562 = vmatmul.mubr.f32.gmra.mrb[0].mxu0 %v338
        %v563 = vpop.f32.mrb[0].mxu0
        %v564 = vadd.f32 0.0, %v563
        %v565 = vpop.f32.mrb[0].mxu0
        %566 = vmatprep.mubr.f32.mxu0 0.0
        %567 = vmatmul.mubr.f32.gmra.mrb[0].mxu0 %v341
        %v568 = vpop.f32.mrb[0].mxu0
        %v569 = vadd.f32 0.0, %v568
        %v570 = vpop.f32.mrb[0].mxu0
        %571 = vdwg.mxu0
        %v573 = vsel %vm246, %v175, 0
        %v576 = vsel %vm246, %v176, 0
        %v579 = vsel %vm246, %v177, 0
        %v582 = vsel %vm246, %v178, 0
        %v585 = vsel %vm246, %v179, 0
        %v588 = vsel %vm246, %v180, 0
        %v591 = vsel %vm246, %v181, 0
        %v594 = vsel %vm246, %v182, 0
        %v597 = vsel %vm246, %v183, 0
        %v600 = vsel %vm246, %v184, 0
        %v603 = vsel %vm246, %v185, 0
        %v606 = vsel %vm246, %v186, 0
        %v609 = vsel %vm246, %v187, 0
        %v612 = vsel %vm246, %v188, 0
        %v615 = vsel %vm246, %v189, 0
        %v618 = vsel %vm246, %v190, 0
        %v621 = vsel %vm246, %v191, 0
        %v624 = vsel %vm246, %v192, 0
        %v627 = vsel %vm246, %v193, 0
        %v630 = vsel %vm246, %v194, 0
        %v633 = vsel %vm246, %v195, 0
        %v636 = vsel %vm246, %v196, 0
        %v639 = vsel %vm246, %v197, 0
        %v642 = vsel %vm246, %v198, 0
        %v645 = vsel %vm246, %v199, 0
        %v648 = vsel %vm246, %v200, 0
        %v651 = vsel %vm246, %v201, 0
        %v654 = vsel %vm246, %v202, 0
        %v657 = vsel %vm246, %v203, 0
        %v660 = vsel %vm246, %v204, 0
        %v663 = vsel %vm246, %v205, 0
        %v666 = vsel %vm246, %v206, 0
        %v669 = vsel %vm343, %v209, 0
        %671 = vmatprep.subr.mxu0 0.0
        %672 = vmatpush1.msra.mxu0 %v207
        %673 = vmatprep.subr.mxu0 0.0
        %674 = vmatpush1.msra.mxu0 %v208
        %675 = vmatprep.subr.mxu0 0.0
        %676 = vmatpush1.msra.mxu0 %v669
        %677 = vmatprep.subr.mxu0 0.0
        %678 = vmatpush1.msra.mxu0 0.0
        %679 = vmatprep.subr.mxu0 0.0
        %680 = vmatpush1.msra.mxu0 0.0
        %681 = vmatprep.subr.mxu0 0.0
        %682 = vmatpush1.msra.mxu0 0.0
        %683 = vmatprep.subr.mxu0 0.0
        %684 = vmatpush1.msra.mxu0 0.0
        %685 = vmatprep.subr.mxu0 0.0
        %686 = vmatpush1.msra.mxu0 0.0
        %687 = vmatprep.subr.mxu0 0.0
        %688 = vmatpush1.msra.mxu0 0.0
        %689 = vmatprep.subr.mxu0 0.0
        %690 = vmatpush1.msra.mxu0 0.0
        %691 = vmatprep.subr.mxu0 0.0
        %692 = vmatpush1.msra.mxu0 0.0
        %693 = vmatprep.subr.mxu0 0.0
        %694 = vmatpush1.msra.mxu0 0.0
        %695 = vmatprep.subr.mxu0 0.0
        %696 = vmatpush1.msra.mxu0 0.0
        %697 = vmatprep.subr.mxu0 0.0
        %698 = vmatpush1.msra.mxu0 0.0
        %699 = vmatprep.subr.mxu0 0.0
        %700 = vmatpush1.msra.mxu0 0.0
        %701 = vmatprep.subr.mxu0 0.0
        %702 = vmatpush1.msra.mxu0 0.0
        %703 = vmatprep.subr.mxu0 0.0
        %704 = vmatpush1.msra.mxu0 0.0
        %705 = vmatprep.subr.mxu0 0.0
        %706 = vmatpush1.msra.mxu0 0.0
        %707 = vmatprep.subr.mxu0 0.0
        %708 = vmatpush1.msra.mxu0 0.0
        %709 = vmatprep.subr.mxu0 0.0
        %710 = vmatpush1.msra.mxu0 0.0
        %711 = vmatprep.subr.mxu0 0.0
        %712 = vmatpush1.msra.mxu0 0.0
        %713 = vmatprep.subr.mxu0 0.0
        %714 = vmatpush1.msra.mxu0 0.0
        %715 = vmatprep.subr.mxu0 0.0
        %716 = vmatpush1.msra.mxu0 0.0
        %717 = vmatprep.subr.mxu0 0.0
        %718 = vmatpush1.msra.mxu0 0.0
        %719 = vmatprep.subr.mxu0 0.0
        %720 = vmatpush1.msra.mxu0 0.0
        %721 = vmatprep.subr.mxu0 0.0
        %722 = vmatpush1.msra.mxu0 0.0
        %723 = vmatprep.subr.mxu0 0.0
        %724 = vmatpush1.msra.mxu0 0.0
        %725 = vmatprep.subr.mxu0 0.0
        %726 = vmatpush1.msra.mxu0 0.0
        %727 = vmatprep.subr.mxu0 0.0
        %728 = vmatpush1.msra.mxu0 0.0
        %729 = vmatprep.subr.mxu0 0.0
        %730 = vmatpush1.msra.mxu0 0.0
        %731 = vmatprep.subr.mxu0 0.0
        %732 = vmatpush1.msra.mxu0 0.0
        %733 = vmatprep.subr.mxu0 0.0
        %734 = vmatpush1.msra.mxu0 0.0
        %735 = vmatprep.mubr.f32.mxu0 0.0
        %736 = vmatmul.mubr.f32.gmra.mrb[0].mxu0 %v573
        %v737 = vpop.f32.mrb[0].mxu0
        %v738 = vadd.f32 %v414, %v737
        %v739 = vpop.f32.mrb[0].mxu0
        %740 = vmatprep.mubr.f32.mxu0 0.0
        %741 = vmatmul.mubr.f32.gmra.mrb[0].mxu0 %v576
        %v742 = vpop.f32.mrb[0].mxu0
        %v743 = vadd.f32 %v419, %v742
        %v744 = vpop.f32.mrb[0].mxu0
        %745 = vmatprep.mubr.f32.mxu0 0.0
        %746 = vmatmul.mubr.f32.gmra.mrb[0].mxu0 %v579
        %v747 = vpop.f32.mrb[0].mxu0
        %v748 = vadd.f32 %v424, %v747
        %v749 = vpop.f32.mrb[0].mxu0
        %750 = vmatprep.mubr.f32.mxu0 0.0
        %751 = vmatmul.mubr.f32.gmra.mrb[0].mxu0 %v582
        %v752 = vpop.f32.mrb[0].mxu0
        %v753 = vadd.f32 %v429, %v752
        %v754 = vpop.f32.mrb[0].mxu0
        %755 = vmatprep.mubr.f32.mxu0 0.0
        %756 = vmatmul.mubr.f32.gmra.mrb[0].mxu0 %v585
        %v757 = vpop.f32.mrb[0].mxu0
        %v758 = vadd.f32 %v434, %v757
        %v759 = vpop.f32.mrb[0].mxu0
        %760 = vmatprep.mubr.f32.mxu0 0.0
        %761 = vmatmul.mubr.f32.gmra.mrb[0].mxu0 %v588
        %v762 = vpop.f32.mrb[0].mxu0
        %v763 = vadd.f32 %v439, %v762
        %v764 = vpop.f32.mrb[0].mxu0
        %765 = vmatprep.mubr.f32.mxu0 0.0
        %766 = vmatmul.mubr.f32.gmra.mrb[0].mxu0 %v591
        %v767 = vpop.f32.mrb[0].mxu0
        %v768 = vadd.f32 %v444, %v767
        %v769 = vpop.f32.mrb[0].mxu0
        %770 = vmatprep.mubr.f32.mxu0 0.0
        %771 = vmatmul.mubr.f32.gmra.mrb[0].mxu0 %v594
        %v772 = vpop.f32.mrb[0].mxu0
        %v773 = vadd.f32 %v449, %v772
        %v774 = vpop.f32.mrb[0].mxu0
        %775 = vmatprep.mubr.f32.mxu0 0.0
        %776 = vmatmul.mubr.f32.gmra.mrb[0].mxu0 %v597
        %v777 = vpop.f32.mrb[0].mxu0
        %v778 = vadd.f32 %v454, %v777
        %v779 = vpop.f32.mrb[0].mxu0
        %780 = vmatprep.mubr.f32.mxu0 0.0
        %781 = vmatmul.mubr.f32.gmra.mrb[0].mxu0 %v600
        %v782 = vpop.f32.mrb[0].mxu0
        %v783 = vadd.f32 %v459, %v782
        %v784 = vpop.f32.mrb[0].mxu0
        %785 = vmatprep.mubr.f32.mxu0 0.0
        %786 = vmatmul.mubr.f32.gmra.mrb[0].mxu0 %v603
        %v787 = vpop.f32.mrb[0].mxu0
        %v788 = vadd.f32 %v464, %v787
        %v789 = vpop.f32.mrb[0].mxu0
        %790 = vmatprep.mubr.f32.mxu0 0.0
        %791 = vmatmul.mubr.f32.gmra.mrb[0].mxu0 %v606
        %v792 = vpop.f32.mrb[0].mxu0
        %v793 = vadd.f32 %v469, %v792
        %v794 = vpop.f32.mrb[0].mxu0
        %795 = vmatprep.mubr.f32.mxu0 0.0
        %796 = vmatmul.mubr.f32.gmra.mrb[0].mxu0 %v609
        %v797 = vpop.f32.mrb[0].mxu0
        %v798 = vadd.f32 %v474, %v797
        %v799 = vpop.f32.mrb[0].mxu0
        %800 = vmatprep.mubr.f32.mxu0 0.0
        %801 = vmatmul.mubr.f32.gmra.mrb[0].mxu0 %v612
        %v802 = vpop.f32.mrb[0].mxu0
        %v803 = vadd.f32 %v479, %v802
        %v804 = vpop.f32.mrb[0].mxu0
        %805 = vmatprep.mubr.f32.mxu0 0.0
        %806 = vmatmul.mubr.f32.gmra.mrb[0].mxu0 %v615
        %v807 = vpop.f32.mrb[0].mxu0
        %v808 = vadd.f32 %v484, %v807
        %v809 = vpop.f32.mrb[0].mxu0
        %810 = vmatprep.mubr.f32.mxu0 0.0
        %811 = vmatmul.mubr.f32.gmra.mrb[0].mxu0 %v618
        %v812 = vpop.f32.mrb[0].mxu0
        %v813 = vadd.f32 %v489, %v812
        %v814 = vpop.f32.mrb[0].mxu0
        %815 = vmatprep.mubr.f32.mxu0 0.0
        %816 = vmatmul.mubr.f32.gmra.mrb[0].mxu0 %v621
        %v817 = vpop.f32.mrb[0].mxu0
        %v818 = vadd.f32 %v494, %v817
        %v819 = vpop.f32.mrb[0].mxu0
        %820 = vmatprep.mubr.f32.mxu0 0.0
        %821 = vmatmul.mubr.f32.gmra.mrb[0].mxu0 %v624
        %v822 = vpop.f32.mrb[0].mxu0
        %v823 = vadd.f32 %v499, %v822
        %v824 = vpop.f32.mrb[0].mxu0
        %825 = vmatprep.mubr.f32.mxu0 0.0
        %826 = vmatmul.mubr.f32.gmra.mrb[0].mxu0 %v627
        %v827 = vpop.f32.mrb[0].mxu0
        %v828 = vadd.f32 %v504, %v827
        %v829 = vpop.f32.mrb[0].mxu0
        %830 = vmatprep.mubr.f32.mxu0 0.0
        %831 = vmatmul.mubr.f32.gmra.mrb[0].mxu0 %v630
        %v832 = vpop.f32.mrb[0].mxu0
        %v833 = vadd.f32 %v509, %v832
        %v834 = vpop.f32.mrb[0].mxu0
        %835 = vmatprep.mubr.f32.mxu0 0.0
        %836 = vmatmul.mubr.f32.gmra.mrb[0].mxu0 %v633
        %v837 = vpop.f32.mrb[0].mxu0
        %v838 = vadd.f32 %v514, %v837
        %v839 = vpop.f32.mrb[0].mxu0
        %840 = vmatprep.mubr.f32.mxu0 0.0
        %841 = vmatmul.mubr.f32.gmra.mrb[0].mxu0 %v636
        %v842 = vpop.f32.mrb[0].mxu0
        %v843 = vadd.f32 %v519, %v842
        %v844 = vpop.f32.mrb[0].mxu0
        %845 = vmatprep.mubr.f32.mxu0 0.0
        %846 = vmatmul.mubr.f32.gmra.mrb[0].mxu0 %v639
        %v847 = vpop.f32.mrb[0].mxu0
        %v848 = vadd.f32 %v524, %v847
        %v849 = vpop.f32.mrb[0].mxu0
        %850 = vmatprep.mubr.f32.mxu0 0.0
        %851 = vmatmul.mubr.f32.gmra.mrb[0].mxu0 %v642
        %v852 = vpop.f32.mrb[0].mxu0
        %v853 = vadd.f32 %v529, %v852
        %v854 = vpop.f32.mrb[0].mxu0
        %855 = vmatprep.mubr.f32.mxu0 0.0
        %856 = vmatmul.mubr.f32.gmra.mrb[0].mxu0 %v645
        %v857 = vpop.f32.mrb[0].mxu0
        %v858 = vadd.f32 %v534, %v857
        %v859 = vpop.f32.mrb[0].mxu0
        %860 = vmatprep.mubr.f32.mxu0 0.0
        %861 = vmatmul.mubr.f32.gmra.mrb[0].mxu0 %v648
        %v862 = vpop.f32.mrb[0].mxu0
        %v863 = vadd.f32 %v539, %v862
        %v864 = vpop.f32.mrb[0].mxu0
        %865 = vmatprep.mubr.f32.mxu0 0.0
        %866 = vmatmul.mubr.f32.gmra.mrb[0].mxu0 %v651
        %v867 = vpop.f32.mrb[0].mxu0
        %v868 = vadd.f32 %v544, %v867
        %v869 = vpop.f32.mrb[0].mxu0
        %870 = vmatprep.mubr.f32.mxu0 0.0
        %871 = vmatmul.mubr.f32.gmra.mrb[0].mxu0 %v654
        %v872 = vpop.f32.mrb[0].mxu0
        %v873 = vadd.f32 %v549, %v872
        %v874 = vpop.f32.mrb[0].mxu0
        %875 = vmatprep.mubr.f32.mxu0 0.0
        %876 = vmatmul.mubr.f32.gmra.mrb[0].mxu0 %v657
        %v877 = vpop.f32.mrb[0].mxu0
        %v878 = vadd.f32 %v554, %v877
        %v879 = vpop.f32.mrb[0].mxu0
        %880 = vmatprep.mubr.f32.mxu0 0.0
        %881 = vmatmul.mubr.f32.gmra.mrb[0].mxu0 %v660
        %v882 = vpop.f32.mrb[0].mxu0
        %v883 = vadd.f32 %v559, %v882
        %v884 = vpop.f32.mrb[0].mxu0
        %885 = vmatprep.mubr.f32.mxu0 0.0
        %886 = vmatmul.mubr.f32.gmra.mrb[0].mxu0 %v663
        %v887 = vpop.f32.mrb[0].mxu0
        %v888 = vadd.f32 %v564, %v887
        %v889 = vpop.f32.mrb[0].mxu0
        %890 = vmatprep.mubr.f32.mxu0 0.0
        %891 = vmatmul.mubr.f32.gmra.mrb[0].mxu0 %v666
        %v892 = vpop.f32.mrb[0].mxu0
        %v893 = vadd.f32 %v569, %v892
        %v894 = vpop.f32.mrb[0].mxu0
        %895 = vdwg.mxu0
        %v896 = vld [vmem:[%s172 + $0x2] sm:$0xff]
        %v897 = vld [vmem:[%s172 + $0xa] sm:$0xff]
        %v898 = vld [vmem:[%s172 + $0x1a] sm:$0xff]
        %v899 = vld [vmem:[%s172 + $0x22] sm:$0xff]
        %v900 = vld [vmem:[%s172 + $0x32] sm:$0xff]
        %v901 = vld [vmem:[%s172 + $0x3a] sm:$0xff]
        %v902 = vld [vmem:[%s172 + $0x4a] sm:$0xff]
        %v903 = vld [vmem:[%s172 + $0x52] sm:$0xff]
        %v904 = vld [vmem:[%s172 + $0x62] sm:$0xff]
        %v905 = vld [vmem:[%s172 + $0x6a] sm:$0xff]
        %v906 = vld [vmem:[%s172 + $0x7a] sm:$0xff]
        %v907 = vld [vmem:[%s172 + $0x82] sm:$0xff]
        %v908 = vld [vmem:[%s172 + $0x92] sm:$0xff]
        %v909 = vld [vmem:[%s172 + $0x9a] sm:$0xff]
        %v910 = vld [vmem:[%s172 + $0xaa] sm:$0xff]
        %v911 = vld [vmem:[%s172 + $0xb2] sm:$0xff]
        %v912 = vld [vmem:[%s172 + $0xc2] sm:$0xff]
        %v913 = vld [vmem:[%s172 + $0xca] sm:$0xff]
        %v914 = vld [vmem:[%s172 + $0xda] sm:$0xff]
        %v915 = vld [vmem:[%s172 + $0xe2] sm:$0xff]
        %v916 = vld [vmem:[%s172 + $0xf2] sm:$0xff]
        %v917 = vld [vmem:[%s172 + $0xfa] sm:$0xff]
        %v918 = vld [vmem:[%s172 + $0x10a] sm:$0xff]
        %v919 = vld [vmem:[%s172 + $0x112] sm:$0xff]
        %v920 = vld [vmem:[%s172 + $0x122] sm:$0xff]
        %v921 = vld [vmem:[%s172 + $0x12a] sm:$0xff]
        %v922 = vld [vmem:[%s172 + $0x13a] sm:$0xff]
        %v923 = vld [vmem:[%s172 + $0x142] sm:$0xff]
        %v924 = vld [vmem:[%s172 + $0x152] sm:$0xff]
        %v925 = vld [vmem:[%s172 + $0x15a] sm:$0xff]
        %v926 = vld [vmem:[%s172 + $0x16a] sm:$0xff]
        %v927 = vld [vmem:[%s172 + $0x172] sm:$0xff]
        %s928 = scalar_lea.vmem %s1, 48
        %v929 = vld [vmem:[%s928] sm:$0xff]
        %v930 = vld [vmem:[%s928 + $0x8] sm:$0xff]
        %v931 = vld [vmem:[%s928 + $0x10] sm:$0x3]
        %v933 = vsel %vm246, %v896, 0
        %v936 = vsel %vm246, %v897, 0
        %v939 = vsel %vm246, %v898, 0
        %v942 = vsel %vm246, %v899, 0
        %v945 = vsel %vm246, %v900, 0
        %v948 = vsel %vm246, %v901, 0
        %v951 = vsel %vm246, %v902, 0
        %v954 = vsel %vm246, %v903, 0
        %v957 = vsel %vm246, %v904, 0
        %v960 = vsel %vm246, %v905, 0
        %v963 = vsel %vm246, %v906, 0
        %v966 = vsel %vm246, %v907, 0
        %v969 = vsel %vm246, %v908, 0
        %v972 = vsel %vm246, %v909, 0
        %v975 = vsel %vm246, %v910, 0
        %v978 = vsel %vm246, %v911, 0
        %v981 = vsel %vm246, %v912, 0
        %v984 = vsel %vm246, %v913, 0
        %v987 = vsel %vm246, %v914, 0
        %v990 = vsel %vm246, %v915, 0
        %v993 = vsel %vm246, %v916, 0
        %v996 = vsel %vm246, %v917, 0
        %v999 = vsel %vm246, %v918, 0
        %v1002 = vsel %vm246, %v919, 0
        %v1005 = vsel %vm246, %v920, 0
        %v1008 = vsel %vm246, %v921, 0
        %v1011 = vsel %vm246, %v922, 0
        %v1014 = vsel %vm246, %v923, 0
        %v1017 = vsel %vm246, %v924, 0
        %v1020 = vsel %vm246, %v925, 0
        %v1023 = vsel %vm246, %v926, 0
        %v1026 = vsel %vm246, %v927, 0
        %v1029 = vsel %vm343, %v931, 0
        %1031 = vmatprep.subr.mxu0 0.0
        %1032 = vmatpush1.msra.mxu0 %v929
        %1033 = vmatprep.subr.mxu0 0.0
        %1034 = vmatpush1.msra.mxu0 %v930
        %1035 = vmatprep.subr.mxu0 0.0
        %1036 = vmatpush1.msra.mxu0 %v1029
        %1037 = vmatprep.subr.mxu0 0.0
        %1038 = vmatpush1.msra.mxu0 0.0
        %1039 = vmatprep.subr.mxu0 0.0
        %1040 = vmatpush1.msra.mxu0 0.0
        %1041 = vmatprep.subr.mxu0 0.0
        %1042 = vmatpush1.msra.mxu0 0.0
        %1043 = vmatprep.subr.mxu0 0.0
        %1044 = vmatpush1.msra.mxu0 0.0
        %1045 = vmatprep.subr.mxu0 0.0
        %1046 = vmatpush1.msra.mxu0 0.0
        %1047 = vmatprep.subr.mxu0 0.0
        %1048 = vmatpush1.msra.mxu0 0.0
        %1049 = vmatprep.subr.mxu0 0.0
        %1050 = vmatpush1.msra.mxu0 0.0
        %1051 = vmatprep.subr.mxu0 0.0
        %1052 = vmatpush1.msra.mxu0 0.0
        %1053 = vmatprep.subr.mxu0 0.0
        %1054 = vmatpush1.msra.mxu0 0.0
        %1055 = vmatprep.subr.mxu0 0.0
        %1056 = vmatpush1.msra.mxu0 0.0
        %1057 = vmatprep.subr.mxu0 0.0
        %1058 = vmatpush1.msra.mxu0 0.0
        %1059 = vmatprep.subr.mxu0 0.0
        %1060 = vmatpush1.msra.mxu0 0.0
        %1061 = vmatprep.subr.mxu0 0.0
        %1062 = vmatpush1.msra.mxu0 0.0
        %1063 = vmatprep.subr.mxu0 0.0
        %1064 = vmatpush1.msra.mxu0 0.0
        %1065 = vmatprep.subr.mxu0 0.0
        %1066 = vmatpush1.msra.mxu0 0.0
        %1067 = vmatprep.subr.mxu0 0.0
        %1068 = vmatpush1.msra.mxu0 0.0
        %1069 = vmatprep.subr.mxu0 0.0
        %1070 = vmatpush1.msra.mxu0 0.0
        %1071 = vmatprep.subr.mxu0 0.0
        %1072 = vmatpush1.msra.mxu0 0.0
        %1073 = vmatprep.subr.mxu0 0.0
        %1074 = vmatpush1.msra.mxu0 0.0
        %1075 = vmatprep.subr.mxu0 0.0
        %1076 = vmatpush1.msra.mxu0 0.0
        %1077 = vmatprep.subr.mxu0 0.0
        %1078 = vmatpush1.msra.mxu0 0.0
        %1079 = vmatprep.subr.mxu0 0.0
        %1080 = vmatpush1.msra.mxu0 0.0
        %1081 = vmatprep.subr.mxu0 0.0
        %1082 = vmatpush1.msra.mxu0 0.0
        %1083 = vmatprep.subr.mxu0 0.0
        %1084 = vmatpush1.msra.mxu0 0.0
        %1085 = vmatprep.subr.mxu0 0.0
        %1086 = vmatpush1.msra.mxu0 0.0
        %1087 = vmatprep.subr.mxu0 0.0
        %1088 = vmatpush1.msra.mxu0 0.0
        %1089 = vmatprep.subr.mxu0 0.0
        %1090 = vmatpush1.msra.mxu0 0.0
        %1091 = vmatprep.subr.mxu0 0.0
        %1092 = vmatpush1.msra.mxu0 0.0
        %1093 = vmatprep.subr.mxu0 0.0
        %1094 = vmatpush1.msra.mxu0 0.0
        %1095 = vmatprep.mubr.f32.mxu0 0.0
        %1096 = vmatmul.mubr.f32.gmra.mrb[0].mxu0 %v933
        %v1097 = vpop.f32.mrb[0].mxu0
        %v1098 = vadd.f32 0.0, %v1097
        %v1099 = vpop.f32.mrb[0].mxu0
        %1100 = vmatprep.mubr.f32.mxu0 0.0
        %1101 = vmatmul.mubr.f32.gmra.mrb[0].mxu0 %v936
        %v1102 = vpop.f32.mrb[0].mxu0
        %v1103 = vadd.f32 0.0, %v1102
        %v1104 = vpop.f32.mrb[0].mxu0
        %1105 = vmatprep.mubr.f32.mxu0 0.0
        %1106 = vmatmul.mubr.f32.gmra.mrb[0].mxu0 %v939
        %v1107 = vpop.f32.mrb[0].mxu0
        %v1108 = vadd.f32 0.0, %v1107
        %v1109 = vpop.f32.mrb[0].mxu0
        %1110 = vmatprep.mubr.f32.mxu0 0.0
        %1111 = vmatmul.mubr.f32.gmra.mrb[0].mxu0 %v942
        %v1112 = vpop.f32.mrb[0].mxu0
        %v1113 = vadd.f32 0.0, %v1112
        %v1114 = vpop.f32.mrb[0].mxu0
        %1115 = vmatprep.mubr.f32.mxu0 0.0
        %1116 = vmatmul.mubr.f32.gmra.mrb[0].mxu0 %v945
        %v1117 = vpop.f32.mrb[0].mxu0
        %v1118 = vadd.f32 0.0, %v1117
        %v1119 = vpop.f32.mrb[0].mxu0
        %1120 = vmatprep.mubr.f32.mxu0 0.0
        %1121 = vmatmul.mubr.f32.gmra.mrb[0].mxu0 %v948
        %v1122 = vpop.f32.mrb[0].mxu0
        %v1123 = vadd.f32 0.0, %v1122
        %v1124 = vpop.f32.mrb[0].mxu0
        %1125 = vmatprep.mubr.f32.mxu0 0.0
        %1126 = vmatmul.mubr.f32.gmra.mrb[0].mxu0 %v951
        %v1127 = vpop.f32.mrb[0].mxu0
        %v1128 = vadd.f32 0.0, %v1127
        %v1129 = vpop.f32.mrb[0].mxu0
        %1130 = vmatprep.mubr.f32.mxu0 0.0
        %1131 = vmatmul.mubr.f32.gmra.mrb[0].mxu0 %v954
        %v1132 = vpop.f32.mrb[0].mxu0
        %v1133 = vadd.f32 0.0, %v1132
        %v1134 = vpop.f32.mrb[0].mxu0
        %1135 = vmatprep.mubr.f32.mxu0 0.0
        %1136 = vmatmul.mubr.f32.gmra.mrb[0].mxu0 %v957
        %v1137 = vpop.f32.mrb[0].mxu0
        %v1138 = vadd.f32 0.0, %v1137
        %v1139 = vpop.f32.mrb[0].mxu0
        %1140 = vmatprep.mubr.f32.mxu0 0.0
        %1141 = vmatmul.mubr.f32.gmra.mrb[0].mxu0 %v960
        %v1142 = vpop.f32.mrb[0].mxu0
        %v1143 = vadd.f32 0.0, %v1142
        %v1144 = vpop.f32.mrb[0].mxu0
        %1145 = vmatprep.mubr.f32.mxu0 0.0
        %1146 = vmatmul.mubr.f32.gmra.mrb[0].mxu0 %v963
        %v1147 = vpop.f32.mrb[0].mxu0
        %v1148 = vadd.f32 0.0, %v1147
        %v1149 = vpop.f32.mrb[0].mxu0
        %1150 = vmatprep.mubr.f32.mxu0 0.0
        %1151 = vmatmul.mubr.f32.gmra.mrb[0].mxu0 %v966
        %v1152 = vpop.f32.mrb[0].mxu0
        %v1153 = vadd.f32 0.0, %v1152
        %v1154 = vpop.f32.mrb[0].mxu0
        %1155 = vmatprep.mubr.f32.mxu0 0.0
        %1156 = vmatmul.mubr.f32.gmra.mrb[0].mxu0 %v969
        %v1157 = vpop.f32.mrb[0].mxu0
        %v1158 = vadd.f32 0.0, %v1157
        %v1159 = vpop.f32.mrb[0].mxu0
        %1160 = vmatprep.mubr.f32.mxu0 0.0
        %1161 = vmatmul.mubr.f32.gmra.mrb[0].mxu0 %v972
        %v1162 = vpop.f32.mrb[0].mxu0
        %v1163 = vadd.f32 0.0, %v1162
        %v1164 = vpop.f32.mrb[0].mxu0
        %1165 = vmatprep.mubr.f32.mxu0 0.0
        %1166 = vmatmul.mubr.f32.gmra.mrb[0].mxu0 %v975
        %v1167 = vpop.f32.mrb[0].mxu0
        %v1168 = vadd.f32 0.0, %v1167
        %v1169 = vpop.f32.mrb[0].mxu0
        %1170 = vmatprep.mubr.f32.mxu0 0.0
        %1171 = vmatmul.mubr.f32.gmra.mrb[0].mxu0 %v978
        %v1172 = vpop.f32.mrb[0].mxu0
        %v1173 = vadd.f32 0.0, %v1172
        %v1174 = vpop.f32.mrb[0].mxu0
        %1175 = vmatprep.mubr.f32.mxu0 0.0
        %1176 = vmatmul.mubr.f32.gmra.mrb[0].mxu0 %v981
        %v1177 = vpop.f32.mrb[0].mxu0
        %v1178 = vadd.f32 0.0, %v1177
        %v1179 = vpop.f32.mrb[0].mxu0
        %1180 = vmatprep.mubr.f32.mxu0 0.0
        %1181 = vmatmul.mubr.f32.gmra.mrb[0].mxu0 %v984
        %v1182 = vpop.f32.mrb[0].mxu0
        %v1183 = vadd.f32 0.0, %v1182
        %v1184 = vpop.f32.mrb[0].mxu0
        %1185 = vmatprep.mubr.f32.mxu0 0.0
        %1186 = vmatmul.mubr.f32.gmra.mrb[0].mxu0 %v987
        %v1187 = vpop.f32.mrb[0].mxu0
        %v1188 = vadd.f32 0.0, %v1187
        %v1189 = vpop.f32.mrb[0].mxu0
        %1190 = vmatprep.mubr.f32.mxu0 0.0
        %1191 = vmatmul.mubr.f32.gmra.mrb[0].mxu0 %v990
        %v1192 = vpop.f32.mrb[0].mxu0
        %v1193 = vadd.f32 0.0, %v1192
        %v1194 = vpop.f32.mrb[0].mxu0
        %1195 = vmatprep.mubr.f32.mxu0 0.0
        %1196 = vmatmul.mubr.f32.gmra.mrb[0].mxu0 %v993
        %v1197 = vpop.f32.mrb[0].mxu0
        %v1198 = vadd.f32 0.0, %v1197
        %v1199 = vpop.f32.mrb[0].mxu0
        %1200 = vmatprep.mubr.f32.mxu0 0.0
        %1201 = vmatmul.mubr.f32.gmra.mrb[0].mxu0 %v996
        %v1202 = vpop.f32.mrb[0].mxu0
        %v1203 = vadd.f32 0.0, %v1202
        %v1204 = vpop.f32.mrb[0].mxu0
        %1205 = vmatprep.mubr.f32.mxu0 0.0
        %1206 = vmatmul.mubr.f32.gmra.mrb[0].mxu0 %v999
        %v1207 = vpop.f32.mrb[0].mxu0
        %v1208 = vadd.f32 0.0, %v1207
        %v1209 = vpop.f32.mrb[0].mxu0
        %1210 = vmatprep.mubr.f32.mxu0 0.0
        %1211 = vmatmul.mubr.f32.gmra.mrb[0].mxu0 %v1002
        %v1212 = vpop.f32.mrb[0].mxu0
        %v1213 = vadd.f32 0.0, %v1212
        %v1214 = vpop.f32.mrb[0].mxu0
        %1215 = vmatprep.mubr.f32.mxu0 0.0
        %1216 = vmatmul.mubr.f32.gmra.mrb[0].mxu0 %v1005
        %v1217 = vpop.f32.mrb[0].mxu0
        %v1218 = vadd.f32 0.0, %v1217
        %v1219 = vpop.f32.mrb[0].mxu0
        %1220 = vmatprep.mubr.f32.mxu0 0.0
        %1221 = vmatmul.mubr.f32.gmra.mrb[0].mxu0 %v1008
        %v1222 = vpop.f32.mrb[0].mxu0
        %v1223 = vadd.f32 0.0, %v1222
        %v1224 = vpop.f32.mrb[0].mxu0
        %1225 = vmatprep.mubr.f32.mxu0 0.0
        %1226 = vmatmul.mubr.f32.gmra.mrb[0].mxu0 %v1011
        %v1227 = vpop.f32.mrb[0].mxu0
        %v1228 = vadd.f32 0.0, %v1227
        %v1229 = vpop.f32.mrb[0].mxu0
        %1230 = vmatprep.mubr.f32.mxu0 0.0
        %1231 = vmatmul.mubr.f32.gmra.mrb[0].mxu0 %v1014
        %v1232 = vpop.f32.mrb[0].mxu0
        %v1233 = vadd.f32 0.0, %v1232
        %v1234 = vpop.f32.mrb[0].mxu0
        %1235 = vmatprep.mubr.f32.mxu0 0.0
        %1236 = vmatmul.mubr.f32.gmra.mrb[0].mxu0 %v1017
        %v1237 = vpop.f32.mrb[0].mxu0
        %v1238 = vadd.f32 0.0, %v1237
        %v1239 = vpop.f32.mrb[0].mxu0
        %1240 = vmatprep.mubr.f32.mxu0 0.0
        %1241 = vmatmul.mubr.f32.gmra.mrb[0].mxu0 %v1020
        %v1242 = vpop.f32.mrb[0].mxu0
        %v1243 = vadd.f32 0.0, %v1242
        %v1244 = vpop.f32.mrb[0].mxu0
        %1245 = vmatprep.mubr.f32.mxu0 0.0
        %1246 = vmatmul.mubr.f32.gmra.mrb[0].mxu0 %v1023
        %v1247 = vpop.f32.mrb[0].mxu0
        %v1248 = vadd.f32 0.0, %v1247
        %v1249 = vpop.f32.mrb[0].mxu0
        %1250 = vmatprep.mubr.f32.mxu0 0.0
        %1251 = vmatmul.mubr.f32.gmra.mrb[0].mxu0 %v1026
        %v1252 = vpop.f32.mrb[0].mxu0
        %v1253 = vadd.f32 0.0, %v1252
        %v1254 = vpop.f32.mrb[0].mxu0
        %1255 = vdwg.mxu0
        %v1256 = vadd.f32 %v738, %v1098
        %v1257 = vadd.f32 %v743, %v1103
        %v1258 = vadd.f32 %v748, %v1108
        %v1259 = vadd.f32 %v753, %v1113
        %v1260 = vadd.f32 %v758, %v1118
        %v1261 = vadd.f32 %v763, %v1123
        %v1262 = vadd.f32 %v768, %v1128
        %v1263 = vadd.f32 %v773, %v1133
        %v1264 = vadd.f32 %v778, %v1138
        %v1265 = vadd.f32 %v783, %v1143
        %v1266 = vadd.f32 %v788, %v1148
        %v1267 = vadd.f32 %v793, %v1153
        %v1268 = vadd.f32 %v798, %v1158
        %v1269 = vadd.f32 %v803, %v1163
        %v1270 = vadd.f32 %v808, %v1168
        %v1271 = vadd.f32 %v813, %v1173
        %v1272 = vadd.f32 %v818, %v1178
        %v1273 = vadd.f32 %v823, %v1183
        %v1274 = vadd.f32 %v828, %v1188
        %v1275 = vadd.f32 %v833, %v1193
        %v1276 = vadd.f32 %v838, %v1198
        %v1277 = vadd.f32 %v843, %v1203
        %v1278 = vadd.f32 %v848, %v1208
        %v1279 = vadd.f32 %v853, %v1213
        %v1280 = vadd.f32 %v858, %v1218
        %v1281 = vadd.f32 %v863, %v1223
        %v1282 = vadd.f32 %v868, %v1228
        %v1283 = vadd.f32 %v873, %v1233
        %v1284 = vadd.f32 %v878, %v1238
        %v1285 = vadd.f32 %v883, %v1243
        %v1286 = vadd.f32 %v888, %v1248
        %v1287 = vadd.f32 %v893, %v1253
        %s1288 = scalar_lea.vmem %s172, 24
        %v1289 = vld [vmem:[%s1288] sm:$0xff]
        %v1290 = vld [vmem:[%s1288 + $0x8] sm:$0xff]
        %v1291 = vld [vmem:[%s1288 + $0x18] sm:$0xff]
        %v1292 = vld [vmem:[%s1288 + $0x20] sm:$0xff]
        %v1293 = vld [vmem:[%s1288 + $0x30] sm:$0xff]
        %v1294 = vld [vmem:[%s1288 + $0x38] sm:$0xff]
        %v1295 = vld [vmem:[%s1288 + $0x48] sm:$0xff]
        %v1296 = vld [vmem:[%s1288 + $0x50] sm:$0xff]
        %v1297 = vld [vmem:[%s1288 + $0x60] sm:$0xff]
        %v1298 = vld [vmem:[%s1288 + $0x68] sm:$0xff]
        %v1299 = vld [vmem:[%s1288 + $0x78] sm:$0xff]
        %v1300 = vld [vmem:[%s1288 + $0x80] sm:$0xff]
        %v1301 = vld [vmem:[%s1288 + $0x90] sm:$0xff]
        %v1302 = vld [vmem:[%s1288 + $0x98] sm:$0xff]
        %v1303 = vld [vmem:[%s1288 + $0xa8] sm:$0xff]
        %v1304 = vld [vmem:[%s1288 + $0xb0] sm:$0xff]
        %v1305 = vld [vmem:[%s1288 + $0xc0] sm:$0xff]
        %v1306 = vld [vmem:[%s1288 + $0xc8] sm:$0xff]
        %v1307 = vld [vmem:[%s1288 + $0xd8] sm:$0xff]
        %v1308 = vld [vmem:[%s1288 + $0xe0] sm:$0xff]
        %v1309 = vld [vmem:[%s1288 + $0xf0] sm:$0xff]
        %v1310 = vld [vmem:[%s1288 + $0xf8] sm:$0xff]
        %v1311 = vld [vmem:[%s1288 + $0x108] sm:$0xff]
        %v1312 = vld [vmem:[%s1288 + $0x110] sm:$0xff]
        %v1313 = vld [vmem:[%s1288 + $0x120] sm:$0xff]
        %v1314 = vld [vmem:[%s1288 + $0x128] sm:$0xff]
        %v1315 = vld [vmem:[%s1288 + $0x138] sm:$0xff]
        %v1316 = vld [vmem:[%s1288 + $0x140] sm:$0xff]
        %v1317 = vld [vmem:[%s1288 + $0x150] sm:$0xff]
        %v1318 = vld [vmem:[%s1288 + $0x158] sm:$0xff]
        %v1319 = vld [vmem:[%s1288 + $0x168] sm:$0xff]
        %v1320 = vld [vmem:[%s1288 + $0x170] sm:$0xff]
        %s1321 = scalar_lea.vmem %s1, 72
        %v1322 = vld [vmem:[%s1321] sm:$0xff]
        %v1323 = vld [vmem:[%s1321 + $0x8] sm:$0xff]
        %v1324 = vld [vmem:[%s1321 + $0x10] sm:$0x3]
        %v1326 = vsel %vm246, %v1289, 0
        %v1329 = vsel %vm246, %v1290, 0
        %v1332 = vsel %vm246, %v1291, 0
        %v1335 = vsel %vm246, %v1292, 0
        %v1338 = vsel %vm246, %v1293, 0
        %v1341 = vsel %vm246, %v1294, 0
        %v1344 = vsel %vm246, %v1295, 0
        %v1347 = vsel %vm246, %v1296, 0
        %v1350 = vsel %vm246, %v1297, 0
        %v1353 = vsel %vm246, %v1298, 0
        %v1356 = vsel %vm246, %v1299, 0
        %v1359 = vsel %vm246, %v1300, 0
        %v1362 = vsel %vm246, %v1301, 0
        %v1365 = vsel %vm246, %v1302, 0
        %v1368 = vsel %vm246, %v1303, 0
        %v1371 = vsel %vm246, %v1304, 0
        %v1374 = vsel %vm246, %v1305, 0
        %v1377 = vsel %vm246, %v1306, 0
        %v1380 = vsel %vm246, %v1307, 0
        %v1383 = vsel %vm246, %v1308, 0
        %v1386 = vsel %vm246, %v1309, 0
        %v1389 = vsel %vm246, %v1310, 0
        %v1392 = vsel %vm246, %v1311, 0
        %v1395 = vsel %vm246, %v1312, 0
        %v1398 = vsel %vm246, %v1313, 0
        %v1401 = vsel %vm246, %v1314, 0
        %v1404 = vsel %vm246, %v1315, 0
        %v1407 = vsel %vm246, %v1316, 0
        %v1410 = vsel %vm246, %v1317, 0
        %v1413 = vsel %vm246, %v1318, 0
        %v1416 = vsel %vm246, %v1319, 0
        %v1419 = vsel %vm246, %v1320, 0
        %v1422 = vsel %vm343, %v1324, 0
        %1424 = vmatprep.subr.mxu0 0.0
        %1425 = vmatpush1.msra.mxu0 %v1322
        %1426 = vmatprep.subr.mxu0 0.0
        %1427 = vmatpush1.msra.mxu0 %v1323
        %1428 = vmatprep.subr.mxu0 0.0
        %1429 = vmatpush1.msra.mxu0 %v1422
        %1430 = vmatprep.subr.mxu0 0.0
        %1431 = vmatpush1.msra.mxu0 0.0
        %1432 = vmatprep.subr.mxu0 0.0
        %1433 = vmatpush1.msra.mxu0 0.0
        %1434 = vmatprep.subr.mxu0 0.0
        %1435 = vmatpush1.msra.mxu0 0.0
        %1436 = vmatprep.subr.mxu0 0.0
        %1437 = vmatpush1.msra.mxu0 0.0
        %1438 = vmatprep.subr.mxu0 0.0
        %1439 = vmatpush1.msra.mxu0 0.0
        %1440 = vmatprep.subr.mxu0 0.0
        %1441 = vmatpush1.msra.mxu0 0.0
        %1442 = vmatprep.subr.mxu0 0.0
        %1443 = vmatpush1.msra.mxu0 0.0
        %1444 = vmatprep.subr.mxu0 0.0
        %1445 = vmatpush1.msra.mxu0 0.0
        %1446 = vmatprep.subr.mxu0 0.0
        %1447 = vmatpush1.msra.mxu0 0.0
        %1448 = vmatprep.subr.mxu0 0.0
        %1449 = vmatpush1.msra.mxu0 0.0
        %1450 = vmatprep.subr.mxu0 0.0
        %1451 = vmatpush1.msra.mxu0 0.0
        %1452 = vmatprep.subr.mxu0 0.0
        %1453 = vmatpush1.msra.mxu0 0.0
        %1454 = vmatprep.subr.mxu0 0.0
        %1455 = vmatpush1.msra.mxu0 0.0
        %1456 = vmatprep.subr.mxu0 0.0
        %1457 = vmatpush1.msra.mxu0 0.0
        %1458 = vmatprep.subr.mxu0 0.0
        %1459 = vmatpush1.msra.mxu0 0.0
        %1460 = vmatprep.subr.mxu0 0.0
        %1461 = vmatpush1.msra.mxu0 0.0
        %1462 = vmatprep.subr.mxu0 0.0
        %1463 = vmatpush1.msra.mxu0 0.0
        %1464 = vmatprep.subr.mxu0 0.0
        %1465 = vmatpush1.msra.mxu0 0.0
        %1466 = vmatprep.subr.mxu0 0.0
        %1467 = vmatpush1.msra.mxu0 0.0
        %1468 = vmatprep.subr.mxu0 0.0
        %1469 = vmatpush1.msra.mxu0 0.0
        %1470 = vmatprep.subr.mxu0 0.0
        %1471 = vmatpush1.msra.mxu0 0.0
        %1472 = vmatprep.subr.mxu0 0.0
        %1473 = vmatpush1.msra.mxu0 0.0
        %1474 = vmatprep.subr.mxu0 0.0
        %1475 = vmatpush1.msra.mxu0 0.0
        %1476 = vmatprep.subr.mxu0 0.0
        %1477 = vmatpush1.msra.mxu0 0.0
        %1478 = vmatprep.subr.mxu0 0.0
        %1479 = vmatpush1.msra.mxu0 0.0
        %1480 = vmatprep.subr.mxu0 0.0
        %1481 = vmatpush1.msra.mxu0 0.0
        %1482 = vmatprep.subr.mxu0 0.0
        %1483 = vmatpush1.msra.mxu0 0.0
        %1484 = vmatprep.subr.mxu0 0.0
        %1485 = vmatpush1.msra.mxu0 0.0
        %1486 = vmatprep.subr.mxu0 0.0
        %1487 = vmatpush1.msra.mxu0 0.0
        %1488 = vmatprep.mubr.f32.mxu0 0.0
        %1489 = vmatmul.mubr.f32.gmra.mrb[0].mxu0 %v1326
        %v1490 = vpop.f32.mrb[0].mxu0
        %v1491 = vadd.f32 0.0, %v1490
        %v1492 = vpop.f32.mrb[0].mxu0
        %1493 = vmatprep.mubr.f32.mxu0 0.0
        %1494 = vmatmul.mubr.f32.gmra.mrb[0].mxu0 %v1329
        %v1495 = vpop.f32.mrb[0].mxu0
        %v1496 = vadd.f32 0.0, %v1495
        %v1497 = vpop.f32.mrb[0].mxu0
        %1498 = vmatprep.mubr.f32.mxu0 0.0
        %1499 = vmatmul.mubr.f32.gmra.mrb[0].mxu0 %v1332
        %v1500 = vpop.f32.mrb[0].mxu0
        %v1501 = vadd.f32 0.0, %v1500
        %v1502 = vpop.f32.mrb[0].mxu0
        %1503 = vmatprep.mubr.f32.mxu0 0.0
        %1504 = vmatmul.mubr.f32.gmra.mrb[0].mxu0 %v1335
        %v1505 = vpop.f32.mrb[0].mxu0
        %v1506 = vadd.f32 0.0, %v1505
        %v1507 = vpop.f32.mrb[0].mxu0
        %1508 = vmatprep.mubr.f32.mxu0 0.0
        %1509 = vmatmul.mubr.f32.gmra.mrb[0].mxu0 %v1338
        %v1510 = vpop.f32.mrb[0].mxu0
        %v1511 = vadd.f32 0.0, %v1510
        %v1512 = vpop.f32.mrb[0].mxu0
        %1513 = vmatprep.mubr.f32.mxu0 0.0
        %1514 = vmatmul.mubr.f32.gmra.mrb[0].mxu0 %v1341
        %v1515 = vpop.f32.mrb[0].mxu0
        %v1516 = vadd.f32 0.0, %v1515
        %v1517 = vpop.f32.mrb[0].mxu0
        %1518 = vmatprep.mubr.f32.mxu0 0.0
        %1519 = vmatmul.mubr.f32.gmra.mrb[0].mxu0 %v1344
        %v1520 = vpop.f32.mrb[0].mxu0
        %v1521 = vadd.f32 0.0, %v1520
        %v1522 = vpop.f32.mrb[0].mxu0
        %1523 = vmatprep.mubr.f32.mxu0 0.0
        %1524 = vmatmul.mubr.f32.gmra.mrb[0].mxu0 %v1347
        %v1525 = vpop.f32.mrb[0].mxu0
        %v1526 = vadd.f32 0.0, %v1525
        %v1527 = vpop.f32.mrb[0].mxu0
        %1528 = vmatprep.mubr.f32.mxu0 0.0
        %1529 = vmatmul.mubr.f32.gmra.mrb[0].mxu0 %v1350
        %v1530 = vpop.f32.mrb[0].mxu0
        %v1531 = vadd.f32 0.0, %v1530
        %v1532 = vpop.f32.mrb[0].mxu0
        %1533 = vmatprep.mubr.f32.mxu0 0.0
        %1534 = vmatmul.mubr.f32.gmra.mrb[0].mxu0 %v1353
        %v1535 = vpop.f32.mrb[0].mxu0
        %v1536 = vadd.f32 0.0, %v1535
        %v1537 = vpop.f32.mrb[0].mxu0
        %1538 = vmatprep.mubr.f32.mxu0 0.0
        %1539 = vmatmul.mubr.f32.gmra.mrb[0].mxu0 %v1356
        %v1540 = vpop.f32.mrb[0].mxu0
        %v1541 = vadd.f32 0.0, %v1540
        %v1542 = vpop.f32.mrb[0].mxu0
        %1543 = vmatprep.mubr.f32.mxu0 0.0
        %1544 = vmatmul.mubr.f32.gmra.mrb[0].mxu0 %v1359
        %v1545 = vpop.f32.mrb[0].mxu0
        %v1546 = vadd.f32 0.0, %v1545
        %v1547 = vpop.f32.mrb[0].mxu0
        %1548 = vmatprep.mubr.f32.mxu0 0.0
        %1549 = vmatmul.mubr.f32.gmra.mrb[0].mxu0 %v1362
        %v1550 = vpop.f32.mrb[0].mxu0
        %v1551 = vadd.f32 0.0, %v1550
        %v1552 = vpop.f32.mrb[0].mxu0
        %1553 = vmatprep.mubr.f32.mxu0 0.0
        %1554 = vmatmul.mubr.f32.gmra.mrb[0].mxu0 %v1365
        %v1555 = vpop.f32.mrb[0].mxu0
        %v1556 = vadd.f32 0.0, %v1555
        %v1557 = vpop.f32.mrb[0].mxu0
        %1558 = vmatprep.mubr.f32.mxu0 0.0
        %1559 = vmatmul.mubr.f32.gmra.mrb[0].mxu0 %v1368
        %v1560 = vpop.f32.mrb[0].mxu0
        %v1561 = vadd.f32 0.0, %v1560
        %v1562 = vpop.f32.mrb[0].mxu0
        %1563 = vmatprep.mubr.f32.mxu0 0.0
        %1564 = vmatmul.mubr.f32.gmra.mrb[0].mxu0 %v1371
        %v1565 = vpop.f32.mrb[0].mxu0
        %v1566 = vadd.f32 0.0, %v1565
        %v1567 = vpop.f32.mrb[0].mxu0
        %1568 = vmatprep.mubr.f32.mxu0 0.0
        %1569 = vmatmul.mubr.f32.gmra.mrb[0].mxu0 %v1374
        %v1570 = vpop.f32.mrb[0].mxu0
        %v1571 = vadd.f32 0.0, %v1570
        %v1572 = vpop.f32.mrb[0].mxu0
        %1573 = vmatprep.mubr.f32.mxu0 0.0
        %1574 = vmatmul.mubr.f32.gmra.mrb[0].mxu0 %v1377
        %v1575 = vpop.f32.mrb[0].mxu0
        %v1576 = vadd.f32 0.0, %v1575
        %v1577 = vpop.f32.mrb[0].mxu0
        %1578 = vmatprep.mubr.f32.mxu0 0.0
        %1579 = vmatmul.mubr.f32.gmra.mrb[0].mxu0 %v1380
        %v1580 = vpop.f32.mrb[0].mxu0
        %v1581 = vadd.f32 0.0, %v1580
        %v1582 = vpop.f32.mrb[0].mxu0
        %1583 = vmatprep.mubr.f32.mxu0 0.0
        %1584 = vmatmul.mubr.f32.gmra.mrb[0].mxu0 %v1383
        %v1585 = vpop.f32.mrb[0].mxu0
        %v1586 = vadd.f32 0.0, %v1585
        %v1587 = vpop.f32.mrb[0].mxu0
        %1588 = vmatprep.mubr.f32.mxu0 0.0
        %1589 = vmatmul.mubr.f32.gmra.mrb[0].mxu0 %v1386
        %v1590 = vpop.f32.mrb[0].mxu0
        %v1591 = vadd.f32 0.0, %v1590
        %v1592 = vpop.f32.mrb[0].mxu0
        %1593 = vmatprep.mubr.f32.mxu0 0.0
        %1594 = vmatmul.mubr.f32.gmra.mrb[0].mxu0 %v1389
        %v1595 = vpop.f32.mrb[0].mxu0
        %v1596 = vadd.f32 0.0, %v1595
        %v1597 = vpop.f32.mrb[0].mxu0
        %1598 = vmatprep.mubr.f32.mxu0 0.0
        %1599 = vmatmul.mubr.f32.gmra.mrb[0].mxu0 %v1392
        %v1600 = vpop.f32.mrb[0].mxu0
        %v1601 = vadd.f32 0.0, %v1600
        %v1602 = vpop.f32.mrb[0].mxu0
        %1603 = vmatprep.mubr.f32.mxu0 0.0
        %1604 = vmatmul.mubr.f32.gmra.mrb[0].mxu0 %v1395
        %v1605 = vpop.f32.mrb[0].mxu0
        %v1606 = vadd.f32 0.0, %v1605
        %v1607 = vpop.f32.mrb[0].mxu0
        %1608 = vmatprep.mubr.f32.mxu0 0.0
        %1609 = vmatmul.mubr.f32.gmra.mrb[0].mxu0 %v1398
        %v1610 = vpop.f32.mrb[0].mxu0
        %v1611 = vadd.f32 0.0, %v1610
        %v1612 = vpop.f32.mrb[0].mxu0
        %1613 = vmatprep.mubr.f32.mxu0 0.0
        %1614 = vmatmul.mubr.f32.gmra.mrb[0].mxu0 %v1401
        %v1615 = vpop.f32.mrb[0].mxu0
        %v1616 = vadd.f32 0.0, %v1615
        %v1617 = vpop.f32.mrb[0].mxu0
        %1618 = vmatprep.mubr.f32.mxu0 0.0
        %1619 = vmatmul.mubr.f32.gmra.mrb[0].mxu0 %v1404
        %v1620 = vpop.f32.mrb[0].mxu0
        %v1621 = vadd.f32 0.0, %v1620
        %v1622 = vpop.f32.mrb[0].mxu0
        %1623 = vmatprep.mubr.f32.mxu0 0.0
        %1624 = vmatmul.mubr.f32.gmra.mrb[0].mxu0 %v1407
        %v1625 = vpop.f32.mrb[0].mxu0
        %v1626 = vadd.f32 0.0, %v1625
        %v1627 = vpop.f32.mrb[0].mxu0
        %1628 = vmatprep.mubr.f32.mxu0 0.0
        %1629 = vmatmul.mubr.f32.gmra.mrb[0].mxu0 %v1410
        %v1630 = vpop.f32.mrb[0].mxu0
        %v1631 = vadd.f32 0.0, %v1630
        %v1632 = vpop.f32.mrb[0].mxu0
        %1633 = vmatprep.mubr.f32.mxu0 0.0
        %1634 = vmatmul.mubr.f32.gmra.mrb[0].mxu0 %v1413
        %v1635 = vpop.f32.mrb[0].mxu0
        %v1636 = vadd.f32 0.0, %v1635
        %v1637 = vpop.f32.mrb[0].mxu0
        %1638 = vmatprep.mubr.f32.mxu0 0.0
        %1639 = vmatmul.mubr.f32.gmra.mrb[0].mxu0 %v1416
        %v1640 = vpop.f32.mrb[0].mxu0
        %v1641 = vadd.f32 0.0, %v1640
        %v1642 = vpop.f32.mrb[0].mxu0
        %1643 = vmatprep.mubr.f32.mxu0 0.0
        %1644 = vmatmul.mubr.f32.gmra.mrb[0].mxu0 %v1419
        %v1645 = vpop.f32.mrb[0].mxu0
        %v1646 = vadd.f32 0.0, %v1645
        %v1647 = vpop.f32.mrb[0].mxu0
        %1648 = vdwg.mxu0
        %v1649 = vadd.f32 %v1256, %v1491
        %v1650 = vadd.f32 %v1257, %v1496
        %v1651 = vadd.f32 %v1258, %v1501
        %v1652 = vadd.f32 %v1259, %v1506
        %v1653 = vadd.f32 %v1260, %v1511
        %v1654 = vadd.f32 %v1261, %v1516
        %v1655 = vadd.f32 %v1262, %v1521
        %v1656 = vadd.f32 %v1263, %v1526
        %v1657 = vadd.f32 %v1264, %v1531
        %v1658 = vadd.f32 %v1265, %v1536
        %v1659 = vadd.f32 %v1266, %v1541
        %v1660 = vadd.f32 %v1267, %v1546
        %v1661 = vadd.f32 %v1268, %v1551
        %v1662 = vadd.f32 %v1269, %v1556
        %v1663 = vadd.f32 %v1270, %v1561
        %v1664 = vadd.f32 %v1271, %v1566
        %v1665 = vadd.f32 %v1272, %v1571
        %v1666 = vadd.f32 %v1273, %v1576
        %v1667 = vadd.f32 %v1274, %v1581
        %v1668 = vadd.f32 %v1275, %v1586
        %v1669 = vadd.f32 %v1276, %v1591
        %v1670 = vadd.f32 %v1277, %v1596
        %v1671 = vadd.f32 %v1278, %v1601
        %v1672 = vadd.f32 %v1279, %v1606
        %v1673 = vadd.f32 %v1280, %v1611
        %v1674 = vadd.f32 %v1281, %v1616
        %v1675 = vadd.f32 %v1282, %v1621
        %v1676 = vadd.f32 %v1283, %v1626
        %v1677 = vadd.f32 %v1284, %v1631
        %v1678 = vadd.f32 %v1285, %v1636
        %v1679 = vadd.f32 %v1286, %v1641
        %v1680 = vadd.f32 %v1287, %v1646
        %v1681 = vld [vmem:[%s1288 + $0x1] sm:$0xff]
        %v1682 = vld [vmem:[%s1288 + $0x9] sm:$0xff]
        %v1683 = vld [vmem:[%s1288 + $0x19] sm:$0xff]
        %v1684 = vld [vmem:[%s1288 + $0x21] sm:$0xff]
        %v1685 = vld [vmem:[%s1288 + $0x31] sm:$0xff]
        %v1686 = vld [vmem:[%s1288 + $0x39] sm:$0xff]
        %v1687 = vld [vmem:[%s1288 + $0x49] sm:$0xff]
        %v1688 = vld [vmem:[%s1288 + $0x51] sm:$0xff]
        %v1689 = vld [vmem:[%s1288 + $0x61] sm:$0xff]
        %v1690 = vld [vmem:[%s1288 + $0x69] sm:$0xff]
        %v1691 = vld [vmem:[%s1288 + $0x79] sm:$0xff]
        %v1692 = vld [vmem:[%s1288 + $0x81] sm:$0xff]
        %v1693 = vld [vmem:[%s1288 + $0x91] sm:$0xff]
        %v1694 = vld [vmem:[%s1288 + $0x99] sm:$0xff]
        %v1695 = vld [vmem:[%s1288 + $0xa9] sm:$0xff]
        %v1696 = vld [vmem:[%s1288 + $0xb1] sm:$0xff]
        %v1697 = vld [vmem:[%s1288 + $0xc1] sm:$0xff]
        %v1698 = vld [vmem:[%s1288 + $0xc9] sm:$0xff]
        %v1699 = vld [vmem:[%s1288 + $0xd9] sm:$0xff]
        %v1700 = vld [vmem:[%s1288 + $0xe1] sm:$0xff]
        %v1701 = vld [vmem:[%s1288 + $0xf1] sm:$0xff]
        %v1702 = vld [vmem:[%s1288 + $0xf9] sm:$0xff]
        %v1703 = vld [vmem:[%s1288 + $0x109] sm:$0xff]
        %v1704 = vld [vmem:[%s1288 + $0x111] sm:$0xff]
        %v1705 = vld [vmem:[%s1288 + $0x121] sm:$0xff]
        %v1706 = vld [vmem:[%s1288 + $0x129] sm:$0xff]
        %v1707 = vld [vmem:[%s1288 + $0x139] sm:$0xff]
        %v1708 = vld [vmem:[%s1288 + $0x141] sm:$0xff]
        %v1709 = vld [vmem:[%s1288 + $0x151] sm:$0xff]
        %v1710 = vld [vmem:[%s1288 + $0x159] sm:$0xff]
        %v1711 = vld [vmem:[%s1288 + $0x169] sm:$0xff]
        %v1712 = vld [vmem:[%s1288 + $0x171] sm:$0xff]
        %s1713 = scalar_lea.vmem %s1, 96
        %v1714 = vld [vmem:[%s1713] sm:$0xff]
        %v1715 = vld [vmem:[%s1713 + $0x8] sm:$0xff]
        %v1716 = vld [vmem:[%s1713 + $0x10] sm:$0x3]
        %v1718 = vsel %vm246, %v1681, 0
        %v1721 = vsel %vm246, %v1682, 0
        %v1724 = vsel %vm246, %v1683, 0
        %v1727 = vsel %vm246, %v1684, 0
        %v1730 = vsel %vm246, %v1685, 0
        %v1733 = vsel %vm246, %v1686, 0
        %v1736 = vsel %vm246, %v1687, 0
        %v1739 = vsel %vm246, %v1688, 0
        %v1742 = vsel %vm246, %v1689, 0
        %v1745 = vsel %vm246, %v1690, 0
        %v1748 = vsel %vm246, %v1691, 0
        %v1751 = vsel %vm246, %v1692, 0
        %v1754 = vsel %vm246, %v1693, 0
        %v1757 = vsel %vm246, %v1694, 0
        %v1760 = vsel %vm246, %v1695, 0
        %v1763 = vsel %vm246, %v1696, 0
        %v1766 = vsel %vm246, %v1697, 0
        %v1769 = vsel %vm246, %v1698, 0
        %v1772 = vsel %vm246, %v1699, 0
        %v1775 = vsel %vm246, %v1700, 0
        %v1778 = vsel %vm246, %v1701, 0
        %v1781 = vsel %vm246, %v1702, 0
        %v1784 = vsel %vm246, %v1703, 0
        %v1787 = vsel %vm246, %v1704, 0
        %v1790 = vsel %vm246, %v1705, 0
        %v1793 = vsel %vm246, %v1706, 0
        %v1796 = vsel %vm246, %v1707, 0
        %v1799 = vsel %vm246, %v1708, 0
        %v1802 = vsel %vm246, %v1709, 0
        %v1805 = vsel %vm246, %v1710, 0
        %v1808 = vsel %vm246, %v1711, 0
        %v1811 = vsel %vm246, %v1712, 0
        %v1814 = vsel %vm343, %v1716, 0
        %1816 = vmatprep.subr.mxu0 0.0
        %1817 = vmatpush1.msra.mxu0 %v1714
        %1818 = vmatprep.subr.mxu0 0.0
        %1819 = vmatpush1.msra.mxu0 %v1715
        %1820 = vmatprep.subr.mxu0 0.0
        %1821 = vmatpush1.msra.mxu0 %v1814
        %1822 = vmatprep.subr.mxu0 0.0
        %1823 = vmatpush1.msra.mxu0 0.0
        %1824 = vmatprep.subr.mxu0 0.0
        %1825 = vmatpush1.msra.mxu0 0.0
        %1826 = vmatprep.subr.mxu0 0.0
        %1827 = vmatpush1.msra.mxu0 0.0
        %1828 = vmatprep.subr.mxu0 0.0
        %1829 = vmatpush1.msra.mxu0 0.0
        %1830 = vmatprep.subr.mxu0 0.0
        %1831 = vmatpush1.msra.mxu0 0.0
        %1832 = vmatprep.subr.mxu0 0.0
        %1833 = vmatpush1.msra.mxu0 0.0
        %1834 = vmatprep.subr.mxu0 0.0
        %1835 = vmatpush1.msra.mxu0 0.0
        %1836 = vmatprep.subr.mxu0 0.0
        %1837 = vmatpush1.msra.mxu0 0.0
        %1838 = vmatprep.subr.mxu0 0.0
        %1839 = vmatpush1.msra.mxu0 0.0
        %1840 = vmatprep.subr.mxu0 0.0
        %1841 = vmatpush1.msra.mxu0 0.0
        %1842 = vmatprep.subr.mxu0 0.0
        %1843 = vmatpush1.msra.mxu0 0.0
        %1844 = vmatprep.subr.mxu0 0.0
        %1845 = vmatpush1.msra.mxu0 0.0
        %1846 = vmatprep.subr.mxu0 0.0
        %1847 = vmatpush1.msra.mxu0 0.0
        %1848 = vmatprep.subr.mxu0 0.0
        %1849 = vmatpush1.msra.mxu0 0.0
        %1850 = vmatprep.subr.mxu0 0.0
        %1851 = vmatpush1.msra.mxu0 0.0
        %1852 = vmatprep.subr.mxu0 0.0
        %1853 = vmatpush1.msra.mxu0 0.0
        %1854 = vmatprep.subr.mxu0 0.0
        %1855 = vmatpush1.msra.mxu0 0.0
        %1856 = vmatprep.subr.mxu0 0.0
        %1857 = vmatpush1.msra.mxu0 0.0
        %1858 = vmatprep.subr.mxu0 0.0
        %1859 = vmatpush1.msra.mxu0 0.0
        %1860 = vmatprep.subr.mxu0 0.0
        %1861 = vmatpush1.msra.mxu0 0.0
        %1862 = vmatprep.subr.mxu0 0.0
        %1863 = vmatpush1.msra.mxu0 0.0
        %1864 = vmatprep.subr.mxu0 0.0
        %1865 = vmatpush1.msra.mxu0 0.0
        %1866 = vmatprep.subr.mxu0 0.0
        %1867 = vmatpush1.msra.mxu0 0.0
        %1868 = vmatprep.subr.mxu0 0.0
        %1869 = vmatpush1.msra.mxu0 0.0
        %1870 = vmatprep.subr.mxu0 0.0
        %1871 = vmatpush1.msra.mxu0 0.0
        %1872 = vmatprep.subr.mxu0 0.0
        %1873 = vmatpush1.msra.mxu0 0.0
        %1874 = vmatprep.subr.mxu0 0.0
        %1875 = vmatpush1.msra.mxu0 0.0
        %1876 = vmatprep.subr.mxu0 0.0
        %1877 = vmatpush1.msra.mxu0 0.0
        %1878 = vmatprep.subr.mxu0 0.0
        %1879 = vmatpush1.msra.mxu0 0.0
        %1880 = vmatprep.mubr.f32.mxu0 0.0
        %1881 = vmatmul.mubr.f32.gmra.mrb[0].mxu0 %v1718
        %v1882 = vpop.f32.mrb[0].mxu0
        %v1883 = vadd.f32 0.0, %v1882
        %v1884 = vpop.f32.mrb[0].mxu0
        %1885 = vmatprep.mubr.f32.mxu0 0.0
        %1886 = vmatmul.mubr.f32.gmra.mrb[0].mxu0 %v1721
        %v1887 = vpop.f32.mrb[0].mxu0
        %v1888 = vadd.f32 0.0, %v1887
        %v1889 = vpop.f32.mrb[0].mxu0
        %1890 = vmatprep.mubr.f32.mxu0 0.0
        %1891 = vmatmul.mubr.f32.gmra.mrb[0].mxu0 %v1724
        %v1892 = vpop.f32.mrb[0].mxu0
        %v1893 = vadd.f32 0.0, %v1892
        %v1894 = vpop.f32.mrb[0].mxu0
        %1895 = vmatprep.mubr.f32.mxu0 0.0
        %1896 = vmatmul.mubr.f32.gmra.mrb[0].mxu0 %v1727
        %v1897 = vpop.f32.mrb[0].mxu0
        %v1898 = vadd.f32 0.0, %v1897
        %v1899 = vpop.f32.mrb[0].mxu0
        %1900 = vmatprep.mubr.f32.mxu0 0.0
        %1901 = vmatmul.mubr.f32.gmra.mrb[0].mxu0 %v1730
        %v1902 = vpop.f32.mrb[0].mxu0
        %v1903 = vadd.f32 0.0, %v1902
        %v1904 = vpop.f32.mrb[0].mxu0
        %1905 = vmatprep.mubr.f32.mxu0 0.0
        %1906 = vmatmul.mubr.f32.gmra.mrb[0].mxu0 %v1733
        %v1907 = vpop.f32.mrb[0].mxu0
        %v1908 = vadd.f32 0.0, %v1907
        %v1909 = vpop.f32.mrb[0].mxu0
        %1910 = vmatprep.mubr.f32.mxu0 0.0
        %1911 = vmatmul.mubr.f32.gmra.mrb[0].mxu0 %v1736
        %v1912 = vpop.f32.mrb[0].mxu0
        %v1913 = vadd.f32 0.0, %v1912
        %v1914 = vpop.f32.mrb[0].mxu0
        %1915 = vmatprep.mubr.f32.mxu0 0.0
        %1916 = vmatmul.mubr.f32.gmra.mrb[0].mxu0 %v1739
        %v1917 = vpop.f32.mrb[0].mxu0
        %v1918 = vadd.f32 0.0, %v1917
        %v1919 = vpop.f32.mrb[0].mxu0
        %1920 = vmatprep.mubr.f32.mxu0 0.0
        %1921 = vmatmul.mubr.f32.gmra.mrb[0].mxu0 %v1742
        %v1922 = vpop.f32.mrb[0].mxu0
        %v1923 = vadd.f32 0.0, %v1922
        %v1924 = vpop.f32.mrb[0].mxu0
        %1925 = vmatprep.mubr.f32.mxu0 0.0
        %1926 = vmatmul.mubr.f32.gmra.mrb[0].mxu0 %v1745
        %v1927 = vpop.f32.mrb[0].mxu0
        %v1928 = vadd.f32 0.0, %v1927
        %v1929 = vpop.f32.mrb[0].mxu0
        %1930 = vmatprep.mubr.f32.mxu0 0.0
        %1931 = vmatmul.mubr.f32.gmra.mrb[0].mxu0 %v1748
        %v1932 = vpop.f32.mrb[0].mxu0
        %v1933 = vadd.f32 0.0, %v1932
        %v1934 = vpop.f32.mrb[0].mxu0
        %1935 = vmatprep.mubr.f32.mxu0 0.0
        %1936 = vmatmul.mubr.f32.gmra.mrb[0].mxu0 %v1751
        %v1937 = vpop.f32.mrb[0].mxu0
        %v1938 = vadd.f32 0.0, %v1937
        %v1939 = vpop.f32.mrb[0].mxu0
        %1940 = vmatprep.mubr.f32.mxu0 0.0
        %1941 = vmatmul.mubr.f32.gmra.mrb[0].mxu0 %v1754
        %v1942 = vpop.f32.mrb[0].mxu0
        %v1943 = vadd.f32 0.0, %v1942
        %v1944 = vpop.f32.mrb[0].mxu0
        %1945 = vmatprep.mubr.f32.mxu0 0.0
        %1946 = vmatmul.mubr.f32.gmra.mrb[0].mxu0 %v1757
        %v1947 = vpop.f32.mrb[0].mxu0
        %v1948 = vadd.f32 0.0, %v1947
        %v1949 = vpop.f32.mrb[0].mxu0
        %1950 = vmatprep.mubr.f32.mxu0 0.0
        %1951 = vmatmul.mubr.f32.gmra.mrb[0].mxu0 %v1760
        %v1952 = vpop.f32.mrb[0].mxu0
        %v1953 = vadd.f32 0.0, %v1952
        %v1954 = vpop.f32.mrb[0].mxu0
        %1955 = vmatprep.mubr.f32.mxu0 0.0
        %1956 = vmatmul.mubr.f32.gmra.mrb[0].mxu0 %v1763
        %v1957 = vpop.f32.mrb[0].mxu0
        %v1958 = vadd.f32 0.0, %v1957
        %v1959 = vpop.f32.mrb[0].mxu0
        %1960 = vmatprep.mubr.f32.mxu0 0.0
        %1961 = vmatmul.mubr.f32.gmra.mrb[0].mxu0 %v1766
        %v1962 = vpop.f32.mrb[0].mxu0
        %v1963 = vadd.f32 0.0, %v1962
        %v1964 = vpop.f32.mrb[0].mxu0
        %1965 = vmatprep.mubr.f32.mxu0 0.0
        %1966 = vmatmul.mubr.f32.gmra.mrb[0].mxu0 %v1769
        %v1967 = vpop.f32.mrb[0].mxu0
        %v1968 = vadd.f32 0.0, %v1967
        %v1969 = vpop.f32.mrb[0].mxu0
        %1970 = vmatprep.mubr.f32.mxu0 0.0
        %1971 = vmatmul.mubr.f32.gmra.mrb[0].mxu0 %v1772
        %v1972 = vpop.f32.mrb[0].mxu0
        %v1973 = vadd.f32 0.0, %v1972
        %v1974 = vpop.f32.mrb[0].mxu0
        %1975 = vmatprep.mubr.f32.mxu0 0.0
        %1976 = vmatmul.mubr.f32.gmra.mrb[0].mxu0 %v1775
        %v1977 = vpop.f32.mrb[0].mxu0
        %v1978 = vadd.f32 0.0, %v1977
        %v1979 = vpop.f32.mrb[0].mxu0
        %1980 = vmatprep.mubr.f32.mxu0 0.0
        %1981 = vmatmul.mubr.f32.gmra.mrb[0].mxu0 %v1778
        %v1982 = vpop.f32.mrb[0].mxu0
        %v1983 = vadd.f32 0.0, %v1982
        %v1984 = vpop.f32.mrb[0].mxu0
        %1985 = vmatprep.mubr.f32.mxu0 0.0
        %1986 = vmatmul.mubr.f32.gmra.mrb[0].mxu0 %v1781
        %v1987 = vpop.f32.mrb[0].mxu0
        %v1988 = vadd.f32 0.0, %v1987
        %v1989 = vpop.f32.mrb[0].mxu0
        %1990 = vmatprep.mubr.f32.mxu0 0.0
        %1991 = vmatmul.mubr.f32.gmra.mrb[0].mxu0 %v1784
        %v1992 = vpop.f32.mrb[0].mxu0
        %v1993 = vadd.f32 0.0, %v1992
        %v1994 = vpop.f32.mrb[0].mxu0
        %1995 = vmatprep.mubr.f32.mxu0 0.0
        %1996 = vmatmul.mubr.f32.gmra.mrb[0].mxu0 %v1787
        %v1997 = vpop.f32.mrb[0].mxu0
        %v1998 = vadd.f32 0.0, %v1997
        %v1999 = vpop.f32.mrb[0].mxu0
        %2000 = vmatprep.mubr.f32.mxu0 0.0
        %2001 = vmatmul.mubr.f32.gmra.mrb[0].mxu0 %v1790
        %v2002 = vpop.f32.mrb[0].mxu0
        %v2003 = vadd.f32 0.0, %v2002
        %v2004 = vpop.f32.mrb[0].mxu0
        %2005 = vmatprep.mubr.f32.mxu0 0.0
        %2006 = vmatmul.mubr.f32.gmra.mrb[0].mxu0 %v1793
        %v2007 = vpop.f32.mrb[0].mxu0
        %v2008 = vadd.f32 0.0, %v2007
        %v2009 = vpop.f32.mrb[0].mxu0
        %2010 = vmatprep.mubr.f32.mxu0 0.0
        %2011 = vmatmul.mubr.f32.gmra.mrb[0].mxu0 %v1796
        %v2012 = vpop.f32.mrb[0].mxu0
        %v2013 = vadd.f32 0.0, %v2012
        %v2014 = vpop.f32.mrb[0].mxu0
        %2015 = vmatprep.mubr.f32.mxu0 0.0
        %2016 = vmatmul.mubr.f32.gmra.mrb[0].mxu0 %v1799
        %v2017 = vpop.f32.mrb[0].mxu0
        %v2018 = vadd.f32 0.0, %v2017
        %v2019 = vpop.f32.mrb[0].mxu0
        %2020 = vmatprep.mubr.f32.mxu0 0.0
        %2021 = vmatmul.mubr.f32.gmra.mrb[0].mxu0 %v1802
        %v2022 = vpop.f32.mrb[0].mxu0
        %v2023 = vadd.f32 0.0, %v2022
        %v2024 = vpop.f32.mrb[0].mxu0
        %2025 = vmatprep.mubr.f32.mxu0 0.0
        %2026 = vmatmul.mubr.f32.gmra.mrb[0].mxu0 %v1805
        %v2027 = vpop.f32.mrb[0].mxu0
        %v2028 = vadd.f32 0.0, %v2027
        %v2029 = vpop.f32.mrb[0].mxu0
        %2030 = vmatprep.mubr.f32.mxu0 0.0
        %2031 = vmatmul.mubr.f32.gmra.mrb[0].mxu0 %v1808
        %v2032 = vpop.f32.mrb[0].mxu0
        %v2033 = vadd.f32 0.0, %v2032
        %v2034 = vpop.f32.mrb[0].mxu0
        %2035 = vmatprep.mubr.f32.mxu0 0.0
        %2036 = vmatmul.mubr.f32.gmra.mrb[0].mxu0 %v1811
        %v2037 = vpop.f32.mrb[0].mxu0
        %v2038 = vadd.f32 0.0, %v2037
        %v2039 = vpop.f32.mrb[0].mxu0
        %2040 = vdwg.mxu0
        %v2041 = vadd.f32 %v1649, %v1883
        %v2042 = vadd.f32 %v1650, %v1888
        %v2043 = vadd.f32 %v1651, %v1893
        %v2044 = vadd.f32 %v1652, %v1898
        %v2045 = vadd.f32 %v1653, %v1903
        %v2046 = vadd.f32 %v1654, %v1908
        %v2047 = vadd.f32 %v1655, %v1913
        %v2048 = vadd.f32 %v1656, %v1918
        %v2049 = vadd.f32 %v1657, %v1923
        %v2050 = vadd.f32 %v1658, %v1928
        %v2051 = vadd.f32 %v1659, %v1933
        %v2052 = vadd.f32 %v1660, %v1938
        %v2053 = vadd.f32 %v1661, %v1943
        %v2054 = vadd.f32 %v1662, %v1948
        %v2055 = vadd.f32 %v1663, %v1953
        %v2056 = vadd.f32 %v1664, %v1958
        %v2057 = vadd.f32 %v1665, %v1963
        %v2058 = vadd.f32 %v1666, %v1968
        %v2059 = vadd.f32 %v1667, %v1973
        %v2060 = vadd.f32 %v1668, %v1978
        %v2061 = vadd.f32 %v1669, %v1983
        %v2062 = vadd.f32 %v1670, %v1988
        %v2063 = vadd.f32 %v1671, %v1993
        %v2064 = vadd.f32 %v1672, %v1998
        %v2065 = vadd.f32 %v1673, %v2003
        %v2066 = vadd.f32 %v1674, %v2008
        %v2067 = vadd.f32 %v1675, %v2013
        %v2068 = vadd.f32 %v1676, %v2018
        %v2069 = vadd.f32 %v1677, %v2023
        %v2070 = vadd.f32 %v1678, %v2028
        %v2071 = vadd.f32 %v1679, %v2033
        %v2072 = vadd.f32 %v1680, %v2038
        %v2073 = vld [vmem:[%s1288 + $0x2] sm:$0xff]
        %v2074 = vld [vmem:[%s1288 + $0xa] sm:$0xff]
        %v2075 = vld [vmem:[%s1288 + $0x1a] sm:$0xff]
        %v2076 = vld [vmem:[%s1288 + $0x22] sm:$0xff]
        %v2077 = vld [vmem:[%s1288 + $0x32] sm:$0xff]
        %v2078 = vld [vmem:[%s1288 + $0x3a] sm:$0xff]
        %v2079 = vld [vmem:[%s1288 + $0x4a] sm:$0xff]
        %v2080 = vld [vmem:[%s1288 + $0x52] sm:$0xff]
        %v2081 = vld [vmem:[%s1288 + $0x62] sm:$0xff]
        %v2082 = vld [vmem:[%s1288 + $0x6a] sm:$0xff]
        %v2083 = vld [vmem:[%s1288 + $0x7a] sm:$0xff]
        %v2084 = vld [vmem:[%s1288 + $0x82] sm:$0xff]
        %v2085 = vld [vmem:[%s1288 + $0x92] sm:$0xff]
        %v2086 = vld [vmem:[%s1288 + $0x9a] sm:$0xff]
        %v2087 = vld [vmem:[%s1288 + $0xaa] sm:$0xff]
        %v2088 = vld [vmem:[%s1288 + $0xb2] sm:$0xff]
        %v2089 = vld [vmem:[%s1288 + $0xc2] sm:$0xff]
        %v2090 = vld [vmem:[%s1288 + $0xca] sm:$0xff]
        %v2091 = vld [vmem:[%s1288 + $0xda] sm:$0xff]
        %v2092 = vld [vmem:[%s1288 + $0xe2] sm:$0xff]
        %v2093 = vld [vmem:[%s1288 + $0xf2] sm:$0xff]
        %v2094 = vld [vmem:[%s1288 + $0xfa] sm:$0xff]
        %v2095 = vld [vmem:[%s1288 + $0x10a] sm:$0xff]
        %v2096 = vld [vmem:[%s1288 + $0x112] sm:$0xff]
        %v2097 = vld [vmem:[%s1288 + $0x122] sm:$0xff]
        %v2098 = vld [vmem:[%s1288 + $0x12a] sm:$0xff]
        %v2099 = vld [vmem:[%s1288 + $0x13a] sm:$0xff]
        %v2100 = vld [vmem:[%s1288 + $0x142] sm:$0xff]
        %v2101 = vld [vmem:[%s1288 + $0x152] sm:$0xff]
        %v2102 = vld [vmem:[%s1288 + $0x15a] sm:$0xff]
        %v2103 = vld [vmem:[%s1288 + $0x16a] sm:$0xff]
        %v2104 = vld [vmem:[%s1288 + $0x172] sm:$0xff]
        %s2105 = scalar_lea.vmem %s1, 120
        %v2106 = vld [vmem:[%s2105] sm:$0xff]
        %v2107 = vld [vmem:[%s2105 + $0x8] sm:$0xff]
        %v2108 = vld [vmem:[%s2105 + $0x10] sm:$0x3]
        %v2110 = vsel %vm246, %v2073, 0
        %v2113 = vsel %vm246, %v2074, 0
        %v2116 = vsel %vm246, %v2075, 0
        %v2119 = vsel %vm246, %v2076, 0
        %v2122 = vsel %vm246, %v2077, 0
        %v2125 = vsel %vm246, %v2078, 0
        %v2128 = vsel %vm246, %v2079, 0
        %v2131 = vsel %vm246, %v2080, 0
        %v2134 = vsel %vm246, %v2081, 0
        %v2137 = vsel %vm246, %v2082, 0
        %v2140 = vsel %vm246, %v2083, 0
        %v2143 = vsel %vm246, %v2084, 0
        %v2146 = vsel %vm246, %v2085, 0
        %v2149 = vsel %vm246, %v2086, 0
        %v2152 = vsel %vm246, %v2087, 0
        %v2155 = vsel %vm246, %v2088, 0
        %v2158 = vsel %vm246, %v2089, 0
        %v2161 = vsel %vm246, %v2090, 0
        %v2164 = vsel %vm246, %v2091, 0
        %v2167 = vsel %vm246, %v2092, 0
        %v2170 = vsel %vm246, %v2093, 0
        %v2173 = vsel %vm246, %v2094, 0
        %v2176 = vsel %vm246, %v2095, 0
        %v2179 = vsel %vm246, %v2096, 0
        %v2182 = vsel %vm246, %v2097, 0
        %v2185 = vsel %vm246, %v2098, 0
        %v2188 = vsel %vm246, %v2099, 0
        %v2191 = vsel %vm246, %v2100, 0
        %v2194 = vsel %vm246, %v2101, 0
        %v2197 = vsel %vm246, %v2102, 0
        %v2200 = vsel %vm246, %v2103, 0
        %v2203 = vsel %vm246, %v2104, 0
        %v2206 = vsel %vm343, %v2108, 0
        %2208 = vmatprep.subr.mxu0 0.0
        %2209 = vmatpush1.msra.mxu0 %v2106
        %2210 = vmatprep.subr.mxu0 0.0
        %2211 = vmatpush1.msra.mxu0 %v2107
        %2212 = vmatprep.subr.mxu0 0.0
        %2213 = vmatpush1.msra.mxu0 %v2206
        %2214 = vmatprep.subr.mxu0 0.0
        %2215 = vmatpush1.msra.mxu0 0.0
        %2216 = vmatprep.subr.mxu0 0.0
        %2217 = vmatpush1.msra.mxu0 0.0
        %2218 = vmatprep.subr.mxu0 0.0
        %2219 = vmatpush1.msra.mxu0 0.0
        %2220 = vmatprep.subr.mxu0 0.0
        %2221 = vmatpush1.msra.mxu0 0.0
        %2222 = vmatprep.subr.mxu0 0.0
        %2223 = vmatpush1.msra.mxu0 0.0
        %2224 = vmatprep.subr.mxu0 0.0
        %2225 = vmatpush1.msra.mxu0 0.0
        %2226 = vmatprep.subr.mxu0 0.0
        %2227 = vmatpush1.msra.mxu0 0.0
        %2228 = vmatprep.subr.mxu0 0.0
        %2229 = vmatpush1.msra.mxu0 0.0
        %2230 = vmatprep.subr.mxu0 0.0
        %2231 = vmatpush1.msra.mxu0 0.0
        %2232 = vmatprep.subr.mxu0 0.0
        %2233 = vmatpush1.msra.mxu0 0.0
        %2234 = vmatprep.subr.mxu0 0.0
        %2235 = vmatpush1.msra.mxu0 0.0
        %2236 = vmatprep.subr.mxu0 0.0
        %2237 = vmatpush1.msra.mxu0 0.0
        %2238 = vmatprep.subr.mxu0 0.0
        %2239 = vmatpush1.msra.mxu0 0.0
        %2240 = vmatprep.subr.mxu0 0.0
        %2241 = vmatpush1.msra.mxu0 0.0
        %2242 = vmatprep.subr.mxu0 0.0
        %2243 = vmatpush1.msra.mxu0 0.0
        %2244 = vmatprep.subr.mxu0 0.0
        %2245 = vmatpush1.msra.mxu0 0.0
        %2246 = vmatprep.subr.mxu0 0.0
        %2247 = vmatpush1.msra.mxu0 0.0
        %2248 = vmatprep.subr.mxu0 0.0
        %2249 = vmatpush1.msra.mxu0 0.0
        %2250 = vmatprep.subr.mxu0 0.0
        %2251 = vmatpush1.msra.mxu0 0.0
        %2252 = vmatprep.subr.mxu0 0.0
        %2253 = vmatpush1.msra.mxu0 0.0
        %2254 = vmatprep.subr.mxu0 0.0
        %2255 = vmatpush1.msra.mxu0 0.0
        %2256 = vmatprep.subr.mxu0 0.0
        %2257 = vmatpush1.msra.mxu0 0.0
        %2258 = vmatprep.subr.mxu0 0.0
        %2259 = vmatpush1.msra.mxu0 0.0
        %2260 = vmatprep.subr.mxu0 0.0
        %2261 = vmatpush1.msra.mxu0 0.0
        %2262 = vmatprep.subr.mxu0 0.0
        %2263 = vmatpush1.msra.mxu0 0.0
        %2264 = vmatprep.subr.mxu0 0.0
        %2265 = vmatpush1.msra.mxu0 0.0
        %2266 = vmatprep.subr.mxu0 0.0
        %2267 = vmatpush1.msra.mxu0 0.0
        %2268 = vmatprep.subr.mxu0 0.0
        %2269 = vmatpush1.msra.mxu0 0.0
        %2270 = vmatprep.subr.mxu0 0.0
        %2271 = vmatpush1.msra.mxu0 0.0
        %2272 = vmatprep.mubr.f32.mxu0 0.0
        %2273 = vmatmul.mubr.f32.gmra.mrb[0].mxu0 %v2110
        %v2274 = vpop.f32.mrb[0].mxu0
        %v2275 = vadd.f32 0.0, %v2274
        %v2276 = vpop.f32.mrb[0].mxu0
        %2277 = vmatprep.mubr.f32.mxu0 0.0
        %2278 = vmatmul.mubr.f32.gmra.mrb[0].mxu0 %v2113
        %v2279 = vpop.f32.mrb[0].mxu0
        %v2280 = vadd.f32 0.0, %v2279
        %v2281 = vpop.f32.mrb[0].mxu0
        %2282 = vmatprep.mubr.f32.mxu0 0.0
        %2283 = vmatmul.mubr.f32.gmra.mrb[0].mxu0 %v2116
        %v2284 = vpop.f32.mrb[0].mxu0
        %v2285 = vadd.f32 0.0, %v2284
        %v2286 = vpop.f32.mrb[0].mxu0
        %2287 = vmatprep.mubr.f32.mxu0 0.0
        %2288 = vmatmul.mubr.f32.gmra.mrb[0].mxu0 %v2119
        %v2289 = vpop.f32.mrb[0].mxu0
        %v2290 = vadd.f32 0.0, %v2289
        %v2291 = vpop.f32.mrb[0].mxu0
        %2292 = vmatprep.mubr.f32.mxu0 0.0
        %2293 = vmatmul.mubr.f32.gmra.mrb[0].mxu0 %v2122
        %v2294 = vpop.f32.mrb[0].mxu0
        %v2295 = vadd.f32 0.0, %v2294
        %v2296 = vpop.f32.mrb[0].mxu0
        %2297 = vmatprep.mubr.f32.mxu0 0.0
        %2298 = vmatmul.mubr.f32.gmra.mrb[0].mxu0 %v2125
        %v2299 = vpop.f32.mrb[0].mxu0
        %v2300 = vadd.f32 0.0, %v2299
        %v2301 = vpop.f32.mrb[0].mxu0
        %2302 = vmatprep.mubr.f32.mxu0 0.0
        %2303 = vmatmul.mubr.f32.gmra.mrb[0].mxu0 %v2128
        %v2304 = vpop.f32.mrb[0].mxu0
        %v2305 = vadd.f32 0.0, %v2304
        %v2306 = vpop.f32.mrb[0].mxu0
        %2307 = vmatprep.mubr.f32.mxu0 0.0
        %2308 = vmatmul.mubr.f32.gmra.mrb[0].mxu0 %v2131
        %v2309 = vpop.f32.mrb[0].mxu0
        %v2310 = vadd.f32 0.0, %v2309
        %v2311 = vpop.f32.mrb[0].mxu0
        %2312 = vmatprep.mubr.f32.mxu0 0.0
        %2313 = vmatmul.mubr.f32.gmra.mrb[0].mxu0 %v2134
        %v2314 = vpop.f32.mrb[0].mxu0
        %v2315 = vadd.f32 0.0, %v2314
        %v2316 = vpop.f32.mrb[0].mxu0
        %2317 = vmatprep.mubr.f32.mxu0 0.0
        %2318 = vmatmul.mubr.f32.gmra.mrb[0].mxu0 %v2137
        %v2319 = vpop.f32.mrb[0].mxu0
        %v2320 = vadd.f32 0.0, %v2319
        %v2321 = vpop.f32.mrb[0].mxu0
        %2322 = vmatprep.mubr.f32.mxu0 0.0
        %2323 = vmatmul.mubr.f32.gmra.mrb[0].mxu0 %v2140
        %v2324 = vpop.f32.mrb[0].mxu0
        %v2325 = vadd.f32 0.0, %v2324
        %v2326 = vpop.f32.mrb[0].mxu0
        %2327 = vmatprep.mubr.f32.mxu0 0.0
        %2328 = vmatmul.mubr.f32.gmra.mrb[0].mxu0 %v2143
        %v2329 = vpop.f32.mrb[0].mxu0
        %v2330 = vadd.f32 0.0, %v2329
        %v2331 = vpop.f32.mrb[0].mxu0
        %2332 = vmatprep.mubr.f32.mxu0 0.0
        %2333 = vmatmul.mubr.f32.gmra.mrb[0].mxu0 %v2146
        %v2334 = vpop.f32.mrb[0].mxu0
        %v2335 = vadd.f32 0.0, %v2334
        %v2336 = vpop.f32.mrb[0].mxu0
        %2337 = vmatprep.mubr.f32.mxu0 0.0
        %2338 = vmatmul.mubr.f32.gmra.mrb[0].mxu0 %v2149
        %v2339 = vpop.f32.mrb[0].mxu0
        %v2340 = vadd.f32 0.0, %v2339
        %v2341 = vpop.f32.mrb[0].mxu0
        %2342 = vmatprep.mubr.f32.mxu0 0.0
        %2343 = vmatmul.mubr.f32.gmra.mrb[0].mxu0 %v2152
        %v2344 = vpop.f32.mrb[0].mxu0
        %v2345 = vadd.f32 0.0, %v2344
        %v2346 = vpop.f32.mrb[0].mxu0
        %2347 = vmatprep.mubr.f32.mxu0 0.0
        %2348 = vmatmul.mubr.f32.gmra.mrb[0].mxu0 %v2155
        %v2349 = vpop.f32.mrb[0].mxu0
        %v2350 = vadd.f32 0.0, %v2349
        %v2351 = vpop.f32.mrb[0].mxu0
        %2352 = vmatprep.mubr.f32.mxu0 0.0
        %2353 = vmatmul.mubr.f32.gmra.mrb[0].mxu0 %v2158
        %v2354 = vpop.f32.mrb[0].mxu0
        %v2355 = vadd.f32 0.0, %v2354
        %v2356 = vpop.f32.mrb[0].mxu0
        %2357 = vmatprep.mubr.f32.mxu0 0.0
        %2358 = vmatmul.mubr.f32.gmra.mrb[0].mxu0 %v2161
        %v2359 = vpop.f32.mrb[0].mxu0
        %v2360 = vadd.f32 0.0, %v2359
        %v2361 = vpop.f32.mrb[0].mxu0
        %2362 = vmatprep.mubr.f32.mxu0 0.0
        %2363 = vmatmul.mubr.f32.gmra.mrb[0].mxu0 %v2164
        %v2364 = vpop.f32.mrb[0].mxu0
        %v2365 = vadd.f32 0.0, %v2364
        %v2366 = vpop.f32.mrb[0].mxu0
        %2367 = vmatprep.mubr.f32.mxu0 0.0
        %2368 = vmatmul.mubr.f32.gmra.mrb[0].mxu0 %v2167
        %v2369 = vpop.f32.mrb[0].mxu0
        %v2370 = vadd.f32 0.0, %v2369
        %v2371 = vpop.f32.mrb[0].mxu0
        %2372 = vmatprep.mubr.f32.mxu0 0.0
        %2373 = vmatmul.mubr.f32.gmra.mrb[0].mxu0 %v2170
        %v2374 = vpop.f32.mrb[0].mxu0
        %v2375 = vadd.f32 0.0, %v2374
        %v2376 = vpop.f32.mrb[0].mxu0
        %2377 = vmatprep.mubr.f32.mxu0 0.0
        %2378 = vmatmul.mubr.f32.gmra.mrb[0].mxu0 %v2173
        %v2379 = vpop.f32.mrb[0].mxu0
        %v2380 = vadd.f32 0.0, %v2379
        %v2381 = vpop.f32.mrb[0].mxu0
        %2382 = vmatprep.mubr.f32.mxu0 0.0
        %2383 = vmatmul.mubr.f32.gmra.mrb[0].mxu0 %v2176
        %v2384 = vpop.f32.mrb[0].mxu0
        %v2385 = vadd.f32 0.0, %v2384
        %v2386 = vpop.f32.mrb[0].mxu0
        %2387 = vmatprep.mubr.f32.mxu0 0.0
        %2388 = vmatmul.mubr.f32.gmra.mrb[0].mxu0 %v2179
        %v2389 = vpop.f32.mrb[0].mxu0
        %v2390 = vadd.f32 0.0, %v2389
        %v2391 = vpop.f32.mrb[0].mxu0
        %2392 = vmatprep.mubr.f32.mxu0 0.0
        %2393 = vmatmul.mubr.f32.gmra.mrb[0].mxu0 %v2182
        %v2394 = vpop.f32.mrb[0].mxu0
        %v2395 = vadd.f32 0.0, %v2394
        %v2396 = vpop.f32.mrb[0].mxu0
        %2397 = vmatprep.mubr.f32.mxu0 0.0
        %2398 = vmatmul.mubr.f32.gmra.mrb[0].mxu0 %v2185
        %v2399 = vpop.f32.mrb[0].mxu0
        %v2400 = vadd.f32 0.0, %v2399
        %v2401 = vpop.f32.mrb[0].mxu0
        %2402 = vmatprep.mubr.f32.mxu0 0.0
        %2403 = vmatmul.mubr.f32.gmra.mrb[0].mxu0 %v2188
        %v2404 = vpop.f32.mrb[0].mxu0
        %v2405 = vadd.f32 0.0, %v2404
        %v2406 = vpop.f32.mrb[0].mxu0
        %2407 = vmatprep.mubr.f32.mxu0 0.0
        %2408 = vmatmul.mubr.f32.gmra.mrb[0].mxu0 %v2191
        %v2409 = vpop.f32.mrb[0].mxu0
        %v2410 = vadd.f32 0.0, %v2409
        %v2411 = vpop.f32.mrb[0].mxu0
        %2412 = vmatprep.mubr.f32.mxu0 0.0
        %2413 = vmatmul.mubr.f32.gmra.mrb[0].mxu0 %v2194
        %v2414 = vpop.f32.mrb[0].mxu0
        %v2415 = vadd.f32 0.0, %v2414
        %v2416 = vpop.f32.mrb[0].mxu0
        %2417 = vmatprep.mubr.f32.mxu0 0.0
        %2418 = vmatmul.mubr.f32.gmra.mrb[0].mxu0 %v2197
        %v2419 = vpop.f32.mrb[0].mxu0
        %v2420 = vadd.f32 0.0, %v2419
        %v2421 = vpop.f32.mrb[0].mxu0
        %2422 = vmatprep.mubr.f32.mxu0 0.0
        %2423 = vmatmul.mubr.f32.gmra.mrb[0].mxu0 %v2200
        %v2424 = vpop.f32.mrb[0].mxu0
        %v2425 = vadd.f32 0.0, %v2424
        %v2426 = vpop.f32.mrb[0].mxu0
        %2427 = vmatprep.mubr.f32.mxu0 0.0
        %2428 = vmatmul.mubr.f32.gmra.mrb[0].mxu0 %v2203
        %v2429 = vpop.f32.mrb[0].mxu0
        %v2430 = vadd.f32 0.0, %v2429
        %v2431 = vpop.f32.mrb[0].mxu0
        %2432 = vdwg.mxu0
        %v2433 = vadd.f32 %v2041, %v2275
        %v2434 = vadd.f32 %v2042, %v2280
        %v2435 = vadd.f32 %v2043, %v2285
        %v2436 = vadd.f32 %v2044, %v2290
        %v2437 = vadd.f32 %v2045, %v2295
        %v2438 = vadd.f32 %v2046, %v2300
        %v2439 = vadd.f32 %v2047, %v2305
        %v2440 = vadd.f32 %v2048, %v2310
        %v2441 = vadd.f32 %v2049, %v2315
        %v2442 = vadd.f32 %v2050, %v2320
        %v2443 = vadd.f32 %v2051, %v2325
        %v2444 = vadd.f32 %v2052, %v2330
        %v2445 = vadd.f32 %v2053, %v2335
        %v2446 = vadd.f32 %v2054, %v2340
        %v2447 = vadd.f32 %v2055, %v2345
        %v2448 = vadd.f32 %v2056, %v2350
        %v2449 = vadd.f32 %v2057, %v2355
        %v2450 = vadd.f32 %v2058, %v2360
        %v2451 = vadd.f32 %v2059, %v2365
        %v2452 = vadd.f32 %v2060, %v2370
        %v2453 = vadd.f32 %v2061, %v2375
        %v2454 = vadd.f32 %v2062, %v2380
        %v2455 = vadd.f32 %v2063, %v2385
        %v2456 = vadd.f32 %v2064, %v2390
        %v2457 = vadd.f32 %v2065, %v2395
        %v2458 = vadd.f32 %v2066, %v2400
        %v2459 = vadd.f32 %v2067, %v2405
        %v2460 = vadd.f32 %v2068, %v2410
        %v2461 = vadd.f32 %v2069, %v2415
        %v2462 = vadd.f32 %v2070, %v2420
        %v2463 = vadd.f32 %v2071, %v2425
        %v2464 = vadd.f32 %v2072, %v2430
        %s2465 = scalar_lea.vmem %s172, 48
        %v2466 = vld [vmem:[%s2465] sm:$0xff]
        %v2467 = vld [vmem:[%s2465 + $0x8] sm:$0xff]
        %v2468 = vld [vmem:[%s2465 + $0x18] sm:$0xff]
        %v2469 = vld [vmem:[%s2465 + $0x20] sm:$0xff]
        %v2470 = vld [vmem:[%s2465 + $0x30] sm:$0xff]
        %v2471 = vld [vmem:[%s2465 + $0x38] sm:$0xff]
        %v2472 = vld [vmem:[%s2465 + $0x48] sm:$0xff]
        %v2473 = vld [vmem:[%s2465 + $0x50] sm:$0xff]
        %v2474 = vld [vmem:[%s2465 + $0x60] sm:$0xff]
        %v2475 = vld [vmem:[%s2465 + $0x68] sm:$0xff]
        %v2476 = vld [vmem:[%s2465 + $0x78] sm:$0xff]
        %v2477 = vld [vmem:[%s2465 + $0x80] sm:$0xff]
        %v2478 = vld [vmem:[%s2465 + $0x90] sm:$0xff]
        %v2479 = vld [vmem:[%s2465 + $0x98] sm:$0xff]
        %v2480 = vld [vmem:[%s2465 + $0xa8] sm:$0xff]
        %v2481 = vld [vmem:[%s2465 + $0xb0] sm:$0xff]
        %v2482 = vld [vmem:[%s2465 + $0xc0] sm:$0xff]
        %v2483 = vld [vmem:[%s2465 + $0xc8] sm:$0xff]
        %v2484 = vld [vmem:[%s2465 + $0xd8] sm:$0xff]
        %v2485 = vld [vmem:[%s2465 + $0xe0] sm:$0xff]
        %v2486 = vld [vmem:[%s2465 + $0xf0] sm:$0xff]
        %v2487 = vld [vmem:[%s2465 + $0xf8] sm:$0xff]
        %v2488 = vld [vmem:[%s2465 + $0x108] sm:$0xff]
        %v2489 = vld [vmem:[%s2465 + $0x110] sm:$0xff]
        %v2490 = vld [vmem:[%s2465 + $0x120] sm:$0xff]
        %v2491 = vld [vmem:[%s2465 + $0x128] sm:$0xff]
        %v2492 = vld [vmem:[%s2465 + $0x138] sm:$0xff]
        %v2493 = vld [vmem:[%s2465 + $0x140] sm:$0xff]
        %v2494 = vld [vmem:[%s2465 + $0x150] sm:$0xff]
        %v2495 = vld [vmem:[%s2465 + $0x158] sm:$0xff]
        %v2496 = vld [vmem:[%s2465 + $0x168] sm:$0xff]
        %v2497 = vld [vmem:[%s2465 + $0x170] sm:$0xff]
        %s2498 = scalar_lea.vmem %s1, 144
        %v2499 = vld [vmem:[%s2498] sm:$0xff]
        %v2500 = vld [vmem:[%s2498 + $0x8] sm:$0xff]
        %v2501 = vld [vmem:[%s2498 + $0x10] sm:$0x3]
        %v2503 = vsel %vm246, %v2466, 0
        %v2506 = vsel %vm246, %v2467, 0
        %v2509 = vsel %vm246, %v2468, 0
        %v2512 = vsel %vm246, %v2469, 0
        %v2515 = vsel %vm246, %v2470, 0
        %v2518 = vsel %vm246, %v2471, 0
        %v2521 = vsel %vm246, %v2472, 0
        %v2524 = vsel %vm246, %v2473, 0
        %v2527 = vsel %vm246, %v2474, 0
        %v2530 = vsel %vm246, %v2475, 0
        %v2533 = vsel %vm246, %v2476, 0
        %v2536 = vsel %vm246, %v2477, 0
        %v2539 = vsel %vm246, %v2478, 0
        %v2542 = vsel %vm246, %v2479, 0
        %v2545 = vsel %vm246, %v2480, 0
        %v2548 = vsel %vm246, %v2481, 0
        %v2551 = vsel %vm246, %v2482, 0
        %v2554 = vsel %vm246, %v2483, 0
        %v2557 = vsel %vm246, %v2484, 0
        %v2560 = vsel %vm246, %v2485, 0
        %v2563 = vsel %vm246, %v2486, 0
        %v2566 = vsel %vm246, %v2487, 0
        %v2569 = vsel %vm246, %v2488, 0
        %v2572 = vsel %vm246, %v2489, 0
        %v2575 = vsel %vm246, %v2490, 0
        %v2578 = vsel %vm246, %v2491, 0
        %v2581 = vsel %vm246, %v2492, 0
        %v2584 = vsel %vm246, %v2493, 0
        %v2587 = vsel %vm246, %v2494, 0
        %v2590 = vsel %vm246, %v2495, 0
        %v2593 = vsel %vm246, %v2496, 0
        %v2596 = vsel %vm246, %v2497, 0
        %v2599 = vsel %vm343, %v2501, 0
        %2601 = vmatprep.subr.mxu0 0.0
        %2602 = vmatpush1.msra.mxu0 %v2499
        %2603 = vmatprep.subr.mxu0 0.0
        %2604 = vmatpush1.msra.mxu0 %v2500
        %2605 = vmatprep.subr.mxu0 0.0
        %2606 = vmatpush1.msra.mxu0 %v2599
        %2607 = vmatprep.subr.mxu0 0.0
        %2608 = vmatpush1.msra.mxu0 0.0
        %2609 = vmatprep.subr.mxu0 0.0
        %2610 = vmatpush1.msra.mxu0 0.0
        %2611 = vmatprep.subr.mxu0 0.0
        %2612 = vmatpush1.msra.mxu0 0.0
        %2613 = vmatprep.subr.mxu0 0.0
        %2614 = vmatpush1.msra.mxu0 0.0
        %2615 = vmatprep.subr.mxu0 0.0
        %2616 = vmatpush1.msra.mxu0 0.0
        %2617 = vmatprep.subr.mxu0 0.0
        %2618 = vmatpush1.msra.mxu0 0.0
        %2619 = vmatprep.subr.mxu0 0.0
        %2620 = vmatpush1.msra.mxu0 0.0
        %2621 = vmatprep.subr.mxu0 0.0
        %2622 = vmatpush1.msra.mxu0 0.0
        %2623 = vmatprep.subr.mxu0 0.0
        %2624 = vmatpush1.msra.mxu0 0.0
        %2625 = vmatprep.subr.mxu0 0.0
        %2626 = vmatpush1.msra.mxu0 0.0
        %2627 = vmatprep.subr.mxu0 0.0
        %2628 = vmatpush1.msra.mxu0 0.0
        %2629 = vmatprep.subr.mxu0 0.0
        %2630 = vmatpush1.msra.mxu0 0.0
        %2631 = vmatprep.subr.mxu0 0.0
        %2632 = vmatpush1.msra.mxu0 0.0
        %2633 = vmatprep.subr.mxu0 0.0
        %2634 = vmatpush1.msra.mxu0 0.0
        %2635 = vmatprep.subr.mxu0 0.0
        %2636 = vmatpush1.msra.mxu0 0.0
        %2637 = vmatprep.subr.mxu0 0.0
        %2638 = vmatpush1.msra.mxu0 0.0
        %2639 = vmatprep.subr.mxu0 0.0
        %2640 = vmatpush1.msra.mxu0 0.0
        %2641 = vmatprep.subr.mxu0 0.0
        %2642 = vmatpush1.msra.mxu0 0.0
        %2643 = vmatprep.subr.mxu0 0.0
        %2644 = vmatpush1.msra.mxu0 0.0
        %2645 = vmatprep.subr.mxu0 0.0
        %2646 = vmatpush1.msra.mxu0 0.0
        %2647 = vmatprep.subr.mxu0 0.0
        %2648 = vmatpush1.msra.mxu0 0.0
        %2649 = vmatprep.subr.mxu0 0.0
        %2650 = vmatpush1.msra.mxu0 0.0
        %2651 = vmatprep.subr.mxu0 0.0
        %2652 = vmatpush1.msra.mxu0 0.0
        %2653 = vmatprep.subr.mxu0 0.0
        %2654 = vmatpush1.msra.mxu0 0.0
        %2655 = vmatprep.subr.mxu0 0.0
        %2656 = vmatpush1.msra.mxu0 0.0
        %2657 = vmatprep.subr.mxu0 0.0
        %2658 = vmatpush1.msra.mxu0 0.0
        %2659 = vmatprep.subr.mxu0 0.0
        %2660 = vmatpush1.msra.mxu0 0.0
        %2661 = vmatprep.subr.mxu0 0.0
        %2662 = vmatpush1.msra.mxu0 0.0
        %2663 = vmatprep.subr.mxu0 0.0
        %2664 = vmatpush1.msra.mxu0 0.0
        %2665 = vmatprep.mubr.f32.mxu0 0.0
        %2666 = vmatmul.mubr.f32.gmra.mrb[0].mxu0 %v2503
        %v2667 = vpop.f32.mrb[0].mxu0
        %v2668 = vadd.f32 0.0, %v2667
        %v2669 = vpop.f32.mrb[0].mxu0
        %2670 = vmatprep.mubr.f32.mxu0 0.0
        %2671 = vmatmul.mubr.f32.gmra.mrb[0].mxu0 %v2506
        %v2672 = vpop.f32.mrb[0].mxu0
        %v2673 = vadd.f32 0.0, %v2672
        %v2674 = vpop.f32.mrb[0].mxu0
        %2675 = vmatprep.mubr.f32.mxu0 0.0
        %2676 = vmatmul.mubr.f32.gmra.mrb[0].mxu0 %v2509
        %v2677 = vpop.f32.mrb[0].mxu0
        %v2678 = vadd.f32 0.0, %v2677
        %v2679 = vpop.f32.mrb[0].mxu0
        %2680 = vmatprep.mubr.f32.mxu0 0.0
        %2681 = vmatmul.mubr.f32.gmra.mrb[0].mxu0 %v2512
        %v2682 = vpop.f32.mrb[0].mxu0
        %v2683 = vadd.f32 0.0, %v2682
        %v2684 = vpop.f32.mrb[0].mxu0
        %2685 = vmatprep.mubr.f32.mxu0 0.0
        %2686 = vmatmul.mubr.f32.gmra.mrb[0].mxu0 %v2515
        %v2687 = vpop.f32.mrb[0].mxu0
        %v2688 = vadd.f32 0.0, %v2687
        %v2689 = vpop.f32.mrb[0].mxu0
        %2690 = vmatprep.mubr.f32.mxu0 0.0
        %2691 = vmatmul.mubr.f32.gmra.mrb[0].mxu0 %v2518
        %v2692 = vpop.f32.mrb[0].mxu0
        %v2693 = vadd.f32 0.0, %v2692
        %v2694 = vpop.f32.mrb[0].mxu0
        %2695 = vmatprep.mubr.f32.mxu0 0.0
        %2696 = vmatmul.mubr.f32.gmra.mrb[0].mxu0 %v2521
        %v2697 = vpop.f32.mrb[0].mxu0
        %v2698 = vadd.f32 0.0, %v2697
        %v2699 = vpop.f32.mrb[0].mxu0
        %2700 = vmatprep.mubr.f32.mxu0 0.0
        %2701 = vmatmul.mubr.f32.gmra.mrb[0].mxu0 %v2524
        %v2702 = vpop.f32.mrb[0].mxu0
        %v2703 = vadd.f32 0.0, %v2702
        %v2704 = vpop.f32.mrb[0].mxu0
        %2705 = vmatprep.mubr.f32.mxu0 0.0
        %2706 = vmatmul.mubr.f32.gmra.mrb[0].mxu0 %v2527
        %v2707 = vpop.f32.mrb[0].mxu0
        %v2708 = vadd.f32 0.0, %v2707
        %v2709 = vpop.f32.mrb[0].mxu0
        %2710 = vmatprep.mubr.f32.mxu0 0.0
        %2711 = vmatmul.mubr.f32.gmra.mrb[0].mxu0 %v2530
        %v2712 = vpop.f32.mrb[0].mxu0
        %v2713 = vadd.f32 0.0, %v2712
        %v2714 = vpop.f32.mrb[0].mxu0
        %2715 = vmatprep.mubr.f32.mxu0 0.0
        %2716 = vmatmul.mubr.f32.gmra.mrb[0].mxu0 %v2533
        %v2717 = vpop.f32.mrb[0].mxu0
        %v2718 = vadd.f32 0.0, %v2717
        %v2719 = vpop.f32.mrb[0].mxu0
        %2720 = vmatprep.mubr.f32.mxu0 0.0
        %2721 = vmatmul.mubr.f32.gmra.mrb[0].mxu0 %v2536
        %v2722 = vpop.f32.mrb[0].mxu0
        %v2723 = vadd.f32 0.0, %v2722
        %v2724 = vpop.f32.mrb[0].mxu0
        %2725 = vmatprep.mubr.f32.mxu0 0.0
        %2726 = vmatmul.mubr.f32.gmra.mrb[0].mxu0 %v2539
        %v2727 = vpop.f32.mrb[0].mxu0
        %v2728 = vadd.f32 0.0, %v2727
        %v2729 = vpop.f32.mrb[0].mxu0
        %2730 = vmatprep.mubr.f32.mxu0 0.0
        %2731 = vmatmul.mubr.f32.gmra.mrb[0].mxu0 %v2542
        %v2732 = vpop.f32.mrb[0].mxu0
        %v2733 = vadd.f32 0.0, %v2732
        %v2734 = vpop.f32.mrb[0].mxu0
        %2735 = vmatprep.mubr.f32.mxu0 0.0
        %2736 = vmatmul.mubr.f32.gmra.mrb[0].mxu0 %v2545
        %v2737 = vpop.f32.mrb[0].mxu0
        %v2738 = vadd.f32 0.0, %v2737
        %v2739 = vpop.f32.mrb[0].mxu0
        %2740 = vmatprep.mubr.f32.mxu0 0.0
        %2741 = vmatmul.mubr.f32.gmra.mrb[0].mxu0 %v2548
        %v2742 = vpop.f32.mrb[0].mxu0
        %v2743 = vadd.f32 0.0, %v2742
        %v2744 = vpop.f32.mrb[0].mxu0
        %2745 = vmatprep.mubr.f32.mxu0 0.0
        %2746 = vmatmul.mubr.f32.gmra.mrb[0].mxu0 %v2551
        %v2747 = vpop.f32.mrb[0].mxu0
        %v2748 = vadd.f32 0.0, %v2747
        %v2749 = vpop.f32.mrb[0].mxu0
        %2750 = vmatprep.mubr.f32.mxu0 0.0
        %2751 = vmatmul.mubr.f32.gmra.mrb[0].mxu0 %v2554
        %v2752 = vpop.f32.mrb[0].mxu0
        %v2753 = vadd.f32 0.0, %v2752
        %v2754 = vpop.f32.mrb[0].mxu0
        %2755 = vmatprep.mubr.f32.mxu0 0.0
        %2756 = vmatmul.mubr.f32.gmra.mrb[0].mxu0 %v2557
        %v2757 = vpop.f32.mrb[0].mxu0
        %v2758 = vadd.f32 0.0, %v2757
        %v2759 = vpop.f32.mrb[0].mxu0
        %2760 = vmatprep.mubr.f32.mxu0 0.0
        %2761 = vmatmul.mubr.f32.gmra.mrb[0].mxu0 %v2560
        %v2762 = vpop.f32.mrb[0].mxu0
        %v2763 = vadd.f32 0.0, %v2762
        %v2764 = vpop.f32.mrb[0].mxu0
        %2765 = vmatprep.mubr.f32.mxu0 0.0
        %2766 = vmatmul.mubr.f32.gmra.mrb[0].mxu0 %v2563
        %v2767 = vpop.f32.mrb[0].mxu0
        %v2768 = vadd.f32 0.0, %v2767
        %v2769 = vpop.f32.mrb[0].mxu0
        %2770 = vmatprep.mubr.f32.mxu0 0.0
        %2771 = vmatmul.mubr.f32.gmra.mrb[0].mxu0 %v2566
        %v2772 = vpop.f32.mrb[0].mxu0
        %v2773 = vadd.f32 0.0, %v2772
        %v2774 = vpop.f32.mrb[0].mxu0
        %2775 = vmatprep.mubr.f32.mxu0 0.0
        %2776 = vmatmul.mubr.f32.gmra.mrb[0].mxu0 %v2569
        %v2777 = vpop.f32.mrb[0].mxu0
        %v2778 = vadd.f32 0.0, %v2777
        %v2779 = vpop.f32.mrb[0].mxu0
        %2780 = vmatprep.mubr.f32.mxu0 0.0
        %2781 = vmatmul.mubr.f32.gmra.mrb[0].mxu0 %v2572
        %v2782 = vpop.f32.mrb[0].mxu0
        %v2783 = vadd.f32 0.0, %v2782
        %v2784 = vpop.f32.mrb[0].mxu0
        %2785 = vmatprep.mubr.f32.mxu0 0.0
        %2786 = vmatmul.mubr.f32.gmra.mrb[0].mxu0 %v2575
        %v2787 = vpop.f32.mrb[0].mxu0
        %v2788 = vadd.f32 0.0, %v2787
        %v2789 = vpop.f32.mrb[0].mxu0
        %2790 = vmatprep.mubr.f32.mxu0 0.0
        %2791 = vmatmul.mubr.f32.gmra.mrb[0].mxu0 %v2578
        %v2792 = vpop.f32.mrb[0].mxu0
        %v2793 = vadd.f32 0.0, %v2792
        %v2794 = vpop.f32.mrb[0].mxu0
        %2795 = vmatprep.mubr.f32.mxu0 0.0
        %2796 = vmatmul.mubr.f32.gmra.mrb[0].mxu0 %v2581
        %v2797 = vpop.f32.mrb[0].mxu0
        %v2798 = vadd.f32 0.0, %v2797
        %v2799 = vpop.f32.mrb[0].mxu0
        %2800 = vmatprep.mubr.f32.mxu0 0.0
        %2801 = vmatmul.mubr.f32.gmra.mrb[0].mxu0 %v2584
        %v2802 = vpop.f32.mrb[0].mxu0
        %v2803 = vadd.f32 0.0, %v2802
        %v2804 = vpop.f32.mrb[0].mxu0
        %2805 = vmatprep.mubr.f32.mxu0 0.0
        %2806 = vmatmul.mubr.f32.gmra.mrb[0].mxu0 %v2587
        %v2807 = vpop.f32.mrb[0].mxu0
        %v2808 = vadd.f32 0.0, %v2807
        %v2809 = vpop.f32.mrb[0].mxu0
        %2810 = vmatprep.mubr.f32.mxu0 0.0
        %2811 = vmatmul.mubr.f32.gmra.mrb[0].mxu0 %v2590
        %v2812 = vpop.f32.mrb[0].mxu0
        %v2813 = vadd.f32 0.0, %v2812
        %v2814 = vpop.f32.mrb[0].mxu0
        %2815 = vmatprep.mubr.f32.mxu0 0.0
        %2816 = vmatmul.mubr.f32.gmra.mrb[0].mxu0 %v2593
        %v2817 = vpop.f32.mrb[0].mxu0
        %v2818 = vadd.f32 0.0, %v2817
        %v2819 = vpop.f32.mrb[0].mxu0
        %2820 = vmatprep.mubr.f32.mxu0 0.0
        %2821 = vmatmul.mubr.f32.gmra.mrb[0].mxu0 %v2596
        %v2822 = vpop.f32.mrb[0].mxu0
        %v2823 = vadd.f32 0.0, %v2822
        %v2824 = vpop.f32.mrb[0].mxu0
        %2825 = vdwg.mxu0
        %v2826 = vadd.f32 %v2433, %v2668
        %v2827 = vadd.f32 %v2434, %v2673
        %v2828 = vadd.f32 %v2435, %v2678
        %v2829 = vadd.f32 %v2436, %v2683
        %v2830 = vadd.f32 %v2437, %v2688
        %v2831 = vadd.f32 %v2438, %v2693
        %v2832 = vadd.f32 %v2439, %v2698
        %v2833 = vadd.f32 %v2440, %v2703
        %v2834 = vadd.f32 %v2441, %v2708
        %v2835 = vadd.f32 %v2442, %v2713
        %v2836 = vadd.f32 %v2443, %v2718
        %v2837 = vadd.f32 %v2444, %v2723
        %v2838 = vadd.f32 %v2445, %v2728
        %v2839 = vadd.f32 %v2446, %v2733
        %v2840 = vadd.f32 %v2447, %v2738
        %v2841 = vadd.f32 %v2448, %v2743
        %v2842 = vadd.f32 %v2449, %v2748
        %v2843 = vadd.f32 %v2450, %v2753
        %v2844 = vadd.f32 %v2451, %v2758
        %v2845 = vadd.f32 %v2452, %v2763
        %v2846 = vadd.f32 %v2453, %v2768
        %v2847 = vadd.f32 %v2454, %v2773
        %v2848 = vadd.f32 %v2455, %v2778
        %v2849 = vadd.f32 %v2456, %v2783
        %v2850 = vadd.f32 %v2457, %v2788
        %v2851 = vadd.f32 %v2458, %v2793
        %v2852 = vadd.f32 %v2459, %v2798
        %v2853 = vadd.f32 %v2460, %v2803
        %v2854 = vadd.f32 %v2461, %v2808
        %v2855 = vadd.f32 %v2462, %v2813
        %v2856 = vadd.f32 %v2463, %v2818
        %v2857 = vadd.f32 %v2464, %v2823
        %v2858 = vld [vmem:[%s2465 + $0x1] sm:$0xff]
        %v2859 = vld [vmem:[%s2465 + $0x9] sm:$0xff]
        %v2860 = vld [vmem:[%s2465 + $0x19] sm:$0xff]
        %v2861 = vld [vmem:[%s2465 + $0x21] sm:$0xff]
        %v2862 = vld [vmem:[%s2465 + $0x31] sm:$0xff]
        %v2863 = vld [vmem:[%s2465 + $0x39] sm:$0xff]
        %v2864 = vld [vmem:[%s2465 + $0x49] sm:$0xff]
        %v2865 = vld [vmem:[%s2465 + $0x51] sm:$0xff]
        %v2866 = vld [vmem:[%s2465 + $0x61] sm:$0xff]
        %v2867 = vld [vmem:[%s2465 + $0x69] sm:$0xff]
        %v2868 = vld [vmem:[%s2465 + $0x79] sm:$0xff]
        %v2869 = vld [vmem:[%s2465 + $0x81] sm:$0xff]
        %v2870 = vld [vmem:[%s2465 + $0x91] sm:$0xff]
        %v2871 = vld [vmem:[%s2465 + $0x99] sm:$0xff]
        %v2872 = vld [vmem:[%s2465 + $0xa9] sm:$0xff]
        %v2873 = vld [vmem:[%s2465 + $0xb1] sm:$0xff]
        %v2874 = vld [vmem:[%s2465 + $0xc1] sm:$0xff]
        %v2875 = vld [vmem:[%s2465 + $0xc9] sm:$0xff]
        %v2876 = vld [vmem:[%s2465 + $0xd9] sm:$0xff]
        %v2877 = vld [vmem:[%s2465 + $0xe1] sm:$0xff]
        %v2878 = vld [vmem:[%s2465 + $0xf1] sm:$0xff]
        %v2879 = vld [vmem:[%s2465 + $0xf9] sm:$0xff]
        %v2880 = vld [vmem:[%s2465 + $0x109] sm:$0xff]
        %v2881 = vld [vmem:[%s2465 + $0x111] sm:$0xff]
        %v2882 = vld [vmem:[%s2465 + $0x121] sm:$0xff]
        %v2883 = vld [vmem:[%s2465 + $0x129] sm:$0xff]
        %v2884 = vld [vmem:[%s2465 + $0x139] sm:$0xff]
        %v2885 = vld [vmem:[%s2465 + $0x141] sm:$0xff]
        %v2886 = vld [vmem:[%s2465 + $0x151] sm:$0xff]
        %v2887 = vld [vmem:[%s2465 + $0x159] sm:$0xff]
        %v2888 = vld [vmem:[%s2465 + $0x169] sm:$0xff]
        %v2889 = vld [vmem:[%s2465 + $0x171] sm:$0xff]
        %s2890 = scalar_lea.vmem %s1, 168
        %v2891 = vld [vmem:[%s2890] sm:$0xff]
        %v2892 = vld [vmem:[%s2890 + $0x8] sm:$0xff]
        %v2893 = vld [vmem:[%s2890 + $0x10] sm:$0x3]
        %v2895 = vsel %vm246, %v2858, 0
        %v2898 = vsel %vm246, %v2859, 0
        %v2901 = vsel %vm246, %v2860, 0
        %v2904 = vsel %vm246, %v2861, 0
        %v2907 = vsel %vm246, %v2862, 0
        %v2910 = vsel %vm246, %v2863, 0
        %v2913 = vsel %vm246, %v2864, 0
        %v2916 = vsel %vm246, %v2865, 0
        %v2919 = vsel %vm246, %v2866, 0
        %v2922 = vsel %vm246, %v2867, 0
        %v2925 = vsel %vm246, %v2868, 0
        %v2928 = vsel %vm246, %v2869, 0
        %v2931 = vsel %vm246, %v2870, 0
        %v2934 = vsel %vm246, %v2871, 0
        %v2937 = vsel %vm246, %v2872, 0
        %v2940 = vsel %vm246, %v2873, 0
        %v2943 = vsel %vm246, %v2874, 0
        %v2946 = vsel %vm246, %v2875, 0
        %v2949 = vsel %vm246, %v2876, 0
        %v2952 = vsel %vm246, %v2877, 0
        %v2955 = vsel %vm246, %v2878, 0
        %v2958 = vsel %vm246, %v2879, 0
        %v2961 = vsel %vm246, %v2880, 0
        %v2964 = vsel %vm246, %v2881, 0
        %v2967 = vsel %vm246, %v2882, 0
        %v2970 = vsel %vm246, %v2883, 0
        %v2973 = vsel %vm246, %v2884, 0
        %v2976 = vsel %vm246, %v2885, 0
        %v2979 = vsel %vm246, %v2886, 0
        %v2982 = vsel %vm246, %v2887, 0
        %v2985 = vsel %vm246, %v2888, 0
        %v2988 = vsel %vm246, %v2889, 0
        %v2991 = vsel %vm343, %v2893, 0
        %2993 = vmatprep.subr.mxu0 0.0
        %2994 = vmatpush1.msra.mxu0 %v2891
        %2995 = vmatprep.subr.mxu0 0.0
        %2996 = vmatpush1.msra.mxu0 %v2892
        %2997 = vmatprep.subr.mxu0 0.0
        %2998 = vmatpush1.msra.mxu0 %v2991
        %2999 = vmatprep.subr.mxu0 0.0
        %3000 = vmatpush1.msra.mxu0 0.0
        %3001 = vmatprep.subr.mxu0 0.0
        %3002 = vmatpush1.msra.mxu0 0.0
        %3003 = vmatprep.subr.mxu0 0.0
        %3004 = vmatpush1.msra.mxu0 0.0
        %3005 = vmatprep.subr.mxu0 0.0
        %3006 = vmatpush1.msra.mxu0 0.0
        %3007 = vmatprep.subr.mxu0 0.0
        %3008 = vmatpush1.msra.mxu0 0.0
        %3009 = vmatprep.subr.mxu0 0.0
        %3010 = vmatpush1.msra.mxu0 0.0
        %3011 = vmatprep.subr.mxu0 0.0
        %3012 = vmatpush1.msra.mxu0 0.0
        %3013 = vmatprep.subr.mxu0 0.0
        %3014 = vmatpush1.msra.mxu0 0.0
        %3015 = vmatprep.subr.mxu0 0.0
        %3016 = vmatpush1.msra.mxu0 0.0
        %3017 = vmatprep.subr.mxu0 0.0
        %3018 = vmatpush1.msra.mxu0 0.0
        %3019 = vmatprep.subr.mxu0 0.0
        %3020 = vmatpush1.msra.mxu0 0.0
        %3021 = vmatprep.subr.mxu0 0.0
        %3022 = vmatpush1.msra.mxu0 0.0
        %3023 = vmatprep.subr.mxu0 0.0
        %3024 = vmatpush1.msra.mxu0 0.0
        %3025 = vmatprep.subr.mxu0 0.0
        %3026 = vmatpush1.msra.mxu0 0.0
        %3027 = vmatprep.subr.mxu0 0.0
        %3028 = vmatpush1.msra.mxu0 0.0
        %3029 = vmatprep.subr.mxu0 0.0
        %3030 = vmatpush1.msra.mxu0 0.0
        %3031 = vmatprep.subr.mxu0 0.0
        %3032 = vmatpush1.msra.mxu0 0.0
        %3033 = vmatprep.subr.mxu0 0.0
        %3034 = vmatpush1.msra.mxu0 0.0
        %3035 = vmatprep.subr.mxu0 0.0
        %3036 = vmatpush1.msra.mxu0 0.0
        %3037 = vmatprep.subr.mxu0 0.0
        %3038 = vmatpush1.msra.mxu0 0.0
        %3039 = vmatprep.subr.mxu0 0.0
        %3040 = vmatpush1.msra.mxu0 0.0
        %3041 = vmatprep.subr.mxu0 0.0
        %3042 = vmatpush1.msra.mxu0 0.0
        %3043 = vmatprep.subr.mxu0 0.0
        %3044 = vmatpush1.msra.mxu0 0.0
        %3045 = vmatprep.subr.mxu0 0.0
        %3046 = vmatpush1.msra.mxu0 0.0
        %3047 = vmatprep.subr.mxu0 0.0
        %3048 = vmatpush1.msra.mxu0 0.0
        %3049 = vmatprep.subr.mxu0 0.0
        %3050 = vmatpush1.msra.mxu0 0.0
        %3051 = vmatprep.subr.mxu0 0.0
        %3052 = vmatpush1.msra.mxu0 0.0
        %3053 = vmatprep.subr.mxu0 0.0
        %3054 = vmatpush1.msra.mxu0 0.0
        %3055 = vmatprep.subr.mxu0 0.0
        %3056 = vmatpush1.msra.mxu0 0.0
        %3057 = vmatprep.mubr.f32.mxu0 0.0
        %3058 = vmatmul.mubr.f32.gmra.mrb[0].mxu0 %v2895
        %v3059 = vpop.f32.mrb[0].mxu0
        %v3060 = vadd.f32 0.0, %v3059
        %v3061 = vpop.f32.mrb[0].mxu0
        %3062 = vmatprep.mubr.f32.mxu0 0.0
        %3063 = vmatmul.mubr.f32.gmra.mrb[0].mxu0 %v2898
        %v3064 = vpop.f32.mrb[0].mxu0
        %v3065 = vadd.f32 0.0, %v3064
        %v3066 = vpop.f32.mrb[0].mxu0
        %3067 = vmatprep.mubr.f32.mxu0 0.0
        %3068 = vmatmul.mubr.f32.gmra.mrb[0].mxu0 %v2901
        %v3069 = vpop.f32.mrb[0].mxu0
        %v3070 = vadd.f32 0.0, %v3069
        %v3071 = vpop.f32.mrb[0].mxu0
        %3072 = vmatprep.mubr.f32.mxu0 0.0
        %3073 = vmatmul.mubr.f32.gmra.mrb[0].mxu0 %v2904
        %v3074 = vpop.f32.mrb[0].mxu0
        %v3075 = vadd.f32 0.0, %v3074
        %v3076 = vpop.f32.mrb[0].mxu0
        %3077 = vmatprep.mubr.f32.mxu0 0.0
        %3078 = vmatmul.mubr.f32.gmra.mrb[0].mxu0 %v2907
        %v3079 = vpop.f32.mrb[0].mxu0
        %v3080 = vadd.f32 0.0, %v3079
        %v3081 = vpop.f32.mrb[0].mxu0
        %3082 = vmatprep.mubr.f32.mxu0 0.0
        %3083 = vmatmul.mubr.f32.gmra.mrb[0].mxu0 %v2910
        %v3084 = vpop.f32.mrb[0].mxu0
        %v3085 = vadd.f32 0.0, %v3084
        %v3086 = vpop.f32.mrb[0].mxu0
        %3087 = vmatprep.mubr.f32.mxu0 0.0
        %3088 = vmatmul.mubr.f32.gmra.mrb[0].mxu0 %v2913
        %v3089 = vpop.f32.mrb[0].mxu0
        %v3090 = vadd.f32 0.0, %v3089
        %v3091 = vpop.f32.mrb[0].mxu0
        %3092 = vmatprep.mubr.f32.mxu0 0.0
        %3093 = vmatmul.mubr.f32.gmra.mrb[0].mxu0 %v2916
        %v3094 = vpop.f32.mrb[0].mxu0
        %v3095 = vadd.f32 0.0, %v3094
        %v3096 = vpop.f32.mrb[0].mxu0
        %3097 = vmatprep.mubr.f32.mxu0 0.0
        %3098 = vmatmul.mubr.f32.gmra.mrb[0].mxu0 %v2919
        %v3099 = vpop.f32.mrb[0].mxu0
        %v3100 = vadd.f32 0.0, %v3099
        %v3101 = vpop.f32.mrb[0].mxu0
        %3102 = vmatprep.mubr.f32.mxu0 0.0
        %3103 = vmatmul.mubr.f32.gmra.mrb[0].mxu0 %v2922
        %v3104 = vpop.f32.mrb[0].mxu0
        %v3105 = vadd.f32 0.0, %v3104
        %v3106 = vpop.f32.mrb[0].mxu0
        %3107 = vmatprep.mubr.f32.mxu0 0.0
        %3108 = vmatmul.mubr.f32.gmra.mrb[0].mxu0 %v2925
        %v3109 = vpop.f32.mrb[0].mxu0
        %v3110 = vadd.f32 0.0, %v3109
        %v3111 = vpop.f32.mrb[0].mxu0
        %3112 = vmatprep.mubr.f32.mxu0 0.0
        %3113 = vmatmul.mubr.f32.gmra.mrb[0].mxu0 %v2928
        %v3114 = vpop.f32.mrb[0].mxu0
        %v3115 = vadd.f32 0.0, %v3114
        %v3116 = vpop.f32.mrb[0].mxu0
        %3117 = vmatprep.mubr.f32.mxu0 0.0
        %3118 = vmatmul.mubr.f32.gmra.mrb[0].mxu0 %v2931
        %v3119 = vpop.f32.mrb[0].mxu0
        %v3120 = vadd.f32 0.0, %v3119
        %v3121 = vpop.f32.mrb[0].mxu0
        %3122 = vmatprep.mubr.f32.mxu0 0.0
        %3123 = vmatmul.mubr.f32.gmra.mrb[0].mxu0 %v2934
        %v3124 = vpop.f32.mrb[0].mxu0
        %v3125 = vadd.f32 0.0, %v3124
        %v3126 = vpop.f32.mrb[0].mxu0
        %3127 = vmatprep.mubr.f32.mxu0 0.0
        %3128 = vmatmul.mubr.f32.gmra.mrb[0].mxu0 %v2937
        %v3129 = vpop.f32.mrb[0].mxu0
        %v3130 = vadd.f32 0.0, %v3129
        %v3131 = vpop.f32.mrb[0].mxu0
        %3132 = vmatprep.mubr.f32.mxu0 0.0
        %3133 = vmatmul.mubr.f32.gmra.mrb[0].mxu0 %v2940
        %v3134 = vpop.f32.mrb[0].mxu0
        %v3135 = vadd.f32 0.0, %v3134
        %v3136 = vpop.f32.mrb[0].mxu0
        %3137 = vmatprep.mubr.f32.mxu0 0.0
        %3138 = vmatmul.mubr.f32.gmra.mrb[0].mxu0 %v2943
        %v3139 = vpop.f32.mrb[0].mxu0
        %v3140 = vadd.f32 0.0, %v3139
        %v3141 = vpop.f32.mrb[0].mxu0
        %3142 = vmatprep.mubr.f32.mxu0 0.0
        %3143 = vmatmul.mubr.f32.gmra.mrb[0].mxu0 %v2946
        %v3144 = vpop.f32.mrb[0].mxu0
        %v3145 = vadd.f32 0.0, %v3144
        %v3146 = vpop.f32.mrb[0].mxu0
        %3147 = vmatprep.mubr.f32.mxu0 0.0
        %3148 = vmatmul.mubr.f32.gmra.mrb[0].mxu0 %v2949
        %v3149 = vpop.f32.mrb[0].mxu0
        %v3150 = vadd.f32 0.0, %v3149
        %v3151 = vpop.f32.mrb[0].mxu0
        %3152 = vmatprep.mubr.f32.mxu0 0.0
        %3153 = vmatmul.mubr.f32.gmra.mrb[0].mxu0 %v2952
        %v3154 = vpop.f32.mrb[0].mxu0
        %v3155 = vadd.f32 0.0, %v3154
        %v3156 = vpop.f32.mrb[0].mxu0
        %3157 = vmatprep.mubr.f32.mxu0 0.0
        %3158 = vmatmul.mubr.f32.gmra.mrb[0].mxu0 %v2955
        %v3159 = vpop.f32.mrb[0].mxu0
        %v3160 = vadd.f32 0.0, %v3159
        %v3161 = vpop.f32.mrb[0].mxu0
        %3162 = vmatprep.mubr.f32.mxu0 0.0
        %3163 = vmatmul.mubr.f32.gmra.mrb[0].mxu0 %v2958
        %v3164 = vpop.f32.mrb[0].mxu0
        %v3165 = vadd.f32 0.0, %v3164
        %v3166 = vpop.f32.mrb[0].mxu0
        %3167 = vmatprep.mubr.f32.mxu0 0.0
        %3168 = vmatmul.mubr.f32.gmra.mrb[0].mxu0 %v2961
        %v3169 = vpop.f32.mrb[0].mxu0
        %v3170 = vadd.f32 0.0, %v3169
        %v3171 = vpop.f32.mrb[0].mxu0
        %3172 = vmatprep.mubr.f32.mxu0 0.0
        %3173 = vmatmul.mubr.f32.gmra.mrb[0].mxu0 %v2964
        %v3174 = vpop.f32.mrb[0].mxu0
        %v3175 = vadd.f32 0.0, %v3174
        %v3176 = vpop.f32.mrb[0].mxu0
        %3177 = vmatprep.mubr.f32.mxu0 0.0
        %3178 = vmatmul.mubr.f32.gmra.mrb[0].mxu0 %v2967
        %v3179 = vpop.f32.mrb[0].mxu0
        %v3180 = vadd.f32 0.0, %v3179
        %v3181 = vpop.f32.mrb[0].mxu0
        %3182 = vmatprep.mubr.f32.mxu0 0.0
        %3183 = vmatmul.mubr.f32.gmra.mrb[0].mxu0 %v2970
        %v3184 = vpop.f32.mrb[0].mxu0
        %v3185 = vadd.f32 0.0, %v3184
        %v3186 = vpop.f32.mrb[0].mxu0
        %3187 = vmatprep.mubr.f32.mxu0 0.0
        %3188 = vmatmul.mubr.f32.gmra.mrb[0].mxu0 %v2973
        %v3189 = vpop.f32.mrb[0].mxu0
        %v3190 = vadd.f32 0.0, %v3189
        %v3191 = vpop.f32.mrb[0].mxu0
        %3192 = vmatprep.mubr.f32.mxu0 0.0
        %3193 = vmatmul.mubr.f32.gmra.mrb[0].mxu0 %v2976
        %v3194 = vpop.f32.mrb[0].mxu0
        %v3195 = vadd.f32 0.0, %v3194
        %v3196 = vpop.f32.mrb[0].mxu0
        %3197 = vmatprep.mubr.f32.mxu0 0.0
        %3198 = vmatmul.mubr.f32.gmra.mrb[0].mxu0 %v2979
        %v3199 = vpop.f32.mrb[0].mxu0
        %v3200 = vadd.f32 0.0, %v3199
        %v3201 = vpop.f32.mrb[0].mxu0
        %3202 = vmatprep.mubr.f32.mxu0 0.0
        %3203 = vmatmul.mubr.f32.gmra.mrb[0].mxu0 %v2982
        %v3204 = vpop.f32.mrb[0].mxu0
        %v3205 = vadd.f32 0.0, %v3204
        %v3206 = vpop.f32.mrb[0].mxu0
        %3207 = vmatprep.mubr.f32.mxu0 0.0
        %3208 = vmatmul.mubr.f32.gmra.mrb[0].mxu0 %v2985
        %v3209 = vpop.f32.mrb[0].mxu0
        %v3210 = vadd.f32 0.0, %v3209
        %v3211 = vpop.f32.mrb[0].mxu0
        %3212 = vmatprep.mubr.f32.mxu0 0.0
        %3213 = vmatmul.mubr.f32.gmra.mrb[0].mxu0 %v2988
        %v3214 = vpop.f32.mrb[0].mxu0
        %v3215 = vadd.f32 0.0, %v3214
        %v3216 = vpop.f32.mrb[0].mxu0
        %3217 = vdwg.mxu0
        %v3218 = vadd.f32 %v2826, %v3060
        %v3219 = vadd.f32 %v2827, %v3065
        %v3220 = vadd.f32 %v2828, %v3070
        %v3221 = vadd.f32 %v2829, %v3075
        %v3222 = vadd.f32 %v2830, %v3080
        %v3223 = vadd.f32 %v2831, %v3085
        %v3224 = vadd.f32 %v2832, %v3090
        %v3225 = vadd.f32 %v2833, %v3095
        %v3226 = vadd.f32 %v2834, %v3100
        %v3227 = vadd.f32 %v2835, %v3105
        %v3228 = vadd.f32 %v2836, %v3110
        %v3229 = vadd.f32 %v2837, %v3115
        %v3230 = vadd.f32 %v2838, %v3120
        %v3231 = vadd.f32 %v2839, %v3125
        %v3232 = vadd.f32 %v2840, %v3130
        %v3233 = vadd.f32 %v2841, %v3135
        %v3234 = vadd.f32 %v2842, %v3140
        %v3235 = vadd.f32 %v2843, %v3145
        %v3236 = vadd.f32 %v2844, %v3150
        %v3237 = vadd.f32 %v2845, %v3155
        %v3238 = vadd.f32 %v2846, %v3160
        %v3239 = vadd.f32 %v2847, %v3165
        %v3240 = vadd.f32 %v2848, %v3170
        %v3241 = vadd.f32 %v2849, %v3175
        %v3242 = vadd.f32 %v2850, %v3180
        %v3243 = vadd.f32 %v2851, %v3185
        %v3244 = vadd.f32 %v2852, %v3190
        %v3245 = vadd.f32 %v2853, %v3195
        %v3246 = vadd.f32 %v2854, %v3200
        %v3247 = vadd.f32 %v2855, %v3205
        %v3248 = vadd.f32 %v2856, %v3210
        %v3249 = vadd.f32 %v2857, %v3215
        %v3250 = vld [vmem:[%s2465 + $0x2] sm:$0xff]
        %v3251 = vld [vmem:[%s2465 + $0xa] sm:$0xff]
        %v3252 = vld [vmem:[%s2465 + $0x1a] sm:$0xff]
        %v3253 = vld [vmem:[%s2465 + $0x22] sm:$0xff]
        %v3254 = vld [vmem:[%s2465 + $0x32] sm:$0xff]
        %v3255 = vld [vmem:[%s2465 + $0x3a] sm:$0xff]
        %v3256 = vld [vmem:[%s2465 + $0x4a] sm:$0xff]
        %v3257 = vld [vmem:[%s2465 + $0x52] sm:$0xff]
        %v3258 = vld [vmem:[%s2465 + $0x62] sm:$0xff]
        %v3259 = vld [vmem:[%s2465 + $0x6a] sm:$0xff]
        %v3260 = vld [vmem:[%s2465 + $0x7a] sm:$0xff]
        %v3261 = vld [vmem:[%s2465 + $0x82] sm:$0xff]
        %v3262 = vld [vmem:[%s2465 + $0x92] sm:$0xff]
        %v3263 = vld [vmem:[%s2465 + $0x9a] sm:$0xff]
        %v3264 = vld [vmem:[%s2465 + $0xaa] sm:$0xff]
        %v3265 = vld [vmem:[%s2465 + $0xb2] sm:$0xff]
        %v3266 = vld [vmem:[%s2465 + $0xc2] sm:$0xff]
        %v3267 = vld [vmem:[%s2465 + $0xca] sm:$0xff]
        %v3268 = vld [vmem:[%s2465 + $0xda] sm:$0xff]
        %v3269 = vld [vmem:[%s2465 + $0xe2] sm:$0xff]
        %v3270 = vld [vmem:[%s2465 + $0xf2] sm:$0xff]
        %v3271 = vld [vmem:[%s2465 + $0xfa] sm:$0xff]
        %v3272 = vld [vmem:[%s2465 + $0x10a] sm:$0xff]
        %v3273 = vld [vmem:[%s2465 + $0x112] sm:$0xff]
        %v3274 = vld [vmem:[%s2465 + $0x122] sm:$0xff]
        %v3275 = vld [vmem:[%s2465 + $0x12a] sm:$0xff]
        %v3276 = vld [vmem:[%s2465 + $0x13a] sm:$0xff]
        %v3277 = vld [vmem:[%s2465 + $0x142] sm:$0xff]
        %v3278 = vld [vmem:[%s2465 + $0x152] sm:$0xff]
        %v3279 = vld [vmem:[%s2465 + $0x15a] sm:$0xff]
        %v3280 = vld [vmem:[%s2465 + $0x16a] sm:$0xff]
        %v3281 = vld [vmem:[%s2465 + $0x172] sm:$0xff]
        %s3282 = scalar_lea.vmem %s1, 192
        %v3283 = vld [vmem:[%s3282] sm:$0xff]
        %v3284 = vld [vmem:[%s3282 + $0x8] sm:$0xff]
        %v3285 = vld [vmem:[%s3282 + $0x10] sm:$0x3]
        %v3287 = vsel %vm246, %v3250, 0
        %v3290 = vsel %vm246, %v3251, 0
        %v3293 = vsel %vm246, %v3252, 0
        %v3296 = vsel %vm246, %v3253, 0
        %v3299 = vsel %vm246, %v3254, 0
        %v3302 = vsel %vm246, %v3255, 0
        %v3305 = vsel %vm246, %v3256, 0
        %v3308 = vsel %vm246, %v3257, 0
        %v3311 = vsel %vm246, %v3258, 0
        %v3314 = vsel %vm246, %v3259, 0
        %v3317 = vsel %vm246, %v3260, 0
        %v3320 = vsel %vm246, %v3261, 0
        %v3323 = vsel %vm246, %v3262, 0
        %v3326 = vsel %vm246, %v3263, 0
        %v3329 = vsel %vm246, %v3264, 0
        %v3332 = vsel %vm246, %v3265, 0
        %v3335 = vsel %vm246, %v3266, 0
        %v3338 = vsel %vm246, %v3267, 0
        %v3341 = vsel %vm246, %v3268, 0
        %v3344 = vsel %vm246, %v3269, 0
        %v3347 = vsel %vm246, %v3270, 0
        %v3350 = vsel %vm246, %v3271, 0
        %v3353 = vsel %vm246, %v3272, 0
        %v3356 = vsel %vm246, %v3273, 0
        %v3359 = vsel %vm246, %v3274, 0
        %v3362 = vsel %vm246, %v3275, 0
        %v3365 = vsel %vm246, %v3276, 0
        %v3368 = vsel %vm246, %v3277, 0
        %v3371 = vsel %vm246, %v3278, 0
        %v3374 = vsel %vm246, %v3279, 0
        %v3377 = vsel %vm246, %v3280, 0
        %v3380 = vsel %vm246, %v3281, 0
        %v3383 = vsel %vm343, %v3285, 0
        %3385 = vmatprep.subr.mxu0 0.0
        %3386 = vmatpush1.msra.mxu0 %v3283
        %3387 = vmatprep.subr.mxu0 0.0
        %3388 = vmatpush1.msra.mxu0 %v3284
        %3389 = vmatprep.subr.mxu0 0.0
        %3390 = vmatpush1.msra.mxu0 %v3383
        %3391 = vmatprep.subr.mxu0 0.0
        %3392 = vmatpush1.msra.mxu0 0.0
        %3393 = vmatprep.subr.mxu0 0.0
        %3394 = vmatpush1.msra.mxu0 0.0
        %3395 = vmatprep.subr.mxu0 0.0
        %3396 = vmatpush1.msra.mxu0 0.0
        %3397 = vmatprep.subr.mxu0 0.0
        %3398 = vmatpush1.msra.mxu0 0.0
        %3399 = vmatprep.subr.mxu0 0.0
        %3400 = vmatpush1.msra.mxu0 0.0
        %3401 = vmatprep.subr.mxu0 0.0
        %3402 = vmatpush1.msra.mxu0 0.0
        %3403 = vmatprep.subr.mxu0 0.0
        %3404 = vmatpush1.msra.mxu0 0.0
        %3405 = vmatprep.subr.mxu0 0.0
        %3406 = vmatpush1.msra.mxu0 0.0
        %3407 = vmatprep.subr.mxu0 0.0
        %3408 = vmatpush1.msra.mxu0 0.0
        %3409 = vmatprep.subr.mxu0 0.0
        %3410 = vmatpush1.msra.mxu0 0.0
        %3411 = vmatprep.subr.mxu0 0.0
        %3412 = vmatpush1.msra.mxu0 0.0
        %3413 = vmatprep.subr.mxu0 0.0
        %3414 = vmatpush1.msra.mxu0 0.0
        %3415 = vmatprep.subr.mxu0 0.0
        %3416 = vmatpush1.msra.mxu0 0.0
        %3417 = vmatprep.subr.mxu0 0.0
        %3418 = vmatpush1.msra.mxu0 0.0
        %3419 = vmatprep.subr.mxu0 0.0
        %3420 = vmatpush1.msra.mxu0 0.0
        %3421 = vmatprep.subr.mxu0 0.0
        %3422 = vmatpush1.msra.mxu0 0.0
        %3423 = vmatprep.subr.mxu0 0.0
        %3424 = vmatpush1.msra.mxu0 0.0
        %3425 = vmatprep.subr.mxu0 0.0
        %3426 = vmatpush1.msra.mxu0 0.0
        %3427 = vmatprep.subr.mxu0 0.0
        %3428 = vmatpush1.msra.mxu0 0.0
        %3429 = vmatprep.subr.mxu0 0.0
        %3430 = vmatpush1.msra.mxu0 0.0
        %3431 = vmatprep.subr.mxu0 0.0
        %3432 = vmatpush1.msra.mxu0 0.0
        %3433 = vmatprep.subr.mxu0 0.0
        %3434 = vmatpush1.msra.mxu0 0.0
        %3435 = vmatprep.subr.mxu0 0.0
        %3436 = vmatpush1.msra.mxu0 0.0
        %3437 = vmatprep.subr.mxu0 0.0
        %3438 = vmatpush1.msra.mxu0 0.0
        %3439 = vmatprep.subr.mxu0 0.0
        %3440 = vmatpush1.msra.mxu0 0.0
        %3441 = vmatprep.subr.mxu0 0.0
        %3442 = vmatpush1.msra.mxu0 0.0
        %3443 = vmatprep.subr.mxu0 0.0
        %3444 = vmatpush1.msra.mxu0 0.0
        %3445 = vmatprep.subr.mxu0 0.0
        %3446 = vmatpush1.msra.mxu0 0.0
        %3447 = vmatprep.subr.mxu0 0.0
        %3448 = vmatpush1.msra.mxu0 0.0
        %3449 = vmatprep.mubr.f32.mxu0 0.0
        %3450 = vmatmul.mubr.f32.gmra.mrb[0].mxu0 %v3287
        %v3451 = vpop.f32.mrb[0].mxu0
        %v3452 = vadd.f32 0.0, %v3451
        %v3453 = vpop.f32.mrb[0].mxu0
        %3454 = vmatprep.mubr.f32.mxu0 0.0
        %3455 = vmatmul.mubr.f32.gmra.mrb[0].mxu0 %v3290
        %v3456 = vpop.f32.mrb[0].mxu0
        %v3457 = vadd.f32 0.0, %v3456
        %v3458 = vpop.f32.mrb[0].mxu0
        %3459 = vmatprep.mubr.f32.mxu0 0.0
        %3460 = vmatmul.mubr.f32.gmra.mrb[0].mxu0 %v3293
        %v3461 = vpop.f32.mrb[0].mxu0
        %v3462 = vadd.f32 0.0, %v3461
        %v3463 = vpop.f32.mrb[0].mxu0
        %3464 = vmatprep.mubr.f32.mxu0 0.0
        %3465 = vmatmul.mubr.f32.gmra.mrb[0].mxu0 %v3296
        %v3466 = vpop.f32.mrb[0].mxu0
        %v3467 = vadd.f32 0.0, %v3466
        %v3468 = vpop.f32.mrb[0].mxu0
        %3469 = vmatprep.mubr.f32.mxu0 0.0
        %3470 = vmatmul.mubr.f32.gmra.mrb[0].mxu0 %v3299
        %v3471 = vpop.f32.mrb[0].mxu0
        %v3472 = vadd.f32 0.0, %v3471
        %v3473 = vpop.f32.mrb[0].mxu0
        %3474 = vmatprep.mubr.f32.mxu0 0.0
        %3475 = vmatmul.mubr.f32.gmra.mrb[0].mxu0 %v3302
        %v3476 = vpop.f32.mrb[0].mxu0
        %v3477 = vadd.f32 0.0, %v3476
        %v3478 = vpop.f32.mrb[0].mxu0
        %3479 = vmatprep.mubr.f32.mxu0 0.0
        %3480 = vmatmul.mubr.f32.gmra.mrb[0].mxu0 %v3305
        %v3481 = vpop.f32.mrb[0].mxu0
        %v3482 = vadd.f32 0.0, %v3481
        %v3483 = vpop.f32.mrb[0].mxu0
        %3484 = vmatprep.mubr.f32.mxu0 0.0
        %3485 = vmatmul.mubr.f32.gmra.mrb[0].mxu0 %v3308
        %v3486 = vpop.f32.mrb[0].mxu0
        %v3487 = vadd.f32 0.0, %v3486
        %v3488 = vpop.f32.mrb[0].mxu0
        %3489 = vmatprep.mubr.f32.mxu0 0.0
        %3490 = vmatmul.mubr.f32.gmra.mrb[0].mxu0 %v3311
        %v3491 = vpop.f32.mrb[0].mxu0
        %v3492 = vadd.f32 0.0, %v3491
        %v3493 = vpop.f32.mrb[0].mxu0
        %3494 = vmatprep.mubr.f32.mxu0 0.0
        %3495 = vmatmul.mubr.f32.gmra.mrb[0].mxu0 %v3314
        %v3496 = vpop.f32.mrb[0].mxu0
        %v3497 = vadd.f32 0.0, %v3496
        %v3498 = vpop.f32.mrb[0].mxu0
        %3499 = vmatprep.mubr.f32.mxu0 0.0
        %3500 = vmatmul.mubr.f32.gmra.mrb[0].mxu0 %v3317
        %v3501 = vpop.f32.mrb[0].mxu0
        %v3502 = vadd.f32 0.0, %v3501
        %v3503 = vpop.f32.mrb[0].mxu0
        %3504 = vmatprep.mubr.f32.mxu0 0.0
        %3505 = vmatmul.mubr.f32.gmra.mrb[0].mxu0 %v3320
        %v3506 = vpop.f32.mrb[0].mxu0
        %v3507 = vadd.f32 0.0, %v3506
        %v3508 = vpop.f32.mrb[0].mxu0
        %3509 = vmatprep.mubr.f32.mxu0 0.0
        %3510 = vmatmul.mubr.f32.gmra.mrb[0].mxu0 %v3323
        %v3511 = vpop.f32.mrb[0].mxu0
        %v3512 = vadd.f32 0.0, %v3511
        %v3513 = vpop.f32.mrb[0].mxu0
        %3514 = vmatprep.mubr.f32.mxu0 0.0
        %3515 = vmatmul.mubr.f32.gmra.mrb[0].mxu0 %v3326
        %v3516 = vpop.f32.mrb[0].mxu0
        %v3517 = vadd.f32 0.0, %v3516
        %v3518 = vpop.f32.mrb[0].mxu0
        %3519 = vmatprep.mubr.f32.mxu0 0.0
        %3520 = vmatmul.mubr.f32.gmra.mrb[0].mxu0 %v3329
        %v3521 = vpop.f32.mrb[0].mxu0
        %v3522 = vadd.f32 0.0, %v3521
        %v3523 = vpop.f32.mrb[0].mxu0
        %3524 = vmatprep.mubr.f32.mxu0 0.0
        %3525 = vmatmul.mubr.f32.gmra.mrb[0].mxu0 %v3332
        %v3526 = vpop.f32.mrb[0].mxu0
        %v3527 = vadd.f32 0.0, %v3526
        %v3528 = vpop.f32.mrb[0].mxu0
        %3529 = vmatprep.mubr.f32.mxu0 0.0
        %3530 = vmatmul.mubr.f32.gmra.mrb[0].mxu0 %v3335
        %v3531 = vpop.f32.mrb[0].mxu0
        %v3532 = vadd.f32 0.0, %v3531
        %v3533 = vpop.f32.mrb[0].mxu0
        %3534 = vmatprep.mubr.f32.mxu0 0.0
        %3535 = vmatmul.mubr.f32.gmra.mrb[0].mxu0 %v3338
        %v3536 = vpop.f32.mrb[0].mxu0
        %v3537 = vadd.f32 0.0, %v3536
        %v3538 = vpop.f32.mrb[0].mxu0
        %3539 = vmatprep.mubr.f32.mxu0 0.0
        %3540 = vmatmul.mubr.f32.gmra.mrb[0].mxu0 %v3341
        %v3541 = vpop.f32.mrb[0].mxu0
        %v3542 = vadd.f32 0.0, %v3541
        %v3543 = vpop.f32.mrb[0].mxu0
        %3544 = vmatprep.mubr.f32.mxu0 0.0
        %3545 = vmatmul.mubr.f32.gmra.mrb[0].mxu0 %v3344
        %v3546 = vpop.f32.mrb[0].mxu0
        %v3547 = vadd.f32 0.0, %v3546
        %v3548 = vpop.f32.mrb[0].mxu0
        %3549 = vmatprep.mubr.f32.mxu0 0.0
        %3550 = vmatmul.mubr.f32.gmra.mrb[0].mxu0 %v3347
        %v3551 = vpop.f32.mrb[0].mxu0
        %v3552 = vadd.f32 0.0, %v3551
        %v3553 = vpop.f32.mrb[0].mxu0
        %3554 = vmatprep.mubr.f32.mxu0 0.0
        %3555 = vmatmul.mubr.f32.gmra.mrb[0].mxu0 %v3350
        %v3556 = vpop.f32.mrb[0].mxu0
        %v3557 = vadd.f32 0.0, %v3556
        %v3558 = vpop.f32.mrb[0].mxu0
        %3559 = vmatprep.mubr.f32.mxu0 0.0
        %3560 = vmatmul.mubr.f32.gmra.mrb[0].mxu0 %v3353
        %v3561 = vpop.f32.mrb[0].mxu0
        %v3562 = vadd.f32 0.0, %v3561
        %v3563 = vpop.f32.mrb[0].mxu0
        %3564 = vmatprep.mubr.f32.mxu0 0.0
        %3565 = vmatmul.mubr.f32.gmra.mrb[0].mxu0 %v3356
        %v3566 = vpop.f32.mrb[0].mxu0
        %v3567 = vadd.f32 0.0, %v3566
        %v3568 = vpop.f32.mrb[0].mxu0
        %3569 = vmatprep.mubr.f32.mxu0 0.0
        %3570 = vmatmul.mubr.f32.gmra.mrb[0].mxu0 %v3359
        %v3571 = vpop.f32.mrb[0].mxu0
        %v3572 = vadd.f32 0.0, %v3571
        %v3573 = vpop.f32.mrb[0].mxu0
        %3574 = vmatprep.mubr.f32.mxu0 0.0
        %3575 = vmatmul.mubr.f32.gmra.mrb[0].mxu0 %v3362
        %v3576 = vpop.f32.mrb[0].mxu0
        %v3577 = vadd.f32 0.0, %v3576
        %v3578 = vpop.f32.mrb[0].mxu0
        %3579 = vmatprep.mubr.f32.mxu0 0.0
        %3580 = vmatmul.mubr.f32.gmra.mrb[0].mxu0 %v3365
        %v3581 = vpop.f32.mrb[0].mxu0
        %v3582 = vadd.f32 0.0, %v3581
        %v3583 = vpop.f32.mrb[0].mxu0
        %3584 = vmatprep.mubr.f32.mxu0 0.0
        %3585 = vmatmul.mubr.f32.gmra.mrb[0].mxu0 %v3368
        %v3586 = vpop.f32.mrb[0].mxu0
        %v3587 = vadd.f32 0.0, %v3586
        %v3588 = vpop.f32.mrb[0].mxu0
        %3589 = vmatprep.mubr.f32.mxu0 0.0
        %3590 = vmatmul.mubr.f32.gmra.mrb[0].mxu0 %v3371
        %v3591 = vpop.f32.mrb[0].mxu0
        %v3592 = vadd.f32 0.0, %v3591
        %v3593 = vpop.f32.mrb[0].mxu0
        %3594 = vmatprep.mubr.f32.mxu0 0.0
        %3595 = vmatmul.mubr.f32.gmra.mrb[0].mxu0 %v3374
        %v3596 = vpop.f32.mrb[0].mxu0
        %v3597 = vadd.f32 0.0, %v3596
        %v3598 = vpop.f32.mrb[0].mxu0
        %3599 = vmatprep.mubr.f32.mxu0 0.0
        %3600 = vmatmul.mubr.f32.gmra.mrb[0].mxu0 %v3377
        %v3601 = vpop.f32.mrb[0].mxu0
        %v3602 = vadd.f32 0.0, %v3601
        %v3603 = vpop.f32.mrb[0].mxu0
        %3604 = vmatprep.mubr.f32.mxu0 0.0
        %3605 = vmatmul.mubr.f32.gmra.mrb[0].mxu0 %v3380
        %v3606 = vpop.f32.mrb[0].mxu0
        %v3607 = vadd.f32 0.0, %v3606
        %v3608 = vpop.f32.mrb[0].mxu0
        %3609 = vdwg.mxu0
        %v3610 = vadd.f32 %v3218, %v3452
        %v3611 = vadd.f32 %v3219, %v3457
        %v3612 = vadd.f32 %v3220, %v3462
        %v3613 = vadd.f32 %v3221, %v3467
        %v3614 = vadd.f32 %v3222, %v3472
        %v3615 = vadd.f32 %v3223, %v3477
        %v3616 = vadd.f32 %v3224, %v3482
        %v3617 = vadd.f32 %v3225, %v3487
        %v3618 = vadd.f32 %v3226, %v3492
        %v3619 = vadd.f32 %v3227, %v3497
        %v3620 = vadd.f32 %v3228, %v3502
        %v3621 = vadd.f32 %v3229, %v3507
        %v3622 = vadd.f32 %v3230, %v3512
        %v3623 = vadd.f32 %v3231, %v3517
        %v3624 = vadd.f32 %v3232, %v3522
        %v3625 = vadd.f32 %v3233, %v3527
        %v3626 = vadd.f32 %v3234, %v3532
        %v3627 = vadd.f32 %v3235, %v3537
        %v3628 = vadd.f32 %v3236, %v3542
        %v3629 = vadd.f32 %v3237, %v3547
        %v3630 = vadd.f32 %v3238, %v3552
        %v3631 = vadd.f32 %v3239, %v3557
        %v3632 = vadd.f32 %v3240, %v3562
        %v3633 = vadd.f32 %v3241, %v3567
        %v3634 = vadd.f32 %v3242, %v3572
        %v3635 = vadd.f32 %v3243, %v3577
        %v3636 = vadd.f32 %v3244, %v3582
        %v3637 = vadd.f32 %v3245, %v3587
        %v3638 = vadd.f32 %v3246, %v3592
        %v3639 = vadd.f32 %v3247, %v3597
        %v3640 = vadd.f32 %v3248, %v3602
        %v3641 = vadd.f32 %v3249, %v3607
        %v3642 = vld [vmem:[%s2] sm:$0x1]
        %v3644 = vlaneseq
        %v3645 = vshrl.u32 %v3644, 7
        %v3646 = vsub.s32 0, %v3645
        %v3647 = vrot.slane %v3642, %v3646
        %v3649 = vadd.f32 %v3610, %v3647
        %v3650 = vadd.f32 %v3611, %v3647
        %v3651 = vadd.f32 %v3612, %v3647
        %v3652 = vadd.f32 %v3613, %v3647
        %v3653 = vadd.f32 %v3614, %v3647
        %v3654 = vadd.f32 %v3615, %v3647
        %v3655 = vadd.f32 %v3616, %v3647
        %v3656 = vadd.f32 %v3617, %v3647
        %v3657 = vadd.f32 %v3618, %v3647
        %v3658 = vadd.f32 %v3619, %v3647
        %v3659 = vadd.f32 %v3620, %v3647
        %v3660 = vadd.f32 %v3621, %v3647
        %v3661 = vadd.f32 %v3622, %v3647
        %v3662 = vadd.f32 %v3623, %v3647
        %v3663 = vadd.f32 %v3624, %v3647
        %v3664 = vadd.f32 %v3625, %v3647
        %v3665 = vadd.f32 %v3626, %v3647
        %v3666 = vadd.f32 %v3627, %v3647
        %v3667 = vadd.f32 %v3628, %v3647
        %v3668 = vadd.f32 %v3629, %v3647
        %v3669 = vadd.f32 %v3630, %v3647
        %v3670 = vadd.f32 %v3631, %v3647
        %v3671 = vadd.f32 %v3632, %v3647
        %v3672 = vadd.f32 %v3633, %v3647
        %v3673 = vadd.f32 %v3634, %v3647
        %v3674 = vadd.f32 %v3635, %v3647
        %v3675 = vadd.f32 %v3636, %v3647
        %v3676 = vadd.f32 %v3637, %v3647
        %v3677 = vadd.f32 %v3638, %v3647
        %v3678 = vadd.f32 %v3639, %v3647
        %v3679 = vadd.f32 %v3640, %v3647
        %v3680 = vadd.f32 %v3641, %v3647
        %3681 = vst [vmem:[%s166] sm:$0xff] %v3649
        %3682 = vst [vmem:[%s166 + $0x8] sm:$0xff] %v3650
        %3683 = vst [vmem:[%s166 + $0x10] sm:$0xff] %v3651
        %3684 = vst [vmem:[%s166 + $0x18] sm:$0xff] %v3652
        %3685 = vst [vmem:[%s166 + $0x20] sm:$0xff] %v3653
        %3686 = vst [vmem:[%s166 + $0x28] sm:$0xff] %v3654
        %3687 = vst [vmem:[%s166 + $0x30] sm:$0xff] %v3655
        %3688 = vst [vmem:[%s166 + $0x38] sm:$0xff] %v3656
        %3689 = vst [vmem:[%s166 + $0x40] sm:$0xff] %v3657
        %3690 = vst [vmem:[%s166 + $0x48] sm:$0xff] %v3658
        %3691 = vst [vmem:[%s166 + $0x50] sm:$0xff] %v3659
        %3692 = vst [vmem:[%s166 + $0x58] sm:$0xff] %v3660
        %3693 = vst [vmem:[%s166 + $0x60] sm:$0xff] %v3661
        %3694 = vst [vmem:[%s166 + $0x68] sm:$0xff] %v3662
        %3695 = vst [vmem:[%s166 + $0x70] sm:$0xff] %v3663
        %3696 = vst [vmem:[%s166 + $0x78] sm:$0xff] %v3664
        %3697 = vst [vmem:[%s166 + $0x80] sm:$0xff] %v3665
        %3698 = vst [vmem:[%s166 + $0x88] sm:$0xff] %v3666
        %3699 = vst [vmem:[%s166 + $0x90] sm:$0xff] %v3667
        %3700 = vst [vmem:[%s166 + $0x98] sm:$0xff] %v3668
        %3701 = vst [vmem:[%s166 + $0xa0] sm:$0xff] %v3669
        %3702 = vst [vmem:[%s166 + $0xa8] sm:$0xff] %v3670
        %3703 = vst [vmem:[%s166 + $0xb0] sm:$0xff] %v3671
        %3704 = vst [vmem:[%s166 + $0xb8] sm:$0xff] %v3672
        %3705 = vst [vmem:[%s166 + $0xc0] sm:$0xff] %v3673
        %3706 = vst [vmem:[%s166 + $0xc8] sm:$0xff] %v3674
        %3707 = vst [vmem:[%s166 + $0xd0] sm:$0xff] %v3675
        %3708 = vst [vmem:[%s166 + $0xd8] sm:$0xff] %v3676
        %3709 = vst [vmem:[%s166 + $0xe0] sm:$0xff] %v3677
        %3710 = vst [vmem:[%s166 + $0xe8] sm:$0xff] %v3678
        %3711 = vst [vmem:[%s166 + $0xf0] sm:$0xff] %v3679
        %3712 = vst [vmem:[%s166 + $0xf8] sm:$0xff] %v3680
        %s3713 = sand.u32 %s93, 1
        %s3714 = scalar_lea.sflag [#allocation3], %s3713
        %s3715 = sand.u32 %s93, 1
        %s3716 = smul.addr %s3715, 256
        %s3717 = scalar_lea.vmem [#allocation2], %s3716
        // Predicated region
        $region33: #{tpu_custom_call.1} parent=31 // pred_check
          %p3718 = pneg %p103
        $region34: #{tpu_custom_call.1} parent=31 // pred_check_branch
          %3720 = sbr.rel (%p3718) target = $region36
        $region35: #{tpu_custom_call.1} parent=31 // pred_region
          %s3721 = smul.u32 32, %s17
          %s3723 = ssub.s32 4096, 4096
          %3724 = vsyncadd %s3714, %s3723
          %s3725 = smul.addr %s3721, 128
          %s3726 = scalar_lea.hbm %s3, %s3725
          %s3727 = sshll.u32 %s3717, 4
          %s3728 = int_to_ptr.vmem [resolvable:$true] %s3727
          %3733 = dma.vmem_to_hbm [thread:$0]  %s3728, 4096, %s3726, %s3714, 128, 128, 8
        $region36: #{tpu_custom_call.1} parent=31 // pred_fallthru
          _
      $region32: #{tpu_custom_call.1} parent=5 // pred_fallthru
        _
      %p3734 = scmp.le.s32.totalorder 2, %s12
      // Predicated region
      $region37: #{tpu_custom_call.1} parent=5 // pred_check
        %p3735 = pneg %p3734
      $region38: #{tpu_custom_call.1} parent=5 // pred_check_branch
        %3737 = sbr.rel (%p3735) target = $region40
      $region39: #{tpu_custom_call.1} parent=5 // pred_region
        %s3738 = ssub.s32 %s12, 2
        // Predicated region
        $region41: #{tpu_custom_call.1} parent=39 // pred_check
          %p3739 = pneg %p109
        $region42: #{tpu_custom_call.1} parent=39 // pred_check_branch
          %3741 = sbr.rel (%p3739) target = $region44
        $region43: #{tpu_custom_call.1} parent=39 // pred_region
          %s3742 = sand.u32 %s94, 1
          %s3743 = scalar_lea.sflag [#allocation3], %s3742
          %s3744 = sand.u32 %s94, 1
          %s3745 = smul.addr %s3744, 256
          %s3746 = scalar_lea.vmem [#allocation2], %s3745
          %3747 = dma.done %s3743, 4096
        $region44: #{tpu_custom_call.1} parent=39 // pred_fallthru
          _
      $region40: #{tpu_custom_call.1} parent=5 // pred_fallthru
        _
    $region6: #{tpu_custom_call.1} parent=1 // loop_footer
      %s16 = sadd.s32 1, %s12
    $region7: #{tpu_custom_call.1} parent=1 // loop_footer_branch
      %11 = sbr.rel target = $region3
    $region8: #{tpu_custom_call.1} parent=1 // loop_exit
      _
    %3748 = vsyncpa [#allocation3], 1
    %s3749 = scalar_lea.sflag [#allocation3], 1
    %3750 = vsyncpa %s3749, 1

</llo_original>
